<compile_context>
chip_gen: v7x
topology: tpu7x:2x2x1
jax: 0.10.0
libtpu: 0.0.40
codegen_flags: <defaults>
</compile_context>

<pallas_src>
import math

import jax
import jax.numpy as jnp
from jax.experimental import pallas as pl
from jax.experimental.pallas import tpu as pltpu


# ----------------------------- kernel ---------------------------------------


def _make_resblock_kernel(Nb, H, W, C, res_scale):
    Hp, Wp = H + 2, W + 2
    M = Nb * H * W          # matmul rows (batch block flattened into M)
    K = 9 * C               # all 9 taps fused into the contraction dim

    def conv3x3(buf_ref, w_ref, b_ref):
        # buf_ref: (Nb, Hp, Wp, C) bf16 zero-padded activations.
        # Patch lane order is ((kh*3 + kw)*C + c_in), matching the wrapper's
        # weight reshape, so one K=9C matmul computes the whole 3x3 conv.
        patch = jnp.concatenate(
            [buf_ref[:, dy:dy + H, dx:dx + W, :]
             for dy in range(3) for dx in range(3)],
            axis=-1).reshape(M, K)
        return jnp.dot(patch, w_ref[...],
                       preferred_element_type=jnp.float32) + b_ref[0]

    def kernel(x_ref, w1_ref, b1_ref, w2_ref, b2_ref, o_ref, buf_ref):
        # x_ref : (Nb, H, W, C)    f32   unpadded input block (NHWC)
        # w*_ref: (9*C, C)         bf16  conv weights, rows ordered (kh,kw,Cin)
        # b*_ref: (1, C)           f32   conv biases
        # o_ref : (Nb, H, W, C)    f32   output block (NHWC)
        # buf_ref:(Nb, Hp, Wp, C)  bf16  padded activation scratch (shared by
        #                                the conv1 input and the ReLU mid)

        # Re-zero only the 1-pixel halo each step (tiny; required every step
        # because the scratch persists across 'parallel' grid iterations).
        zero_row = jnp.zeros((Nb, 1, Wp, C), jnp.bfloat16)
        zero_col = jnp.zeros((Nb, Hp, 1, C), jnp.bfloat16)
        buf_ref[:, 0:1, :, :] = zero_row
        buf_ref[:, Hp - 1:Hp, :, :] = zero_row
        buf_ref[:, :, 0:1, :] = zero_col
        buf_ref[:, :, Wp - 1:Wp, :] = zero_col

        # In-kernel pad + the single bf16 cast of the input.
        buf_ref[:, 1:H + 1, 1:W + 1, :] = x_ref[...].astype(jnp.bfloat16)

        # conv1 -> bias -> ReLU (f32 epilogue); restage in the same padded buf.
        hidden = jnp.maximum(conv3x3(buf_ref, w1_ref, b1_ref), 0.0)
        buf_ref[:, 1:H + 1, 1:W + 1, :] = (
            hidden.astype(jnp.bfloat16).reshape(Nb, H, W, C))

        # conv2 -> bias, residual add in f32 (identity read from x_ref).
        act2 = conv3x3(buf_ref, w2_ref, b2_ref).reshape(Nb, H, W, C)
        o_ref[...] = (x_ref[...] + act2 * res_scale).astype(o_ref.dtype)

    return kernel


# ------------------------ block sizing / wrapper -----------------------------


def _tpu_generation():
    """(tensorcores_per_chip, vmem_ceiling_bytes), conservative fallbacks."""
    try:
        kind = jax.devices()[0].device_kind.lower()
    except Exception:
        kind = ""
    if "v5 lite" in kind or "v5e" in kind:
        return 1, 100 * (1 << 20)   # 1 TC, 128 MiB physical VMEM
    if "v6" in kind:
        return 1, 100 * (1 << 20)   # 1 TC, 128 MiB physical VMEM
    if "v7" in kind:
        return 2, 48 * (1 << 20)    # 2 TCs, 64 MiB physical VMEM
    return 2, 48 * (1 << 20)        # unknown: conservative


def _vmem_bytes_per_step(nb, H, W, C):
    """Rough per-grid-step VMEM footprint (block sizing & vmem_limit)."""
    Hp, Wp = H + 2, W + 2
    m = nb * H * W
    io_block = nb * H * W * C * 4            # one f32 input (or output) block
    scratch = nb * Hp * Wp * C * 2           # padded bf16 activation buffer
    patch = m * 9 * C * 2                    # bf16 (M, 9C) patch temporary
    epilogue = 2 * m * C * 4                 # f32 conv result + residual temps
    weights = 2 * (9 * C * C * 2 + C * 4)    # both convs' weights + biases
    return 2 * io_block * 2 + scratch + patch + epilogue + 2 * weights


def _pick_batch_block(N, H, W, C, n_cores, vmem_budget):
    """Largest batch block Nb (divisor of N) whose per-step footprint fits the
    VMEM budget.  >= 2 grid steps are only required on multi-TensorCore chips
    (single-TC chips want the biggest block that fits)."""
    if _vmem_bytes_per_step(1, H, W, C) > vmem_budget:
        # TODO(synk): row tiling with a 2-row halo (manual DMA) for very large
        # feature maps; fail loudly instead of compiling an OOM block.
        raise NotImplementedError(
            "single-image block exceeds the VMEM budget; row tiling with a "
            "2-row halo is not implemented")
    best = 1
    for nb in range(1, N + 1):
        if N % nb:
            continue
        if _vmem_bytes_per_step(nb, H, W, C) > vmem_budget:
            break
        if n_cores >= 2 and N >= 2 and N // nb < 2:
            break
        best = nb
    return best


def residual_block_no_bn(x_nchw, w1, b1, w2, b2, res_scale=1.0):
    """x_nchw: (N, C, H, W) f32; w*: (C_out, C_in, 3, 3); b*: (C,)."""
    N, C, H, W = x_nchw.shape

    # NCHW -> NHWC (channels on lanes). No HBM pad pass — padding is in-kernel.
    # Input stays f32 so the residual identity keeps full precision; the single
    # bf16 cast for the MXU happens inside the kernel.
    x_nhwc = jnp.transpose(x_nchw, (0, 2, 3, 1))

    # (C_out, C_in, kh, kw) -> (kh, kw, C_in, C_out) -> (9*C_in, C_out), bf16.
    w1_k = jnp.transpose(w1, (2, 3, 1, 0)).reshape(9 * C, C).astype(jnp.bfloat16)
    w2_k = jnp.transpose(w2, (2, 3, 1, 0)).reshape(9 * C, C).astype(jnp.bfloat16)
    b1_k = b1.reshape(1, C).astype(jnp.float32)
    b2_k = b2.reshape(1, C).astype(jnp.float32)

    n_cores, vmem_ceiling = _tpu_generation()
    Nb = _pick_batch_block(N, H, W, C, n_cores, int(0.8 * vmem_ceiling))
    vmem_limit = int(min(vmem_ceiling,
                         max(2 * _vmem_bytes_per_step(Nb, H, W, C), 32 << 20)))

    kernel = _make_resblock_kernel(Nb, H, W, C, float(res_scale))
    grid = (N // Nb,)

    out_nhwc = pl.pallas_call(
        kernel,
        out_shape=jax.ShapeDtypeStruct((N, H, W, C), x_nchw.dtype),
        grid_spec=pltpu.PrefetchScalarGridSpec(
            num_scalar_prefetch=0,
            grid=grid,
            in_specs=[
                pl.BlockSpec((Nb, H, W, C), lambda n: (n, 0, 0, 0)),
                pl.BlockSpec((9 * C, C), lambda n: (0, 0)),
                pl.BlockSpec((1, C), lambda n: (0, 0)),
                pl.BlockSpec((9 * C, C), lambda n: (0, 0)),
                pl.BlockSpec((1, C), lambda n: (0, 0)),
            ],
            out_specs=pl.BlockSpec((Nb, H, W, C), lambda n: (n, 0, 0, 0)),
            scratch_shapes=[pltpu.VMEM((Nb, H + 2, W + 2, C), jnp.bfloat16)],
        ),
        compiler_params=pltpu.CompilerParams(
            dimension_semantics=("parallel",),
            vmem_limit_bytes=vmem_limit),
    )(x_nhwc, w1_k, b1_k, w2_k, b2_k)

    # NHWC -> NCHW (matches the PyTorch output convention).
    return jnp.transpose(out_nhwc, (0, 3, 1, 2))


# ------------------------------ test harness --------------------------------


def _kaiming_normal_fan_in(key, shape, scale):
    # nn.Conv2d weight (C_out, C_in, kh, kw); kaiming_init(a=0, mode='fan_in',
    # nonlinearity='relu') => std = sqrt(2 / fan_in); default_init_weights
    # then scales by `scale` (0.1 for this block).
    c_out, c_in, kh, kw = shape
    std = math.sqrt(2.0 / (c_in * kh * kw))
    return jax.random.normal(key, shape, dtype=jnp.float32) * std * scale


def _reference(x, w1, b1, w2, b2, res_scale):
    # Pure-JAX NCHW reference for the correctness check.
    def conv(x, w, b):
        y = jax.lax.conv_general_dilated(
            x, w, window_strides=(1, 1), padding=((1, 1), (1, 1)),
            dimension_numbers=("NCHW", "OIHW", "NCHW"),
            precision=jax.lax.Precision.HIGHEST)
        return y + b.reshape(1, -1, 1, 1)

    out = conv(jnp.maximum(conv(x, w1, b1), 0.0), w2, b2)
    return x + out * res_scale


if __name__ == "__main__":
    N, C, H, W = 2, 64, 16, 16   # mid_channels = 64 (module default)
    res_scale = 1.0

    key = jax.random.PRNGKey(0)
    kx, k1, k2 = jax.random.split(key, 3)
    x = jax.random.normal(kx, (N, C, H, W), dtype=jnp.float32)

    # init_weights(): kaiming fan_in normal, scaled by 0.1; biases = 0.
    w1 = _kaiming_normal_fan_in(k1, (C, C, 3, 3), scale=0.1)
    b1 = jnp.zeros((C,), jnp.float32)
    w2 = _kaiming_normal_fan_in(k2, (C, C, 3, 3), scale=0.1)
    b2 = jnp.zeros((C,), jnp.float32)

    out = residual_block_no_bn(x, w1, b1, w2, b2, res_scale)
    out = jax.block_until_ready(out)

    ref = _reference(x, w1, b1, w2, b2, res_scale)
    assert out.shape == (N, C, H, W)
    assert jnp.allclose(out, ref, rtol=1e-2, atol=1e-2), (
        float(jnp.max(jnp.abs(out - ref))))

    print("KERNEL_OK")
</pallas_src>

<mosaic_0001>
module attributes {stable_mosaic.version = 11 : i64} {
  func.func @kernel(%arg0: i32, %arg1: memref<1x16x16x64xf32, #tpu.memory_space<vmem>>, %arg2: memref<576x64xbf16, #tpu.memory_space<vmem>>, %arg3: memref<1x64xf32, #tpu.memory_space<vmem>>, %arg4: memref<576x64xbf16, #tpu.memory_space<vmem>>, %arg5: memref<1x64xf32, #tpu.memory_space<vmem>>, %arg6: memref<1x16x16x64xf32, #tpu.memory_space<vmem>>, %arg7: memref<1x18x18x64xbf16, #tpu.memory_space<vmem>>) attributes {dimension_semantics = [#tpu.dimension_semantics<parallel>], iteration_bounds = array<i64: 2>, scalar_prefetch = 0 : i64, scratch_operands = 1 : i64, tpu.core_type = #tpu.core_type<tc>, window_params = [{transform_indices = @transform_0, window_bounds = array<i64: 1, 16, 16, 64>}, {pipeline_mode = #tpu.pipeline_mode<synchronous>, transform_indices = @transform_1, window_bounds = array<i64: 576, 64>}, {pipeline_mode = #tpu.pipeline_mode<synchronous>, transform_indices = @transform_2, window_bounds = array<i64: 1, 64>}, {pipeline_mode = #tpu.pipeline_mode<synchronous>, transform_indices = @transform_3, window_bounds = array<i64: 576, 64>}, {pipeline_mode = #tpu.pipeline_mode<synchronous>, transform_indices = @transform_4, window_bounds = array<i64: 1, 64>}, {transform_indices = @transform_5, window_bounds = array<i64: 1, 16, 16, 64>}]} {
    %cst = arith.constant 0.000000e+00 : bf16
    %0 = vector.broadcast %cst : bf16 to vector<1x1x18x64xbf16>
    %cst_0 = arith.constant 0.000000e+00 : bf16
    %1 = vector.broadcast %cst_0 : bf16 to vector<1x18x1x64xbf16>
    %c0 = arith.constant 0 : index
    %c0_1 = arith.constant 0 : index
    %c0_2 = arith.constant 0 : index
    %c0_3 = arith.constant 0 : index
    %2 = vector.load %arg7[%c0, %c0_1, %c0_2, %c0_3] : memref<1x18x18x64xbf16, #tpu.memory_space<vmem>>, vector<1x1x18x64xbf16>
    tpu.vector_store %arg7[%c0, %c0_1, %c0_2, %c0_3], %0 {strides = array<i32>} : memref<1x18x18x64xbf16, #tpu.memory_space<vmem>>, vector<1x1x18x64xbf16>,
    %c0_4 = arith.constant 0 : index
    %c17 = arith.constant 17 : index
    %c0_5 = arith.constant 0 : index
    %c0_6 = arith.constant 0 : index
    %3 = vector.load %arg7[%c0_4, %c17, %c0_5, %c0_6] : memref<1x18x18x64xbf16, #tpu.memory_space<vmem>>, vector<1x1x18x64xbf16>
    tpu.vector_store %arg7[%c0_4, %c17, %c0_5, %c0_6], %0 {strides = array<i32>} : memref<1x18x18x64xbf16, #tpu.memory_space<vmem>>, vector<1x1x18x64xbf16>,
    %c0_7 = arith.constant 0 : index
    %c0_8 = arith.constant 0 : index
    %c0_9 = arith.constant 0 : index
    %c0_10 = arith.constant 0 : index
    %4 = vector.load %arg7[%c0_7, %c0_8, %c0_9, %c0_10] : memref<1x18x18x64xbf16, #tpu.memory_space<vmem>>, vector<1x18x1x64xbf16>
    tpu.vector_store %arg7[%c0_7, %c0_8, %c0_9, %c0_10], %1 {strides = array<i32>} : memref<1x18x18x64xbf16, #tpu.memory_space<vmem>>, vector<1x18x1x64xbf16>,
    %c0_11 = arith.constant 0 : index
    %c0_12 = arith.constant 0 : index
    %c17_13 = arith.constant 17 : index
    %c0_14 = arith.constant 0 : index
    %5 = vector.load %arg7[%c0_11, %c0_12, %c17_13, %c0_14] : memref<1x18x18x64xbf16, #tpu.memory_space<vmem>>, vector<1x18x1x64xbf16>
    tpu.vector_store %arg7[%c0_11, %c0_12, %c17_13, %c0_14], %1 {strides = array<i32>} : memref<1x18x18x64xbf16, #tpu.memory_space<vmem>>, vector<1x18x1x64xbf16>,
    %c0_15 = arith.constant 0 : index
    %c0_16 = arith.constant 0 : index
    %c0_17 = arith.constant 0 : index
    %c0_18 = arith.constant 0 : index
    %6 = vector.load %arg1[%c0_15, %c0_16, %c0_17, %c0_18] : memref<1x16x16x64xf32, #tpu.memory_space<vmem>>, vector<1x16x16x64xf32>
    %7 = arith.truncf %6 : vector<1x16x16x64xf32> to vector<1x16x16x64xbf16>
    %c0_19 = arith.constant 0 : index
    %c1 = arith.constant 1 : index
    %c1_20 = arith.constant 1 : index
    %c0_21 = arith.constant 0 : index
    %8 = vector.load %arg7[%c0_19, %c1, %c1_20, %c0_21] : memref<1x18x18x64xbf16, #tpu.memory_space<vmem>>, vector<1x16x16x64xbf16>
    tpu.vector_store %arg7[%c0_19, %c1, %c1_20, %c0_21], %7 {strides = array<i32>} : memref<1x18x18x64xbf16, #tpu.memory_space<vmem>>, vector<1x16x16x64xbf16>,
    %c0_22 = arith.constant 0 : index
    %c0_23 = arith.constant 0 : index
    %c0_24 = arith.constant 0 : index
    %c0_25 = arith.constant 0 : index
    %9 = vector.load %arg7[%c0_22, %c0_23, %c0_24, %c0_25] : memref<1x18x18x64xbf16, #tpu.memory_space<vmem>>, vector<1x16x16x64xbf16>
    %c0_26 = arith.constant 0 : index
    %c0_27 = arith.constant 0 : index
    %c1_28 = arith.constant 1 : index
    %c0_29 = arith.constant 0 : index
    %10 = vector.load %arg7[%c0_26, %c0_27, %c1_28, %c0_29] : memref<1x18x18x64xbf16, #tpu.memory_space<vmem>>, vector<1x16x16x64xbf16>
    %c0_30 = arith.constant 0 : index
    %c0_31 = arith.constant 0 : index
    %c2 = arith.constant 2 : index
    %c0_32 = arith.constant 0 : index
    %11 = vector.load %arg7[%c0_30, %c0_31, %c2, %c0_32] : memref<1x18x18x64xbf16, #tpu.memory_space<vmem>>, vector<1x16x16x64xbf16>
    %c0_33 = arith.constant 0 : index
    %c1_34 = arith.constant 1 : index
    %c0_35 = arith.constant 0 : index
    %c0_36 = arith.constant 0 : index
    %12 = vector.load %arg7[%c0_33, %c1_34, %c0_35, %c0_36] : memref<1x18x18x64xbf16, #tpu.memory_space<vmem>>, vector<1x16x16x64xbf16>
    %c0_37 = arith.constant 0 : index
    %c1_38 = arith.constant 1 : index
    %c1_39 = arith.constant 1 : index
    %c0_40 = arith.constant 0 : index
    %13 = vector.load %arg7[%c0_37, %c1_38, %c1_39, %c0_40] : memref<1x18x18x64xbf16, #tpu.memory_space<vmem>>, vector<1x16x16x64xbf16>
    %c0_41 = arith.constant 0 : index
    %c1_42 = arith.constant 1 : index
    %c2_43 = arith.constant 2 : index
    %c0_44 = arith.constant 0 : index
    %14 = vector.load %arg7[%c0_41, %c1_42, %c2_43, %c0_44] : memref<1x18x18x64xbf16, #tpu.memory_space<vmem>>, vector<1x16x16x64xbf16>
    %c0_45 = arith.constant 0 : index
    %c2_46 = arith.constant 2 : index
    %c0_47 = arith.constant 0 : index
    %c0_48 = arith.constant 0 : index
    %15 = vector.load %arg7[%c0_45, %c2_46, %c0_47, %c0_48] : memref<1x18x18x64xbf16, #tpu.memory_space<vmem>>, vector<1x16x16x64xbf16>
    %c0_49 = arith.constant 0 : index
    %c2_50 = arith.constant 2 : index
    %c1_51 = arith.constant 1 : index
    %c0_52 = arith.constant 0 : index
    %16 = vector.load %arg7[%c0_49, %c2_50, %c1_51, %c0_52] : memref<1x18x18x64xbf16, #tpu.memory_space<vmem>>, vector<1x16x16x64xbf16>
    %c0_53 = arith.constant 0 : index
    %c2_54 = arith.constant 2 : index
    %c2_55 = arith.constant 2 : index
    %c0_56 = arith.constant 0 : index
    %17 = vector.load %arg7[%c0_53, %c2_54, %c2_55, %c0_56] : memref<1x18x18x64xbf16, #tpu.memory_space<vmem>>, vector<1x16x16x64xbf16>
    %18 = tpu.concatenate %9, %10, %11, %12, %13, %14, %15, %16, %17 in 3 : vector<1x16x16x64xbf16>, vector<1x16x16x64xbf16>, vector<1x16x16x64xbf16>, vector<1x16x16x64xbf16>, vector<1x16x16x64xbf16>, vector<1x16x16x64xbf16>, vector<1x16x16x64xbf16>, vector<1x16x16x64xbf16>, vector<1x16x16x64xbf16> -> vector<1x16x16x576xbf16>
    %19 = vector.shape_cast %18 : vector<1x16x16x576xbf16> to vector<256x576xbf16>
    %c0_57 = arith.constant 0 : index
    %c0_58 = arith.constant 0 : index
    %20 = vector.load %arg2[%c0_57, %c0_58] : memref<576x64xbf16, #tpu.memory_space<vmem>>, vector<576x64xbf16>
    %cst_59 = arith.constant dense<0.000000e+00> : vector<256x64xf32>
    %21 = tpu.matmul %19, %20, %cst_59 {dimension_numbers = #tpu.dot_dimension_numbers<[1], [0], [0], [1], [0, 0, 1, 1], [], []>} : vector<256x576xbf16>, vector<576x64xbf16>, vector<256x64xf32> -> vector<256x64xf32>
    %c0_60 = arith.constant 0 : index
    %c0_61 = arith.constant 0 : index
    %22 = vector.load %arg3[%c0_60, %c0_61] : memref<1x64xf32, #tpu.memory_space<vmem>>, vector<1x64xf32>
    %23 = vector.shape_cast %22 : vector<1x64xf32> to vector<64xf32>
    %24 = vector.shape_cast %23 : vector<64xf32> to vector<1x64xf32>
    %25 = vector.broadcast %24 : vector<1x64xf32> to vector<256x64xf32>
    %26 = arith.addf %21, %25 : vector<256x64xf32>
    %cst_62 = arith.constant 0.000000e+00 : f32
    %27 = vector.broadcast %cst_62 : f32 to vector<256x64xf32>
    %28 = arith.maximumf %26, %27 : vector<256x64xf32>
    %29 = arith.truncf %28 : vector<256x64xf32> to vector<256x64xbf16>
    %30 = vector.shape_cast %29 : vector<256x64xbf16> to vector<1x16x16x64xbf16>
    %c0_63 = arith.constant 0 : index
    %c1_64 = arith.constant 1 : index
    %c1_65 = arith.constant 1 : index
    %c0_66 = arith.constant 0 : index
    %31 = vector.load %arg7[%c0_63, %c1_64, %c1_65, %c0_66] : memref<1x18x18x64xbf16, #tpu.memory_space<vmem>>, vector<1x16x16x64xbf16>
    tpu.vector_store %arg7[%c0_63, %c1_64, %c1_65, %c0_66], %30 {strides = array<i32>} : memref<1x18x18x64xbf16, #tpu.memory_space<vmem>>, vector<1x16x16x64xbf16>,
    %c0_67 = arith.constant 0 : index
    %c0_68 = arith.constant 0 : index
    %c0_69 = arith.constant 0 : index
    %c0_70 = arith.constant 0 : index
    %32 = vector.load %arg7[%c0_67, %c0_68, %c0_69, %c0_70] : memref<1x18x18x64xbf16, #tpu.memory_space<vmem>>, vector<1x16x16x64xbf16>
    %c0_71 = arith.constant 0 : index
    %c0_72 = arith.constant 0 : index
    %c1_73 = arith.constant 1 : index
    %c0_74 = arith.constant 0 : index
    %33 = vector.load %arg7[%c0_71, %c0_72, %c1_73, %c0_74] : memref<1x18x18x64xbf16, #tpu.memory_space<vmem>>, vector<1x16x16x64xbf16>
    %c0_75 = arith.constant 0 : index
    %c0_76 = arith.constant 0 : index
    %c2_77 = arith.constant 2 : index
    %c0_78 = arith.constant 0 : index
    %34 = vector.load %arg7[%c0_75, %c0_76, %c2_77, %c0_78] : memref<1x18x18x64xbf16, #tpu.memory_space<vmem>>, vector<1x16x16x64xbf16>
    %c0_79 = arith.constant 0 : index
    %c1_80 = arith.constant 1 : index
    %c0_81 = arith.constant 0 : index
    %c0_82 = arith.constant 0 : index
    %35 = vector.load %arg7[%c0_79, %c1_80, %c0_81, %c0_82] : memref<1x18x18x64xbf16, #tpu.memory_space<vmem>>, vector<1x16x16x64xbf16>
    %c0_83 = arith.constant 0 : index
    %c1_84 = arith.constant 1 : index
    %c1_85 = arith.constant 1 : index
    %c0_86 = arith.constant 0 : index
    %36 = vector.load %arg7[%c0_83, %c1_84, %c1_85, %c0_86] : memref<1x18x18x64xbf16, #tpu.memory_space<vmem>>, vector<1x16x16x64xbf16>
    %c0_87 = arith.constant 0 : index
    %c1_88 = arith.constant 1 : index
    %c2_89 = arith.constant 2 : index
    %c0_90 = arith.constant 0 : index
    %37 = vector.load %arg7[%c0_87, %c1_88, %c2_89, %c0_90] : memref<1x18x18x64xbf16, #tpu.memory_space<vmem>>, vector<1x16x16x64xbf16>
    %c0_91 = arith.constant 0 : index
    %c2_92 = arith.constant 2 : index
    %c0_93 = arith.constant 0 : index
    %c0_94 = arith.constant 0 : index
    %38 = vector.load %arg7[%c0_91, %c2_92, %c0_93, %c0_94] : memref<1x18x18x64xbf16, #tpu.memory_space<vmem>>, vector<1x16x16x64xbf16>
    %c0_95 = arith.constant 0 : index
    %c2_96 = arith.constant 2 : index
    %c1_97 = arith.constant 1 : index
    %c0_98 = arith.constant 0 : index
    %39 = vector.load %arg7[%c0_95, %c2_96, %c1_97, %c0_98] : memref<1x18x18x64xbf16, #tpu.memory_space<vmem>>, vector<1x16x16x64xbf16>
    %c0_99 = arith.constant 0 : index
    %c2_100 = arith.constant 2 : index
    %c2_101 = arith.constant 2 : index
    %c0_102 = arith.constant 0 : index
    %40 = vector.load %arg7[%c0_99, %c2_100, %c2_101, %c0_102] : memref<1x18x18x64xbf16, #tpu.memory_space<vmem>>, vector<1x16x16x64xbf16>
    %41 = tpu.concatenate %32, %33, %34, %35, %36, %37, %38, %39, %40 in 3 : vector<1x16x16x64xbf16>, vector<1x16x16x64xbf16>, vector<1x16x16x64xbf16>, vector<1x16x16x64xbf16>, vector<1x16x16x64xbf16>, vector<1x16x16x64xbf16>, vector<1x16x16x64xbf16>, vector<1x16x16x64xbf16>, vector<1x16x16x64xbf16> -> vector<1x16x16x576xbf16>
    %42 = vector.shape_cast %41 : vector<1x16x16x576xbf16> to vector<256x576xbf16>
    %c0_103 = arith.constant 0 : index
    %c0_104 = arith.constant 0 : index
    %43 = vector.load %arg4[%c0_103, %c0_104] : memref<576x64xbf16, #tpu.memory_space<vmem>>, vector<576x64xbf16>
    %cst_105 = arith.constant dense<0.000000e+00> : vector<256x64xf32>
    %44 = tpu.matmul %42, %43, %cst_105 {dimension_numbers = #tpu.dot_dimension_numbers<[1], [0], [0], [1], [0, 0, 1, 1], [], []>} : vector<256x576xbf16>, vector<576x64xbf16>, vector<256x64xf32> -> vector<256x64xf32>
    %c0_106 = arith.constant 0 : index
    %c0_107 = arith.constant 0 : index
    %45 = vector.load %arg5[%c0_106, %c0_107] : memref<1x64xf32, #tpu.memory_space<vmem>>, vector<1x64xf32>
    %46 = vector.shape_cast %45 : vector<1x64xf32> to vector<64xf32>
    %47 = vector.shape_cast %46 : vector<64xf32> to vector<1x64xf32>
    %48 = vector.broadcast %47 : vector<1x64xf32> to vector<256x64xf32>
    %49 = arith.addf %44, %48 : vector<256x64xf32>
    %50 = vector.shape_cast %49 : vector<256x64xf32> to vector<1x16x16x64xf32>
    %c0_108 = arith.constant 0 : index
    %c0_109 = arith.constant 0 : index
    %c0_110 = arith.constant 0 : index
    %c0_111 = arith.constant 0 : index
    %51 = vector.load %arg1[%c0_108, %c0_109, %c0_110, %c0_111] : memref<1x16x16x64xf32, #tpu.memory_space<vmem>>, vector<1x16x16x64xf32>
    %cst_112 = arith.constant 1.000000e+00 : f32
    %52 = vector.broadcast %cst_112 : f32 to vector<1x16x16x64xf32>
    %53 = arith.mulf %50, %52 : vector<1x16x16x64xf32>
    %54 = arith.addf %51, %53 : vector<1x16x16x64xf32>
    %c0_113 = arith.constant 0 : index
    %c0_114 = arith.constant 0 : index
    %c0_115 = arith.constant 0 : index
    %c0_116 = arith.constant 0 : index
    %55 = vector.load %arg6[%c0_113, %c0_114, %c0_115, %c0_116] : memref<1x16x16x64xf32, #tpu.memory_space<vmem>>, vector<1x16x16x64xf32>
    tpu.vector_store %arg6[%c0_113, %c0_114, %c0_115, %c0_116], %54 {strides = array<i32>} : memref<1x16x16x64xf32, #tpu.memory_space<vmem>>, vector<1x16x16x64xf32>,
    return
  }
  func.func @transform_0(%arg0: i32) -> (i32, i32, i32, i32) {
    %c0_i32 = arith.constant 0 : i32
    %c0_i32_0 = arith.constant 0 : i32
    %c0_i32_1 = arith.constant 0 : i32
    %c0_i32_2 = arith.constant 0 : i32
    return %arg0, %c0_i32, %c0_i32_0, %c0_i32_1 : i32, i32, i32, i32
  }
  func.func @transform_1(%arg0: i32) -> (i32, i32) {
    %c0_i32 = arith.constant 0 : i32
    %c0_i32_0 = arith.constant 0 : i32
    %c0_i32_1 = arith.constant 0 : i32
    return %c0_i32, %c0_i32_0 : i32, i32
  }
  func.func @transform_2(%arg0: i32) -> (i32, i32) {
    %c0_i32 = arith.constant 0 : i32
    %c0_i32_0 = arith.constant 0 : i32
    %c0_i32_1 = arith.constant 0 : i32
    return %c0_i32, %c0_i32_0 : i32, i32
  }
  func.func @transform_3(%arg0: i32) -> (i32, i32) {
    %c0_i32 = arith.constant 0 : i32
    %c0_i32_0 = arith.constant 0 : i32
    %c0_i32_1 = arith.constant 0 : i32
    return %c0_i32, %c0_i32_0 : i32, i32
  }
  func.func @transform_4(%arg0: i32) -> (i32, i32) {
    %c0_i32 = arith.constant 0 : i32
    %c0_i32_0 = arith.constant 0 : i32
    %c0_i32_1 = arith.constant 0 : i32
    return %c0_i32, %c0_i32_0 : i32, i32
  }
  func.func @transform_5(%arg0: i32) -> (i32, i32, i32, i32) {
    %c0_i32 = arith.constant 0 : i32
    %c0_i32_0 = arith.constant 0 : i32
    %c0_i32_1 = arith.constant 0 : i32
    %c0_i32_2 = arith.constant 0 : i32
    return %arg0, %c0_i32, %c0_i32_0, %c0_i32_1 : i32, i32, i32, i32
  }
}

</mosaic_0001>

<llo_original>
// kernel: tpu_custom_call.1
$region0: #{tpu_custom_call.1}
  #allocation0 [shape = 'u32[]', space=smem, size = 0x4, offset = 0x4, fixed_abs, tag = 'smem constant byte address 0x4 - core index']
  #allocation1 [shape = 'u32[144,128]{1,0:T(1,128)}', space=vmem, size = 0x12000, scoped, tag = 'internal scratch']
  #allocation2 [shape = 'bf16[1,18,18,64]{3,2,1,0:T(8,128)(2,1)}', space=vmem, size = 0x1b000, scoped, tag = 'scratch operand']
  %s0 = inlined_call_operand.vmem [shape: f32[2,16,16,64], index: 0, kind: input, shape index: {}]
  %s1 = inlined_call_operand.vmem [shape: bf16[576,64], index: 1, kind: input, shape index: {}]
  %s2 = inlined_call_operand.vmem [shape: f32[1,64], index: 2, kind: input, shape index: {}]
  %s3 = inlined_call_operand.vmem [shape: bf16[576,64], index: 3, kind: input, shape index: {}]
  %s4 = inlined_call_operand.vmem [shape: f32[1,64], index: 4, kind: input, shape index: {}]
  %s5 = inlined_call_operand.hbm [shape: f32[2,16,16,64], index: 5, kind: output, shape index: {}]
  %s6 = sld [smem:[#allocation0]]
  $region53: #{tpu_custom_call.1} parent=0
    _
  %s8 = ssub.s32 1, %s6
  %s9 = scalar_select 0, %s8, %s6
  $region1: #{tpu_custom_call.1} parent=0
    #allocation3 [shape = 'u8[262144]{0}', space=vmem, size = 0x40000, scoped, tag = 'output window, operand 0']
    #allocation4 [shape = 's32[2]{0}', space=sflag, size = 0x8, scoped, tag = 'scoped memory for tpu_custom_call.1']
    %10 = vsyncpa [#allocation4], 0
    %s11 = scalar_lea.sflag [#allocation4], 1
    %12 = vsyncpa %s11, 0
    loop: start=0, step=1, limit=4
    $region2: #{tpu_custom_call.1} parent=1 // loop_pre_header
      _
    $region3: #{tpu_custom_call.1} parent=1 // loop_header
      %s14 = sphi 0, %s18
      %p15 = scmp.ge.s32.totalorder %s14, 4
      %s24 = sphi 0, %s26
      %s27 = sphi 0, %s24
      %s28 = sphi 0, %s27
      %s44 = sphi 0, %s28
      %s48 = sphi 0, %s48
      %s50 = sphi 0, %s48
      %s51 = sphi 0, %s50
      %s65 = sphi 0, %s51
      %s69 = sphi 0, %s69
      %s71 = sphi 0, %s69
      %s72 = sphi 0, %s71
      %s86 = sphi 0, %s72
      %s90 = sphi 0, %s90
      %s92 = sphi 0, %s90
      %s93 = sphi 0, %s92
      %s107 = sphi 0, %s93
      %s111 = sphi 0, %s111
      %s113 = sphi 0, %s111
      %s114 = sphi 0, %s113
      %s128 = sphi 0, %s114
      %s134 = sphi 0, %s136
      %s137 = sphi 0, %s134
      %s138 = sphi 0, %s137
      %s154 = sphi 0, %s138
    $region4: #{tpu_custom_call.1} parent=1 // loop_header_branch
      %17 = sbr.rel (%p15) target = $region8
    $region5: #{tpu_custom_call.1} parent=1 // loop_body
      %s19 = ssub.s32 %s14, 1
      %s20 = ssub.s32 %s14, 2
      %s21 = sadd.s32 %s14, 1
      %s22 = ssub.s32 %s14, %s21
      %p23 = scmp.eq.s32.totalorder %s22, 0
      %s25 = sadd.s32 %s24, 1
      %s26 = scalar_select %p23, %s24, %s25
      %p29 = pneg %p23
      %p30 = scmp.eq.s32.totalorder %s14, 1
      %p31 = por %p29, %p30
      %p32 = scmp.ne.s32.totalorder %s24, %s27
      %p33 = scmp.eq.s32.totalorder %s14, 0
      %p34 = por %p32, %p33
      %p35 = scmp.ne.s32.totalorder %s24, %s27
      %p36 = scmp.eq.s32.totalorder %s19, 1
      %p37 = por %p35, %p36
      %p38 = scmp.ne.s32.totalorder %s27, %s28
      %p39 = scmp.eq.s32.totalorder %s19, 0
      %p40 = por %p38, %p39
      %p41 = scmp.ne.s32.totalorder %s27, %s28
      %p42 = scmp.eq.s32.totalorder %s20, 1
      %p43 = por %p41, %p42
      %p45 = scmp.ne.s32.totalorder %s28, %s44
      %p46 = scmp.eq.s32.totalorder %s20, 0
      %p47 = por %p45, %p46
      %s49 = sadd.s32 %s48, 1
      %p52 = scmp.eq.s32.totalorder %s14, 1
      %p53 = scmp.ne.s32.totalorder %s48, %s50
      %p54 = scmp.eq.s32.totalorder %s14, 0
      %p55 = por %p53, %p54
      %p56 = scmp.ne.s32.totalorder %s48, %s50
      %p57 = scmp.eq.s32.totalorder %s19, 1
      %p58 = por %p56, %p57
      %p59 = scmp.ne.s32.totalorder %s50, %s51
      %p60 = scmp.eq.s32.totalorder %s19, 0
      %p61 = por %p59, %p60
      %p62 = scmp.ne.s32.totalorder %s50, %s51
      %p63 = scmp.eq.s32.totalorder %s20, 1
      %p64 = por %p62, %p63
      %p66 = scmp.ne.s32.totalorder %s51, %s65
      %p67 = scmp.eq.s32.totalorder %s20, 0
      %p68 = por %p66, %p67
      %s70 = sadd.s32 %s69, 1
      %p73 = scmp.eq.s32.totalorder %s14, 1
      %p74 = scmp.ne.s32.totalorder %s69, %s71
      %p75 = scmp.eq.s32.totalorder %s14, 0
      %p76 = por %p74, %p75
      %p77 = scmp.ne.s32.totalorder %s69, %s71
      %p78 = scmp.eq.s32.totalorder %s19, 1
      %p79 = por %p77, %p78
      %p80 = scmp.ne.s32.totalorder %s71, %s72
      %p81 = scmp.eq.s32.totalorder %s19, 0
      %p82 = por %p80, %p81
      %p83 = scmp.ne.s32.totalorder %s71, %s72
      %p84 = scmp.eq.s32.totalorder %s20, 1
      %p85 = por %p83, %p84
      %p87 = scmp.ne.s32.totalorder %s72, %s86
      %p88 = scmp.eq.s32.totalorder %s20, 0
      %p89 = por %p87, %p88
      %s91 = sadd.s32 %s90, 1
      %p94 = scmp.eq.s32.totalorder %s14, 1
      %p95 = scmp.ne.s32.totalorder %s90, %s92
      %p96 = scmp.eq.s32.totalorder %s14, 0
      %p97 = por %p95, %p96
      %p98 = scmp.ne.s32.totalorder %s90, %s92
      %p99 = scmp.eq.s32.totalorder %s19, 1
      %p100 = por %p98, %p99
      %p101 = scmp.ne.s32.totalorder %s92, %s93
      %p102 = scmp.eq.s32.totalorder %s19, 0
      %p103 = por %p101, %p102
      %p104 = scmp.ne.s32.totalorder %s92, %s93
      %p105 = scmp.eq.s32.totalorder %s20, 1
      %p106 = por %p104, %p105
      %p108 = scmp.ne.s32.totalorder %s93, %s107
      %p109 = scmp.eq.s32.totalorder %s20, 0
      %p110 = por %p108, %p109
      %s112 = sadd.s32 %s111, 1
      %p115 = scmp.eq.s32.totalorder %s14, 1
      %p116 = scmp.ne.s32.totalorder %s111, %s113
      %p117 = scmp.eq.s32.totalorder %s14, 0
      %p118 = por %p116, %p117
      %p119 = scmp.ne.s32.totalorder %s111, %s113
      %p120 = scmp.eq.s32.totalorder %s19, 1
      %p121 = por %p119, %p120
      %p122 = scmp.ne.s32.totalorder %s113, %s114
      %p123 = scmp.eq.s32.totalorder %s19, 0
      %p124 = por %p122, %p123
      %p125 = scmp.ne.s32.totalorder %s113, %s114
      %p126 = scmp.eq.s32.totalorder %s20, 1
      %p127 = por %p125, %p126
      %p129 = scmp.ne.s32.totalorder %s114, %s128
      %p130 = scmp.eq.s32.totalorder %s20, 0
      %p131 = por %p129, %p130
      %s132 = ssub.s32 %s14, %s21
      %p133 = scmp.eq.s32.totalorder %s132, 0
      %s135 = sadd.s32 %s134, 1
      %s136 = scalar_select %p133, %s134, %s135
      %p139 = pneg %p133
      %p140 = scmp.eq.s32.totalorder %s14, 1
      %p141 = por %p139, %p140
      %p142 = scmp.ne.s32.totalorder %s134, %s137
      %p143 = scmp.eq.s32.totalorder %s14, 0
      %p144 = por %p142, %p143
      %p145 = scmp.ne.s32.totalorder %s134, %s137
      %p146 = scmp.eq.s32.totalorder %s19, 1
      %p147 = por %p145, %p146
      %p148 = scmp.ne.s32.totalorder %s137, %s138
      %p149 = scmp.eq.s32.totalorder %s19, 0
      %p150 = por %p148, %p149
      %p151 = scmp.ne.s32.totalorder %s137, %s138
      %p152 = scmp.eq.s32.totalorder %s20, 1
      %p153 = por %p151, %p152
      %p155 = scmp.ne.s32.totalorder %s138, %s154
      %p156 = scmp.eq.s32.totalorder %s20, 0
      %p157 = por %p155, %p156
      %p158 = scmp.le.s32.totalorder 1, %s14
      %p159 = scmp.lt.s32.totalorder %s14, 3
      %p160 = pnand %p158, %p159
      %p161 = pneg %p160
      // Predicated region
      $region9: #{tpu_custom_call.1} parent=5 // pred_check
        _
      $region10: #{tpu_custom_call.1} parent=5 // pred_check_branch
        %163 = sbr.rel (%p160) target = $region12
      $region11: #{tpu_custom_call.1} parent=5 // pred_region
        %s164 = ssub.s32 %s14, 1
        // Predicated region
        $region13: #{tpu_custom_call.1} parent=11 // pred_check
          %p165 = pneg %p61
        $region14: #{tpu_custom_call.1} parent=11 // pred_check_branch
          %167 = sbr.rel (%p165) target = $region16
        $region15: #{tpu_custom_call.1} parent=11 // pred_region
          _
        $region16: #{tpu_custom_call.1} parent=11 // pred_fallthru
          _
        // Predicated region
        $region17: #{tpu_custom_call.1} parent=11 // pred_check
          %p168 = pneg %p82
        $region18: #{tpu_custom_call.1} parent=11 // pred_check_branch
          %170 = sbr.rel (%p168) target = $region20
        $region19: #{tpu_custom_call.1} parent=11 // pred_region
          _
        $region20: #{tpu_custom_call.1} parent=11 // pred_fallthru
          _
        // Predicated region
        $region21: #{tpu_custom_call.1} parent=11 // pred_check
          %p171 = pneg %p103
        $region22: #{tpu_custom_call.1} parent=11 // pred_check_branch
          %173 = sbr.rel (%p171) target = $region24
        $region23: #{tpu_custom_call.1} parent=11 // pred_region
          _
        $region24: #{tpu_custom_call.1} parent=11 // pred_fallthru
          _
        // Predicated region
        $region25: #{tpu_custom_call.1} parent=11 // pred_check
          %p174 = pneg %p124
        $region26: #{tpu_custom_call.1} parent=11 // pred_check_branch
          %176 = sbr.rel (%p174) target = $region28
        $region27: #{tpu_custom_call.1} parent=11 // pred_region
          _
        $region28: #{tpu_custom_call.1} parent=11 // pred_fallthru
          _
      $region12: #{tpu_custom_call.1} parent=5 // pred_fallthru
        _
      %p177 = scmp.lt.s32.totalorder %s14, 2
      // Predicated region
      $region29: #{tpu_custom_call.1} parent=5 // pred_check
        %p178 = pneg %p177
      $region30: #{tpu_custom_call.1} parent=5 // pred_check_branch
        %180 = sbr.rel (%p178) target = $region32
      $region31: #{tpu_custom_call.1} parent=5 // pred_region
        // Predicated region
        $region33: #{tpu_custom_call.1} parent=31 // pred_check
          %p181 = pneg %p34
        $region34: #{tpu_custom_call.1} parent=31 // pred_check_branch
          %183 = sbr.rel (%p181) target = $region36
        $region35: #{tpu_custom_call.1} parent=31 // pred_region
          %p184 = scmp.lt.s32.totalorder %s14, 1
          %s185 = scalar_select %p184, %s14, 1
          %s186 = smul.addr %s185, 32
          %s187 = smul.addr %s186, 8
          %s188 = scalar_lea.vmem %s0, %s187
        $region36: #{tpu_custom_call.1} parent=31 // pred_fallthru
          _
      $region32: #{tpu_custom_call.1} parent=5 // pred_fallthru
        _
      %p189 = scmp.le.s32.totalorder 1, %s14
      %p190 = scmp.lt.s32.totalorder %s14, 3
      %p191 = pnand %p189, %p190
      %p192 = pneg %p191
      // Predicated region
      $region37: #{tpu_custom_call.1} parent=5 // pred_check
        _
      $region38: #{tpu_custom_call.1} parent=5 // pred_check_branch
        %194 = sbr.rel (%p191) target = $region40
      $region39: #{tpu_custom_call.1} parent=5 // pred_region
        %s195 = ssub.s32 %s14, 1
        %p196 = scmp.lt.s32.totalorder %s19, 1
        %s197 = scalar_select %p196, %s19, 1
        %s198 = smul.addr %s197, 32
        %s199 = smul.addr %s198, 8
        %s200 = scalar_lea.vmem %s0, %s199
        %p201 = pneg %p40
        %p202 = pneg %p37
        %p203 = pneg %p61
        %p204 = pneg %p58
        %p205 = pneg %p82
        %p206 = pneg %p79
        %p207 = pneg %p103
        %p208 = pneg %p100
        %p209 = pneg %p124
        %p210 = pneg %p121
        %p211 = pneg %p150
        %p212 = pneg %p147
        %s213 = sand.u32 %s137, 1
        %s214 = scalar_lea.sflag [#allocation4], %s213
        %s215 = sand.u32 %s137, 1
        %s216 = smul.addr %s215, 256
        %s217 = scalar_lea.vmem [#allocation3], %s216
        %p218 = scmp.lt.s32.totalorder %s19, 1
        %s219 = scalar_select %p218, %s19, 1
        %s220 = smul.addr %s219, 32
        %s221 = smul.addr %s220, 8
        %s222 = scalar_lea.vmem %s0, %s221
        %vm224 = vcmask 519168
        %225 = vst.msk [vmem:[#allocation2] sm:$0xf] %vm224, 0
        %226 = vst.msk [vmem:[#allocation2 + $0x4] sm:$0xf] %vm224, 0
        %vm227 = vcmask 516096
        %228 = vst.msk [vmem:[#allocation2 + $0x8] sm:$0x1] %vm227, 0
        %s229 = scalar_lea.vmem [#allocation2], 204
        %230 = vst.msk [vmem:[%s229] sm:$0xf] %vm224, 0
        %231 = vst.msk [vmem:[%s229 + $0x4] sm:$0xf] %vm224, 0
        %232 = vst.msk [vmem:[%s229 + $0x8] sm:$0x1] %vm227, 0
        %vm233 = vcmask 516096
        %vm234 = vsmask.f32 256
        %vm235 = vmand %vm233, %vm234
        %v236 = vld [vmem:[#allocation2] sm:$0x1]
        %v237 = vsel %vm235, 0, %v236
        %238 = vst [vmem:[#allocation2] sm:$0x1] %v237
        %v239 = vld [vmem:[#allocation2 + $0xc] sm:$0x1]
        %v240 = vsel %vm235, 0, %v239
        %241 = vst [vmem:[#allocation2 + $0xc] sm:$0x1] %v240
        %v242 = vld [vmem:[#allocation2 + $0x18] sm:$0x1]
        %v243 = vsel %vm235, 0, %v242
        %244 = vst [vmem:[#allocation2 + $0x18] sm:$0x1] %v243
        %v245 = vld [vmem:[#allocation2 + $0x24] sm:$0x1]
        %v246 = vsel %vm235, 0, %v245
        %247 = vst [vmem:[#allocation2 + $0x24] sm:$0x1] %v246
        %v248 = vld [vmem:[#allocation2 + $0x30] sm:$0x1]
        %v249 = vsel %vm235, 0, %v248
        %250 = vst [vmem:[#allocation2 + $0x30] sm:$0x1] %v249
        %v251 = vld [vmem:[#allocation2 + $0x3c] sm:$0x1]
        %v252 = vsel %vm235, 0, %v251
        %253 = vst [vmem:[#allocation2 + $0x3c] sm:$0x1] %v252
        %v254 = vld [vmem:[#allocation2 + $0x48] sm:$0x1]
        %v255 = vsel %vm235, 0, %v254
        %256 = vst [vmem:[#allocation2 + $0x48] sm:$0x1] %v255
        %v257 = vld [vmem:[#allocation2 + $0x54] sm:$0x1]
        %v258 = vsel %vm235, 0, %v257
        %259 = vst [vmem:[#allocation2 + $0x54] sm:$0x1] %v258
        %v260 = vld [vmem:[#allocation2 + $0x60] sm:$0x1]
        %v261 = vsel %vm235, 0, %v260
        %262 = vst [vmem:[#allocation2 + $0x60] sm:$0x1] %v261
        %v263 = vld [vmem:[#allocation2 + $0x6c] sm:$0x1]
        %v264 = vsel %vm235, 0, %v263
        %265 = vst [vmem:[#allocation2 + $0x6c] sm:$0x1] %v264
        %v266 = vld [vmem:[#allocation2 + $0x78] sm:$0x1]
        %v267 = vsel %vm235, 0, %v266
        %268 = vst [vmem:[#allocation2 + $0x78] sm:$0x1] %v267
        %v269 = vld [vmem:[#allocation2 + $0x84] sm:$0x1]
        %v270 = vsel %vm235, 0, %v269
        %271 = vst [vmem:[#allocation2 + $0x84] sm:$0x1] %v270
        %v272 = vld [vmem:[#allocation2 + $0x90] sm:$0x1]
        %v273 = vsel %vm235, 0, %v272
        %274 = vst [vmem:[#allocation2 + $0x90] sm:$0x1] %v273
        %v275 = vld [vmem:[#allocation2 + $0x9c] sm:$0x1]
        %v276 = vsel %vm235, 0, %v275
        %277 = vst [vmem:[#allocation2 + $0x9c] sm:$0x1] %v276
        %v278 = vld [vmem:[#allocation2 + $0xa8] sm:$0x1]
        %v279 = vsel %vm235, 0, %v278
        %280 = vst [vmem:[#allocation2 + $0xa8] sm:$0x1] %v279
        %v281 = vld [vmem:[#allocation2 + $0xb4] sm:$0x1]
        %v282 = vsel %vm235, 0, %v281
        %283 = vst [vmem:[#allocation2 + $0xb4] sm:$0x1] %v282
        %v284 = vld [vmem:[#allocation2 + $0xc0] sm:$0x1]
        %v285 = vsel %vm235, 0, %v284
        %286 = vst [vmem:[#allocation2 + $0xc0] sm:$0x1] %v285
        %v287 = vld [vmem:[#allocation2 + $0xcc] sm:$0x1]
        %v288 = vsel %vm235, 0, %v287
        %289 = vst [vmem:[#allocation2 + $0xcc] sm:$0x1] %v288
        %vm290 = vsmask.f32 7938
        %vm291 = vmand %vm233, %vm290
        %v292 = vld [vmem:[#allocation2 + $0x8] sm:$0x1]
        %v293 = vsel %vm291, 0, %v292
        %294 = vst [vmem:[#allocation2 + $0x8] sm:$0x1] %v293
        %v295 = vld [vmem:[#allocation2 + $0x14] sm:$0x1]
        %v296 = vsel %vm291, 0, %v295
        %297 = vst [vmem:[#allocation2 + $0x14] sm:$0x1] %v296
        %v298 = vld [vmem:[#allocation2 + $0x20] sm:$0x1]
        %v299 = vsel %vm291, 0, %v298
        %300 = vst [vmem:[#allocation2 + $0x20] sm:$0x1] %v299
        %v301 = vld [vmem:[#allocation2 + $0x2c] sm:$0x1]
        %v302 = vsel %vm291, 0, %v301
        %303 = vst [vmem:[#allocation2 + $0x2c] sm:$0x1] %v302
        %v304 = vld [vmem:[#allocation2 + $0x38] sm:$0x1]
        %v305 = vsel %vm291, 0, %v304
        %306 = vst [vmem:[#allocation2 + $0x38] sm:$0x1] %v305
        %v307 = vld [vmem:[#allocation2 + $0x44] sm:$0x1]
        %v308 = vsel %vm291, 0, %v307
        %309 = vst [vmem:[#allocation2 + $0x44] sm:$0x1] %v308
        %v310 = vld [vmem:[#allocation2 + $0x50] sm:$0x1]
        %v311 = vsel %vm291, 0, %v310
        %312 = vst [vmem:[#allocation2 + $0x50] sm:$0x1] %v311
        %v313 = vld [vmem:[#allocation2 + $0x5c] sm:$0x1]
        %v314 = vsel %vm291, 0, %v313
        %315 = vst [vmem:[#allocation2 + $0x5c] sm:$0x1] %v314
        %v316 = vld [vmem:[#allocation2 + $0x68] sm:$0x1]
        %v317 = vsel %vm291, 0, %v316
        %318 = vst [vmem:[#allocation2 + $0x68] sm:$0x1] %v317
        %v319 = vld [vmem:[#allocation2 + $0x74] sm:$0x1]
        %v320 = vsel %vm291, 0, %v319
        %321 = vst [vmem:[#allocation2 + $0x74] sm:$0x1] %v320
        %v322 = vld [vmem:[#allocation2 + $0x80] sm:$0x1]
        %v323 = vsel %vm291, 0, %v322
        %324 = vst [vmem:[#allocation2 + $0x80] sm:$0x1] %v323
        %v325 = vld [vmem:[#allocation2 + $0x8c] sm:$0x1]
        %v326 = vsel %vm291, 0, %v325
        %327 = vst [vmem:[#allocation2 + $0x8c] sm:$0x1] %v326
        %v328 = vld [vmem:[#allocation2 + $0x98] sm:$0x1]
        %v329 = vsel %vm291, 0, %v328
        %330 = vst [vmem:[#allocation2 + $0x98] sm:$0x1] %v329
        %v331 = vld [vmem:[#allocation2 + $0xa4] sm:$0x1]
        %v332 = vsel %vm291, 0, %v331
        %333 = vst [vmem:[#allocation2 + $0xa4] sm:$0x1] %v332
        %v334 = vld [vmem:[#allocation2 + $0xb0] sm:$0x1]
        %v335 = vsel %vm291, 0, %v334
        %336 = vst [vmem:[#allocation2 + $0xb0] sm:$0x1] %v335
        %v337 = vld [vmem:[#allocation2 + $0xbc] sm:$0x1]
        %v338 = vsel %vm291, 0, %v337
        %339 = vst [vmem:[#allocation2 + $0xbc] sm:$0x1] %v338
        %v340 = vld [vmem:[#allocation2 + $0xc8] sm:$0x1]
        %v341 = vsel %vm291, 0, %v340
        %342 = vst [vmem:[#allocation2 + $0xc8] sm:$0x1] %v341
        %v343 = vld [vmem:[#allocation2 + $0xd4] sm:$0x1]
        %v344 = vsel %vm291, 0, %v343
        %345 = vst [vmem:[#allocation2 + $0xd4] sm:$0x1] %v344
        %v346 = vld [vmem:[%s222] sm:$0xff]
        %v347 = vld [vmem:[%s222 + $0x8] sm:$0xff]
        %v348 = vld [vmem:[%s222 + $0x10] sm:$0xff]
        %v349 = vld [vmem:[%s222 + $0x18] sm:$0xff]
        %v350 = vld [vmem:[%s222 + $0x20] sm:$0xff]
        %v351 = vld [vmem:[%s222 + $0x28] sm:$0xff]
        %v352 = vld [vmem:[%s222 + $0x30] sm:$0xff]
        %v353 = vld [vmem:[%s222 + $0x38] sm:$0xff]
        %v354 = vld [vmem:[%s222 + $0x40] sm:$0xff]
        %v355 = vld [vmem:[%s222 + $0x48] sm:$0xff]
        %v356 = vld [vmem:[%s222 + $0x50] sm:$0xff]
        %v357 = vld [vmem:[%s222 + $0x58] sm:$0xff]
        %v358 = vld [vmem:[%s222 + $0x60] sm:$0xff]
        %v359 = vld [vmem:[%s222 + $0x68] sm:$0xff]
        %v360 = vld [vmem:[%s222 + $0x70] sm:$0xff]
        %v361 = vld [vmem:[%s222 + $0x78] sm:$0xff]
        %v362 = vld [vmem:[%s222 + $0x80] sm:$0xff]
        %v363 = vld [vmem:[%s222 + $0x88] sm:$0xff]
        %v364 = vld [vmem:[%s222 + $0x90] sm:$0xff]
        %v365 = vld [vmem:[%s222 + $0x98] sm:$0xff]
        %v366 = vld [vmem:[%s222 + $0xa0] sm:$0xff]
        %v367 = vld [vmem:[%s222 + $0xa8] sm:$0xff]
        %v368 = vld [vmem:[%s222 + $0xb0] sm:$0xff]
        %v369 = vld [vmem:[%s222 + $0xb8] sm:$0xff]
        %v370 = vld [vmem:[%s222 + $0xc0] sm:$0xff]
        %v371 = vld [vmem:[%s222 + $0xc8] sm:$0xff]
        %v372 = vld [vmem:[%s222 + $0xd0] sm:$0xff]
        %v373 = vld [vmem:[%s222 + $0xd8] sm:$0xff]
        %v374 = vld [vmem:[%s222 + $0xe0] sm:$0xff]
        %v375 = vld [vmem:[%s222 + $0xe8] sm:$0xff]
        %v376 = vld [vmem:[%s222 + $0xf0] sm:$0xff]
        %v377 = vld [vmem:[%s222 + $0xf8] sm:$0xff]
        %v378 = vpack.c.bf16 %v347, %v346
        %v379 = vpack.c.bf16 %v349, %v348
        %v380 = vpack.c.bf16 %v351, %v350
        %v381 = vpack.c.bf16 %v353, %v352
        %v382 = vpack.c.bf16 %v355, %v354
        %v383 = vpack.c.bf16 %v357, %v356
        %v384 = vpack.c.bf16 %v359, %v358
        %v385 = vpack.c.bf16 %v361, %v360
        %v386 = vpack.c.bf16 %v363, %v362
        %v387 = vpack.c.bf16 %v365, %v364
        %v388 = vpack.c.bf16 %v367, %v366
        %v389 = vpack.c.bf16 %v369, %v368
        %v390 = vpack.c.bf16 %v371, %v370
        %v391 = vpack.c.bf16 %v373, %v372
        %v392 = vpack.c.bf16 %v375, %v374
        %v393 = vpack.c.bf16 %v377, %v376
        %v410 = vunpack.c.l.b16 %v378
        %v411 = vunpack.c.h.b16 %v378
        %v412 = vunpack.c.l.b16 %v379
        %v413 = vunpack.c.h.b16 %v379
        %v414 = vunpack.c.l.b16 %v380
        %v415 = vunpack.c.h.b16 %v380
        %v416 = vunpack.c.l.b16 %v381
        %v417 = vunpack.c.h.b16 %v381
        %v418 = vunpack.c.l.b16 %v382
        %v419 = vunpack.c.h.b16 %v382
        %v420 = vunpack.c.l.b16 %v383
        %v421 = vunpack.c.h.b16 %v383
        %v422 = vunpack.c.l.b16 %v384
        %v423 = vunpack.c.h.b16 %v384
        %v424 = vunpack.c.l.b16 %v385
        %v425 = vunpack.c.h.b16 %v385
        %v426 = vunpack.c.l.b16 %v386
        %v427 = vunpack.c.h.b16 %v386
        %v428 = vunpack.c.l.b16 %v387
        %v429 = vunpack.c.h.b16 %v387
        %v430 = vunpack.c.l.b16 %v388
        %v431 = vunpack.c.h.b16 %v388
        %v432 = vunpack.c.l.b16 %v389
        %v433 = vunpack.c.h.b16 %v389
        %v434 = vunpack.c.l.b16 %v390
        %v435 = vunpack.c.h.b16 %v390
        %v436 = vunpack.c.l.b16 %v391
        %v437 = vunpack.c.h.b16 %v391
        %v438 = vunpack.c.l.b16 %v392
        %v439 = vunpack.c.h.b16 %v392
        %v440 = vunpack.c.l.b16 %v393
        %v441 = vunpack.c.h.b16 %v393
        %v442 = vpack.c.b16 %v410, %v410
        %v443 = vpack.c.b16 %v411, %v411
        %v444 = vpack.c.b16 %v412, %v412
        %v445 = vpack.c.b16 %v413, %v413
        %v446 = vpack.c.b16 %v414, %v414
        %v447 = vpack.c.b16 %v415, %v415
        %v448 = vpack.c.b16 %v416, %v416
        %v449 = vpack.c.b16 %v417, %v417
        %v450 = vpack.c.b16 %v418, %v418
        %v451 = vpack.c.b16 %v419, %v419
        %v452 = vpack.c.b16 %v420, %v420
        %v453 = vpack.c.b16 %v421, %v421
        %v454 = vpack.c.b16 %v422, %v422
        %v455 = vpack.c.b16 %v423, %v423
        %v456 = vpack.c.b16 %v424, %v424
        %v457 = vpack.c.b16 %v425, %v425
        %v458 = vpack.c.b16 %v426, %v426
        %v459 = vpack.c.b16 %v427, %v427
        %v460 = vpack.c.b16 %v428, %v428
        %v461 = vpack.c.b16 %v429, %v429
        %v462 = vpack.c.b16 %v430, %v430
        %v463 = vpack.c.b16 %v431, %v431
        %v464 = vpack.c.b16 %v432, %v432
        %v465 = vpack.c.b16 %v433, %v433
        %v466 = vpack.c.b16 %v434, %v434
        %v467 = vpack.c.b16 %v435, %v435
        %v468 = vpack.c.b16 %v436, %v436
        %v469 = vpack.c.b16 %v437, %v437
        %v470 = vpack.c.b16 %v438, %v438
        %v471 = vpack.c.b16 %v439, %v439
        %v472 = vpack.c.b16 %v440, %v440
        %v473 = vpack.c.b16 %v441, %v441
        %vm474 = vsmask.f32 4368
        %vm475 = vmor %vm234, %vm474
        %v477 = vshrl.u32 %v442, 16
        %v479 = vrot.slane %v477, 7
        %v480 = vshll.u32 %v442, 16
        %v482 = vor.u32 %v479, %v480
        %v483 = vrot.slane %v479, 4
        %v485 = vshrl.u32 %v443, 16
        %v487 = vrot.slane %v485, 7
        %v488 = vshll.u32 %v443, 16
        %v490 = vor.u32 %v487, %v488
        %v491 = vsel %vm475, %v483, %v490
        %v492 = vrot.slane %v487, 4
        %v494 = vshrl.u32 %v444, 16
        %v496 = vrot.slane %v494, 7
        %v497 = vshll.u32 %v444, 16
        %v499 = vor.u32 %v496, %v497
        %v500 = vrot.slane %v496, 4
        %v502 = vshrl.u32 %v445, 16
        %v504 = vrot.slane %v502, 7
        %v505 = vshll.u32 %v445, 16
        %v507 = vor.u32 %v504, %v505
        %v508 = vsel %vm475, %v500, %v507
        %v509 = vrot.slane %v504, 4
        %v511 = vshrl.u32 %v446, 16
        %v513 = vrot.slane %v511, 7
        %v514 = vshll.u32 %v446, 16
        %v516 = vor.u32 %v513, %v514
        %v517 = vrot.slane %v513, 4
        %v519 = vshrl.u32 %v447, 16
        %v521 = vrot.slane %v519, 7
        %v522 = vshll.u32 %v447, 16
        %v524 = vor.u32 %v521, %v522
        %v525 = vsel %vm475, %v517, %v524
        %v526 = vrot.slane %v521, 4
        %v528 = vshrl.u32 %v448, 16
        %v530 = vrot.slane %v528, 7
        %v531 = vshll.u32 %v448, 16
        %v533 = vor.u32 %v530, %v531
        %v534 = vrot.slane %v530, 4
        %v536 = vshrl.u32 %v449, 16
        %v538 = vrot.slane %v536, 7
        %v539 = vshll.u32 %v449, 16
        %v541 = vor.u32 %v538, %v539
        %v542 = vsel %vm475, %v534, %v541
        %v543 = vrot.slane %v538, 4
        %v545 = vshrl.u32 %v450, 16
        %v547 = vrot.slane %v545, 7
        %v548 = vshll.u32 %v450, 16
        %v550 = vor.u32 %v547, %v548
        %v551 = vrot.slane %v547, 4
        %v553 = vshrl.u32 %v451, 16
        %v555 = vrot.slane %v553, 7
        %v556 = vshll.u32 %v451, 16
        %v558 = vor.u32 %v555, %v556
        %v559 = vsel %vm475, %v551, %v558
        %v560 = vrot.slane %v555, 4
        %v562 = vshrl.u32 %v452, 16
        %v564 = vrot.slane %v562, 7
        %v565 = vshll.u32 %v452, 16
        %v567 = vor.u32 %v564, %v565
        %v568 = vrot.slane %v564, 4
        %v570 = vshrl.u32 %v453, 16
        %v572 = vrot.slane %v570, 7
        %v573 = vshll.u32 %v453, 16
        %v575 = vor.u32 %v572, %v573
        %v576 = vsel %vm475, %v568, %v575
        %v577 = vrot.slane %v572, 4
        %v579 = vshrl.u32 %v454, 16
        %v581 = vrot.slane %v579, 7
        %v582 = vshll.u32 %v454, 16
        %v584 = vor.u32 %v581, %v582
        %v585 = vrot.slane %v581, 4
        %v587 = vshrl.u32 %v455, 16
        %v589 = vrot.slane %v587, 7
        %v590 = vshll.u32 %v455, 16
        %v592 = vor.u32 %v589, %v590
        %v593 = vsel %vm475, %v585, %v592
        %v594 = vrot.slane %v589, 4
        %v596 = vshrl.u32 %v456, 16
        %v598 = vrot.slane %v596, 7
        %v599 = vshll.u32 %v456, 16
        %v601 = vor.u32 %v598, %v599
        %v602 = vrot.slane %v598, 4
        %v604 = vshrl.u32 %v457, 16
        %v606 = vrot.slane %v604, 7
        %v607 = vshll.u32 %v457, 16
        %v609 = vor.u32 %v606, %v607
        %v610 = vsel %vm475, %v602, %v609
        %v611 = vrot.slane %v606, 4
        %v613 = vshrl.u32 %v458, 16
        %v615 = vrot.slane %v613, 7
        %v616 = vshll.u32 %v458, 16
        %v618 = vor.u32 %v615, %v616
        %v619 = vrot.slane %v615, 4
        %v621 = vshrl.u32 %v459, 16
        %v623 = vrot.slane %v621, 7
        %v624 = vshll.u32 %v459, 16
        %v626 = vor.u32 %v623, %v624
        %v627 = vsel %vm475, %v619, %v626
        %v628 = vrot.slane %v623, 4
        %v630 = vshrl.u32 %v460, 16
        %v632 = vrot.slane %v630, 7
        %v633 = vshll.u32 %v460, 16
        %v635 = vor.u32 %v632, %v633
        %v636 = vrot.slane %v632, 4
        %v638 = vshrl.u32 %v461, 16
        %v640 = vrot.slane %v638, 7
        %v641 = vshll.u32 %v461, 16
        %v643 = vor.u32 %v640, %v641
        %v644 = vsel %vm475, %v636, %v643
        %v645 = vrot.slane %v640, 4
        %v647 = vshrl.u32 %v462, 16
        %v649 = vrot.slane %v647, 7
        %v650 = vshll.u32 %v462, 16
        %v652 = vor.u32 %v649, %v650
        %v653 = vrot.slane %v649, 4
        %v655 = vshrl.u32 %v463, 16
        %v657 = vrot.slane %v655, 7
        %v658 = vshll.u32 %v463, 16
        %v660 = vor.u32 %v657, %v658
        %v661 = vsel %vm475, %v653, %v660
        %v662 = vrot.slane %v657, 4
        %v664 = vshrl.u32 %v464, 16
        %v666 = vrot.slane %v664, 7
        %v667 = vshll.u32 %v464, 16
        %v669 = vor.u32 %v666, %v667
        %v670 = vrot.slane %v666, 4
        %v672 = vshrl.u32 %v465, 16
        %v674 = vrot.slane %v672, 7
        %v675 = vshll.u32 %v465, 16
        %v677 = vor.u32 %v674, %v675
        %v678 = vsel %vm475, %v670, %v677
        %v679 = vrot.slane %v674, 4
        %v681 = vshrl.u32 %v466, 16
        %v683 = vrot.slane %v681, 7
        %v684 = vshll.u32 %v466, 16
        %v686 = vor.u32 %v683, %v684
        %v687 = vrot.slane %v683, 4
        %v689 = vshrl.u32 %v467, 16
        %v691 = vrot.slane %v689, 7
        %v692 = vshll.u32 %v467, 16
        %v694 = vor.u32 %v691, %v692
        %v695 = vsel %vm475, %v687, %v694
        %v696 = vrot.slane %v691, 4
        %v698 = vshrl.u32 %v468, 16
        %v700 = vrot.slane %v698, 7
        %v701 = vshll.u32 %v468, 16
        %v703 = vor.u32 %v700, %v701
        %v704 = vrot.slane %v700, 4
        %v706 = vshrl.u32 %v469, 16
        %v708 = vrot.slane %v706, 7
        %v709 = vshll.u32 %v469, 16
        %v711 = vor.u32 %v708, %v709
        %v712 = vsel %vm475, %v704, %v711
        %v713 = vrot.slane %v708, 4
        %v715 = vshrl.u32 %v470, 16
        %v717 = vrot.slane %v715, 7
        %v718 = vshll.u32 %v470, 16
        %v720 = vor.u32 %v717, %v718
        %v721 = vrot.slane %v717, 4
        %v723 = vshrl.u32 %v471, 16
        %v725 = vrot.slane %v723, 7
        %v726 = vshll.u32 %v471, 16
        %v728 = vor.u32 %v725, %v726
        %v729 = vsel %vm475, %v721, %v728
        %v730 = vrot.slane %v725, 4
        %v732 = vshrl.u32 %v472, 16
        %v734 = vrot.slane %v732, 7
        %v735 = vshll.u32 %v472, 16
        %v737 = vor.u32 %v734, %v735
        %v738 = vrot.slane %v734, 4
        %v740 = vshrl.u32 %v473, 16
        %v742 = vrot.slane %v740, 7
        %v743 = vshll.u32 %v473, 16
        %v745 = vor.u32 %v742, %v743
        %v746 = vsel %vm475, %v738, %v745
        %v747 = vrot.slane %v742, 4
        %s796 = scalar_lea.vmem [#allocation2], 12
        %vm797 = vcmask 519168
        %vm798 = vmand %vm797, %vm290
        %v799 = vld [vmem:[%s796] sm:$0xf]
        %v800 = vsel %vm798, %v482, %v799
        %801 = vst [vmem:[%s796] sm:$0xf] %v800
        %802 = vst.msk [vmem:[%s796 + $0x4] sm:$0xf] %vm224, %v491
        %v803 = vld [vmem:[%s796 + $0x8] sm:$0x1]
        %v804 = vsel %vm235, %v492, %v803
        %805 = vst [vmem:[%s796 + $0x8] sm:$0x1] %v804
        %v806 = vld [vmem:[%s796 + $0xc] sm:$0xf]
        %v807 = vsel %vm798, %v499, %v806
        %808 = vst [vmem:[%s796 + $0xc] sm:$0xf] %v807
        %809 = vst.msk [vmem:[%s796 + $0x10] sm:$0xf] %vm224, %v508
        %v810 = vld [vmem:[%s796 + $0x14] sm:$0x1]
        %v811 = vsel %vm235, %v509, %v810
        %812 = vst [vmem:[%s796 + $0x14] sm:$0x1] %v811
        %v813 = vld [vmem:[%s796 + $0x18] sm:$0xf]
        %v814 = vsel %vm798, %v516, %v813
        %815 = vst [vmem:[%s796 + $0x18] sm:$0xf] %v814
        %816 = vst.msk [vmem:[%s796 + $0x1c] sm:$0xf] %vm224, %v525
        %v817 = vld [vmem:[%s796 + $0x20] sm:$0x1]
        %v818 = vsel %vm235, %v526, %v817
        %819 = vst [vmem:[%s796 + $0x20] sm:$0x1] %v818
        %v820 = vld [vmem:[%s796 + $0x24] sm:$0xf]
        %v821 = vsel %vm798, %v533, %v820
        %822 = vst [vmem:[%s796 + $0x24] sm:$0xf] %v821
        %823 = vst.msk [vmem:[%s796 + $0x28] sm:$0xf] %vm224, %v542
        %v824 = vld [vmem:[%s796 + $0x2c] sm:$0x1]
        %v825 = vsel %vm235, %v543, %v824
        %826 = vst [vmem:[%s796 + $0x2c] sm:$0x1] %v825
        %v827 = vld [vmem:[%s796 + $0x30] sm:$0xf]
        %v828 = vsel %vm798, %v550, %v827
        %829 = vst [vmem:[%s796 + $0x30] sm:$0xf] %v828
        %830 = vst.msk [vmem:[%s796 + $0x34] sm:$0xf] %vm224, %v559
        %v831 = vld [vmem:[%s796 + $0x38] sm:$0x1]
        %v832 = vsel %vm235, %v560, %v831
        %833 = vst [vmem:[%s796 + $0x38] sm:$0x1] %v832
        %v834 = vld [vmem:[%s796 + $0x3c] sm:$0xf]
        %v835 = vsel %vm798, %v567, %v834
        %836 = vst [vmem:[%s796 + $0x3c] sm:$0xf] %v835
        %837 = vst.msk [vmem:[%s796 + $0x40] sm:$0xf] %vm224, %v576
        %v838 = vld [vmem:[%s796 + $0x44] sm:$0x1]
        %v839 = vsel %vm235, %v577, %v838
        %840 = vst [vmem:[%s796 + $0x44] sm:$0x1] %v839
        %v841 = vld [vmem:[%s796 + $0x48] sm:$0xf]
        %v842 = vsel %vm798, %v584, %v841
        %843 = vst [vmem:[%s796 + $0x48] sm:$0xf] %v842
        %844 = vst.msk [vmem:[%s796 + $0x4c] sm:$0xf] %vm224, %v593
        %v845 = vld [vmem:[%s796 + $0x50] sm:$0x1]
        %v846 = vsel %vm235, %v594, %v845
        %847 = vst [vmem:[%s796 + $0x50] sm:$0x1] %v846
        %v848 = vld [vmem:[%s796 + $0x54] sm:$0xf]
        %v849 = vsel %vm798, %v601, %v848
        %850 = vst [vmem:[%s796 + $0x54] sm:$0xf] %v849
        %851 = vst.msk [vmem:[%s796 + $0x58] sm:$0xf] %vm224, %v610
        %v852 = vld [vmem:[%s796 + $0x5c] sm:$0x1]
        %v853 = vsel %vm235, %v611, %v852
        %854 = vst [vmem:[%s796 + $0x5c] sm:$0x1] %v853
        %v855 = vld [vmem:[%s796 + $0x60] sm:$0xf]
        %v856 = vsel %vm798, %v618, %v855
        %857 = vst [vmem:[%s796 + $0x60] sm:$0xf] %v856
        %858 = vst.msk [vmem:[%s796 + $0x64] sm:$0xf] %vm224, %v627
        %v859 = vld [vmem:[%s796 + $0x68] sm:$0x1]
        %v860 = vsel %vm235, %v628, %v859
        %861 = vst [vmem:[%s796 + $0x68] sm:$0x1] %v860
        %v862 = vld [vmem:[%s796 + $0x6c] sm:$0xf]
        %v863 = vsel %vm798, %v635, %v862
        %864 = vst [vmem:[%s796 + $0x6c] sm:$0xf] %v863
        %865 = vst.msk [vmem:[%s796 + $0x70] sm:$0xf] %vm224, %v644
        %v866 = vld [vmem:[%s796 + $0x74] sm:$0x1]
        %v867 = vsel %vm235, %v645, %v866
        %868 = vst [vmem:[%s796 + $0x74] sm:$0x1] %v867
        %v869 = vld [vmem:[%s796 + $0x78] sm:$0xf]
        %v870 = vsel %vm798, %v652, %v869
        %871 = vst [vmem:[%s796 + $0x78] sm:$0xf] %v870
        %872 = vst.msk [vmem:[%s796 + $0x7c] sm:$0xf] %vm224, %v661
        %v873 = vld [vmem:[%s796 + $0x80] sm:$0x1]
        %v874 = vsel %vm235, %v662, %v873
        %875 = vst [vmem:[%s796 + $0x80] sm:$0x1] %v874
        %v876 = vld [vmem:[%s796 + $0x84] sm:$0xf]
        %v877 = vsel %vm798, %v669, %v876
        %878 = vst [vmem:[%s796 + $0x84] sm:$0xf] %v877
        %879 = vst.msk [vmem:[%s796 + $0x88] sm:$0xf] %vm224, %v678
        %v880 = vld [vmem:[%s796 + $0x8c] sm:$0x1]
        %v881 = vsel %vm235, %v679, %v880
        %882 = vst [vmem:[%s796 + $0x8c] sm:$0x1] %v881
        %v883 = vld [vmem:[%s796 + $0x90] sm:$0xf]
        %v884 = vsel %vm798, %v686, %v883
        %885 = vst [vmem:[%s796 + $0x90] sm:$0xf] %v884
        %886 = vst.msk [vmem:[%s796 + $0x94] sm:$0xf] %vm224, %v695
        %v887 = vld [vmem:[%s796 + $0x98] sm:$0x1]
        %v888 = vsel %vm235, %v696, %v887
        %889 = vst [vmem:[%s796 + $0x98] sm:$0x1] %v888
        %v890 = vld [vmem:[%s796 + $0x9c] sm:$0xf]
        %v891 = vsel %vm798, %v703, %v890
        %892 = vst [vmem:[%s796 + $0x9c] sm:$0xf] %v891
        %893 = vst.msk [vmem:[%s796 + $0xa0] sm:$0xf] %vm224, %v712
        %v894 = vld [vmem:[%s796 + $0xa4] sm:$0x1]
        %v895 = vsel %vm235, %v713, %v894
        %896 = vst [vmem:[%s796 + $0xa4] sm:$0x1] %v895
        %v897 = vld [vmem:[%s796 + $0xa8] sm:$0xf]
        %v898 = vsel %vm798, %v720, %v897
        %899 = vst [vmem:[%s796 + $0xa8] sm:$0xf] %v898
        %900 = vst.msk [vmem:[%s796 + $0xac] sm:$0xf] %vm224, %v729
        %v901 = vld [vmem:[%s796 + $0xb0] sm:$0x1]
        %v902 = vsel %vm235, %v730, %v901
        %903 = vst [vmem:[%s796 + $0xb0] sm:$0x1] %v902
        %v904 = vld [vmem:[%s796 + $0xb4] sm:$0xf]
        %v905 = vsel %vm798, %v737, %v904
        %906 = vst [vmem:[%s796 + $0xb4] sm:$0xf] %v905
        %907 = vst.msk [vmem:[%s796 + $0xb8] sm:$0xf] %vm224, %v746
        %v908 = vld [vmem:[%s796 + $0xbc] sm:$0x1]
        %v909 = vsel %vm235, %v747, %v908
        %910 = vst [vmem:[%s796 + $0xbc] sm:$0x1] %v909
        %v911 = vld [vmem:[#allocation2] sm:$0xf]
        %v912 = vld [vmem:[#allocation2 + $0x4] sm:$0xf]
        %v913 = vld [vmem:[#allocation2 + $0xc] sm:$0xf]
        %v914 = vld [vmem:[#allocation2 + $0x10] sm:$0xf]
        %v915 = vld [vmem:[#allocation2 + $0x18] sm:$0xf]
        %v916 = vld [vmem:[#allocation2 + $0x1c] sm:$0xf]
        %v917 = vld [vmem:[#allocation2 + $0x24] sm:$0xf]
        %v918 = vld [vmem:[#allocation2 + $0x28] sm:$0xf]
        %v919 = vld [vmem:[#allocation2 + $0x30] sm:$0xf]
        %v920 = vld [vmem:[#allocation2 + $0x34] sm:$0xf]
        %v921 = vld [vmem:[#allocation2 + $0x3c] sm:$0xf]
        %v922 = vld [vmem:[#allocation2 + $0x40] sm:$0xf]
        %v923 = vld [vmem:[#allocation2 + $0x48] sm:$0xf]
        %v924 = vld [vmem:[#allocation2 + $0x4c] sm:$0xf]
        %v925 = vld [vmem:[#allocation2 + $0x54] sm:$0xf]
        %v926 = vld [vmem:[#allocation2 + $0x58] sm:$0xf]
        %v927 = vld [vmem:[#allocation2 + $0x60] sm:$0xf]
        %v928 = vld [vmem:[#allocation2 + $0x64] sm:$0xf]
        %v929 = vld [vmem:[#allocation2 + $0x6c] sm:$0xf]
        %v930 = vld [vmem:[#allocation2 + $0x70] sm:$0xf]
        %v931 = vld [vmem:[#allocation2 + $0x78] sm:$0xf]
        %v932 = vld [vmem:[#allocation2 + $0x7c] sm:$0xf]
        %v933 = vld [vmem:[#allocation2 + $0x84] sm:$0xf]
        %v934 = vld [vmem:[#allocation2 + $0x88] sm:$0xf]
        %v935 = vld [vmem:[#allocation2 + $0x90] sm:$0xf]
        %v936 = vld [vmem:[#allocation2 + $0x94] sm:$0xf]
        %v937 = vld [vmem:[#allocation2 + $0x9c] sm:$0xf]
        %v938 = vld [vmem:[#allocation2 + $0xa0] sm:$0xf]
        %v939 = vld [vmem:[#allocation2 + $0xa8] sm:$0xf]
        %v940 = vld [vmem:[#allocation2 + $0xac] sm:$0xf]
        %v941 = vld [vmem:[#allocation2 + $0xb4] sm:$0xf]
        %v942 = vld [vmem:[#allocation2 + $0xb8] sm:$0xf]
        %v943 = vld [vmem:[#allocation2 + $0x8] sm:$0x1]
        %v944 = vld [vmem:[#allocation2 + $0x14] sm:$0x1]
        %v945 = vld [vmem:[#allocation2 + $0x20] sm:$0x1]
        %v946 = vld [vmem:[#allocation2 + $0x2c] sm:$0x1]
        %v947 = vld [vmem:[#allocation2 + $0x38] sm:$0x1]
        %v948 = vld [vmem:[#allocation2 + $0x44] sm:$0x1]
        %v949 = vld [vmem:[#allocation2 + $0x50] sm:$0x1]
        %v950 = vld [vmem:[#allocation2 + $0x5c] sm:$0x1]
        %v951 = vld [vmem:[#allocation2 + $0x68] sm:$0x1]
        %v952 = vld [vmem:[#allocation2 + $0x74] sm:$0x1]
        %v953 = vld [vmem:[#allocation2 + $0x80] sm:$0x1]
        %v954 = vld [vmem:[#allocation2 + $0x8c] sm:$0x1]
        %v955 = vld [vmem:[#allocation2 + $0x98] sm:$0x1]
        %v956 = vld [vmem:[#allocation2 + $0xa4] sm:$0x1]
        %v957 = vld [vmem:[#allocation2 + $0xb0] sm:$0x1]
        %v958 = vld [vmem:[#allocation2 + $0xbc] sm:$0x1]
        %v959 = vld [vmem:[#allocation2] sm:$0xe]
        %v960 = vld [vmem:[#allocation2 + $0xc] sm:$0xe]
        %v961 = vld [vmem:[#allocation2 + $0x18] sm:$0xe]
        %v962 = vld [vmem:[#allocation2 + $0x24] sm:$0xe]
        %v963 = vld [vmem:[#allocation2 + $0x30] sm:$0xe]
        %v964 = vld [vmem:[#allocation2 + $0x3c] sm:$0xe]
        %v965 = vld [vmem:[#allocation2 + $0x48] sm:$0xe]
        %v966 = vld [vmem:[#allocation2 + $0x54] sm:$0xe]
        %v967 = vld [vmem:[#allocation2 + $0x60] sm:$0xe]
        %v968 = vld [vmem:[#allocation2 + $0x6c] sm:$0xe]
        %v969 = vld [vmem:[#allocation2 + $0x78] sm:$0xe]
        %v970 = vld [vmem:[#allocation2 + $0x84] sm:$0xe]
        %v971 = vld [vmem:[#allocation2 + $0x90] sm:$0xe]
        %v972 = vld [vmem:[#allocation2 + $0x9c] sm:$0xe]
        %v973 = vld [vmem:[#allocation2 + $0xa8] sm:$0xe]
        %v974 = vld [vmem:[#allocation2 + $0xb4] sm:$0xe]
        %v975 = vld [vmem:[%s796] sm:$0xf]
        %v976 = vld [vmem:[%s796 + $0x4] sm:$0xf]
        %v977 = vld [vmem:[%s796 + $0xc] sm:$0xf]
        %v978 = vld [vmem:[%s796 + $0x10] sm:$0xf]
        %v979 = vld [vmem:[%s796 + $0x18] sm:$0xf]
        %v980 = vld [vmem:[%s796 + $0x1c] sm:$0xf]
        %v981 = vld [vmem:[%s796 + $0x24] sm:$0xf]
        %v982 = vld [vmem:[%s796 + $0x28] sm:$0xf]
        %v983 = vld [vmem:[%s796 + $0x30] sm:$0xf]
        %v984 = vld [vmem:[%s796 + $0x34] sm:$0xf]
        %v985 = vld [vmem:[%s796 + $0x3c] sm:$0xf]
        %v986 = vld [vmem:[%s796 + $0x40] sm:$0xf]
        %v987 = vld [vmem:[%s796 + $0x48] sm:$0xf]
        %v988 = vld [vmem:[%s796 + $0x4c] sm:$0xf]
        %v989 = vld [vmem:[%s796 + $0x54] sm:$0xf]
        %v990 = vld [vmem:[%s796 + $0x58] sm:$0xf]
        %v991 = vld [vmem:[%s796 + $0x60] sm:$0xf]
        %v992 = vld [vmem:[%s796 + $0x64] sm:$0xf]
        %v993 = vld [vmem:[%s796 + $0x6c] sm:$0xf]
        %v994 = vld [vmem:[%s796 + $0x70] sm:$0xf]
        %v995 = vld [vmem:[%s796 + $0x78] sm:$0xf]
        %v996 = vld [vmem:[%s796 + $0x7c] sm:$0xf]
        %v997 = vld [vmem:[%s796 + $0x84] sm:$0xf]
        %v998 = vld [vmem:[%s796 + $0x88] sm:$0xf]
        %v999 = vld [vmem:[%s796 + $0x90] sm:$0xf]
        %v1000 = vld [vmem:[%s796 + $0x94] sm:$0xf]
        %v1001 = vld [vmem:[%s796 + $0x9c] sm:$0xf]
        %v1002 = vld [vmem:[%s796 + $0xa0] sm:$0xf]
        %v1003 = vld [vmem:[%s796 + $0xa8] sm:$0xf]
        %v1004 = vld [vmem:[%s796 + $0xac] sm:$0xf]
        %v1005 = vld [vmem:[%s796 + $0xb4] sm:$0xf]
        %v1006 = vld [vmem:[%s796 + $0xb8] sm:$0xf]
        %v1007 = vld [vmem:[%s796 + $0x8] sm:$0x1]
        %v1008 = vld [vmem:[%s796 + $0x14] sm:$0x1]
        %v1009 = vld [vmem:[%s796 + $0x20] sm:$0x1]
        %v1010 = vld [vmem:[%s796 + $0x2c] sm:$0x1]
        %v1011 = vld [vmem:[%s796 + $0x38] sm:$0x1]
        %v1012 = vld [vmem:[%s796 + $0x44] sm:$0x1]
        %v1013 = vld [vmem:[%s796 + $0x50] sm:$0x1]
        %v1014 = vld [vmem:[%s796 + $0x5c] sm:$0x1]
        %v1015 = vld [vmem:[%s796 + $0x68] sm:$0x1]
        %v1016 = vld [vmem:[%s796 + $0x74] sm:$0x1]
        %v1017 = vld [vmem:[%s796 + $0x80] sm:$0x1]
        %v1018 = vld [vmem:[%s796 + $0x8c] sm:$0x1]
        %v1019 = vld [vmem:[%s796 + $0x98] sm:$0x1]
        %v1020 = vld [vmem:[%s796 + $0xa4] sm:$0x1]
        %v1021 = vld [vmem:[%s796 + $0xb0] sm:$0x1]
        %v1022 = vld [vmem:[%s796 + $0xbc] sm:$0x1]
        %v1023 = vld [vmem:[%s796] sm:$0xe]
        %v1024 = vld [vmem:[%s796 + $0xc] sm:$0xe]
        %v1025 = vld [vmem:[%s796 + $0x18] sm:$0xe]
        %v1026 = vld [vmem:[%s796 + $0x24] sm:$0xe]
        %v1027 = vld [vmem:[%s796 + $0x30] sm:$0xe]
        %v1028 = vld [vmem:[%s796 + $0x3c] sm:$0xe]
        %v1029 = vld [vmem:[%s796 + $0x48] sm:$0xe]
        %v1030 = vld [vmem:[%s796 + $0x54] sm:$0xe]
        %v1031 = vld [vmem:[%s796 + $0x60] sm:$0xe]
        %v1032 = vld [vmem:[%s796 + $0x6c] sm:$0xe]
        %v1033 = vld [vmem:[%s796 + $0x78] sm:$0xe]
        %v1034 = vld [vmem:[%s796 + $0x84] sm:$0xe]
        %v1035 = vld [vmem:[%s796 + $0x90] sm:$0xe]
        %v1036 = vld [vmem:[%s796 + $0x9c] sm:$0xe]
        %v1037 = vld [vmem:[%s796 + $0xa8] sm:$0xe]
        %v1038 = vld [vmem:[%s796 + $0xb4] sm:$0xe]
        %s1039 = scalar_lea.vmem [#allocation2], 24
        %v1040 = vld [vmem:[%s1039] sm:$0xf]
        %v1041 = vld [vmem:[%s1039 + $0x4] sm:$0xf]
        %v1042 = vld [vmem:[%s1039 + $0xc] sm:$0xf]
        %v1043 = vld [vmem:[%s1039 + $0x10] sm:$0xf]
        %v1044 = vld [vmem:[%s1039 + $0x18] sm:$0xf]
        %v1045 = vld [vmem:[%s1039 + $0x1c] sm:$0xf]
        %v1046 = vld [vmem:[%s1039 + $0x24] sm:$0xf]
        %v1047 = vld [vmem:[%s1039 + $0x28] sm:$0xf]
        %v1048 = vld [vmem:[%s1039 + $0x30] sm:$0xf]
        %v1049 = vld [vmem:[%s1039 + $0x34] sm:$0xf]
        %v1050 = vld [vmem:[%s1039 + $0x3c] sm:$0xf]
        %v1051 = vld [vmem:[%s1039 + $0x40] sm:$0xf]
        %v1052 = vld [vmem:[%s1039 + $0x48] sm:$0xf]
        %v1053 = vld [vmem:[%s1039 + $0x4c] sm:$0xf]
        %v1054 = vld [vmem:[%s1039 + $0x54] sm:$0xf]
        %v1055 = vld [vmem:[%s1039 + $0x58] sm:$0xf]
        %v1056 = vld [vmem:[%s1039 + $0x60] sm:$0xf]
        %v1057 = vld [vmem:[%s1039 + $0x64] sm:$0xf]
        %v1058 = vld [vmem:[%s1039 + $0x6c] sm:$0xf]
        %v1059 = vld [vmem:[%s1039 + $0x70] sm:$0xf]
        %v1060 = vld [vmem:[%s1039 + $0x78] sm:$0xf]
        %v1061 = vld [vmem:[%s1039 + $0x7c] sm:$0xf]
        %v1062 = vld [vmem:[%s1039 + $0x84] sm:$0xf]
        %v1063 = vld [vmem:[%s1039 + $0x88] sm:$0xf]
        %v1064 = vld [vmem:[%s1039 + $0x90] sm:$0xf]
        %v1065 = vld [vmem:[%s1039 + $0x94] sm:$0xf]
        %v1066 = vld [vmem:[%s1039 + $0x9c] sm:$0xf]
        %v1067 = vld [vmem:[%s1039 + $0xa0] sm:$0xf]
        %v1068 = vld [vmem:[%s1039 + $0xa8] sm:$0xf]
        %v1069 = vld [vmem:[%s1039 + $0xac] sm:$0xf]
        %v1070 = vld [vmem:[%s1039 + $0xb4] sm:$0xf]
        %v1071 = vld [vmem:[%s1039 + $0xb8] sm:$0xf]
        %v1072 = vld [vmem:[%s1039 + $0x8] sm:$0x1]
        %v1073 = vld [vmem:[%s1039 + $0x14] sm:$0x1]
        %v1074 = vld [vmem:[%s1039 + $0x20] sm:$0x1]
        %v1075 = vld [vmem:[%s1039 + $0x2c] sm:$0x1]
        %v1076 = vld [vmem:[%s1039 + $0x38] sm:$0x1]
        %v1077 = vld [vmem:[%s1039 + $0x44] sm:$0x1]
        %v1078 = vld [vmem:[%s1039 + $0x50] sm:$0x1]
        %v1079 = vld [vmem:[%s1039 + $0x5c] sm:$0x1]
        %v1080 = vld [vmem:[%s1039 + $0x68] sm:$0x1]
        %v1081 = vld [vmem:[%s1039 + $0x74] sm:$0x1]
        %v1082 = vld [vmem:[%s1039 + $0x80] sm:$0x1]
        %v1083 = vld [vmem:[%s1039 + $0x8c] sm:$0x1]
        %v1084 = vld [vmem:[%s1039 + $0x98] sm:$0x1]
        %v1085 = vld [vmem:[%s1039 + $0xa4] sm:$0x1]
        %v1086 = vld [vmem:[%s1039 + $0xb0] sm:$0x1]
        %v1087 = vld [vmem:[%s1039 + $0xbc] sm:$0x1]
        %v1088 = vld [vmem:[%s1039] sm:$0xe]
        %v1089 = vld [vmem:[%s1039 + $0xc] sm:$0xe]
        %v1090 = vld [vmem:[%s1039 + $0x18] sm:$0xe]
        %v1091 = vld [vmem:[%s1039 + $0x24] sm:$0xe]
        %v1092 = vld [vmem:[%s1039 + $0x30] sm:$0xe]
        %v1093 = vld [vmem:[%s1039 + $0x3c] sm:$0xe]
        %v1094 = vld [vmem:[%s1039 + $0x48] sm:$0xe]
        %v1095 = vld [vmem:[%s1039 + $0x54] sm:$0xe]
        %v1096 = vld [vmem:[%s1039 + $0x60] sm:$0xe]
        %v1097 = vld [vmem:[%s1039 + $0x6c] sm:$0xe]
        %v1098 = vld [vmem:[%s1039 + $0x78] sm:$0xe]
        %v1099 = vld [vmem:[%s1039 + $0x84] sm:$0xe]
        %v1100 = vld [vmem:[%s1039 + $0x90] sm:$0xe]
        %v1101 = vld [vmem:[%s1039 + $0x9c] sm:$0xe]
        %v1102 = vld [vmem:[%s1039 + $0xa8] sm:$0xe]
        %v1103 = vld [vmem:[%s1039 + $0xb4] sm:$0xe]
        %v1136 = vunpack.c.l.b16 %v911
        %v1137 = vunpack.c.l.b16 %v912
        %v1138 = vunpack.c.l.b16 %v913
        %v1139 = vunpack.c.l.b16 %v914
        %v1140 = vunpack.c.l.b16 %v915
        %v1141 = vunpack.c.l.b16 %v916
        %v1142 = vunpack.c.l.b16 %v917
        %v1143 = vunpack.c.l.b16 %v918
        %v1144 = vunpack.c.l.b16 %v919
        %v1145 = vunpack.c.l.b16 %v920
        %v1146 = vunpack.c.l.b16 %v921
        %v1147 = vunpack.c.l.b16 %v922
        %v1148 = vunpack.c.l.b16 %v923
        %v1149 = vunpack.c.l.b16 %v924
        %v1150 = vunpack.c.l.b16 %v925
        %v1151 = vunpack.c.l.b16 %v926
        %v1152 = vunpack.c.l.b16 %v927
        %v1153 = vunpack.c.l.b16 %v928
        %v1154 = vunpack.c.l.b16 %v929
        %v1155 = vunpack.c.l.b16 %v930
        %v1156 = vunpack.c.l.b16 %v931
        %v1157 = vunpack.c.l.b16 %v932
        %v1158 = vunpack.c.l.b16 %v933
        %v1159 = vunpack.c.l.b16 %v934
        %v1160 = vunpack.c.l.b16 %v935
        %v1161 = vunpack.c.l.b16 %v936
        %v1162 = vunpack.c.l.b16 %v937
        %v1163 = vunpack.c.l.b16 %v938
        %v1164 = vunpack.c.l.b16 %v939
        %v1165 = vunpack.c.l.b16 %v940
        %v1166 = vunpack.c.l.b16 %v941
        %v1167 = vunpack.c.l.b16 %v942
        %v1168 = vpack.c.b16 %v1137, %v1136
        %v1169 = vpack.c.b16 %v1139, %v1138
        %v1170 = vpack.c.b16 %v1141, %v1140
        %v1171 = vpack.c.b16 %v1143, %v1142
        %v1172 = vpack.c.b16 %v1145, %v1144
        %v1173 = vpack.c.b16 %v1147, %v1146
        %v1174 = vpack.c.b16 %v1149, %v1148
        %v1175 = vpack.c.b16 %v1151, %v1150
        %v1176 = vpack.c.b16 %v1153, %v1152
        %v1177 = vpack.c.b16 %v1155, %v1154
        %v1178 = vpack.c.b16 %v1157, %v1156
        %v1179 = vpack.c.b16 %v1159, %v1158
        %v1180 = vpack.c.b16 %v1161, %v1160
        %v1181 = vpack.c.b16 %v1163, %v1162
        %v1182 = vpack.c.b16 %v1165, %v1164
        %v1183 = vpack.c.b16 %v1167, %v1166
        %v1200 = vunpack.c.l.b16 %v943
        %v1201 = vunpack.c.l.b16 %v944
        %v1202 = vunpack.c.l.b16 %v945
        %v1203 = vunpack.c.l.b16 %v946
        %v1204 = vunpack.c.l.b16 %v947
        %v1205 = vunpack.c.l.b16 %v948
        %v1206 = vunpack.c.l.b16 %v949
        %v1207 = vunpack.c.l.b16 %v950
        %v1208 = vunpack.c.l.b16 %v951
        %v1209 = vunpack.c.l.b16 %v952
        %v1210 = vunpack.c.l.b16 %v953
        %v1211 = vunpack.c.l.b16 %v954
        %v1212 = vunpack.c.l.b16 %v955
        %v1213 = vunpack.c.l.b16 %v956
        %v1214 = vunpack.c.l.b16 %v957
        %v1215 = vunpack.c.l.b16 %v958
        %v1216 = vpack.c.b16 %v1200, %v1200
        %v1217 = vpack.c.b16 %v1201, %v1201
        %v1218 = vpack.c.b16 %v1202, %v1202
        %v1219 = vpack.c.b16 %v1203, %v1203
        %v1220 = vpack.c.b16 %v1204, %v1204
        %v1221 = vpack.c.b16 %v1205, %v1205
        %v1222 = vpack.c.b16 %v1206, %v1206
        %v1223 = vpack.c.b16 %v1207, %v1207
        %v1224 = vpack.c.b16 %v1208, %v1208
        %v1225 = vpack.c.b16 %v1209, %v1209
        %v1226 = vpack.c.b16 %v1210, %v1210
        %v1227 = vpack.c.b16 %v1211, %v1211
        %v1228 = vpack.c.b16 %v1212, %v1212
        %v1229 = vpack.c.b16 %v1213, %v1213
        %v1230 = vpack.c.b16 %v1214, %v1214
        %v1231 = vpack.c.b16 %v1215, %v1215
        %vm1232 = vsmask.f32 7424
        %v1234 = vshrl.u32 %v1168, 16
        %v1236 = vshll.u32 %v1168, 16
        %v1238 = vrot.slane %v1236, 1
        %v1239 = vor.u32 %v1234, %v1238
        %v1241 = vshll.u32 %v1216, 16
        %v1243 = vrot.slane %v1241, 1
        %v1244 = vsel %vm1232, %v1239, %v1243
        %v1246 = vshrl.u32 %v1169, 16
        %v1248 = vshll.u32 %v1169, 16
        %v1250 = vrot.slane %v1248, 1
        %v1251 = vor.u32 %v1246, %v1250
        %v1253 = vshll.u32 %v1217, 16
        %v1255 = vrot.slane %v1253, 1
        %v1256 = vsel %vm1232, %v1251, %v1255
        %v1258 = vshrl.u32 %v1170, 16
        %v1260 = vshll.u32 %v1170, 16
        %v1262 = vrot.slane %v1260, 1
        %v1263 = vor.u32 %v1258, %v1262
        %v1265 = vshll.u32 %v1218, 16
        %v1267 = vrot.slane %v1265, 1
        %v1268 = vsel %vm1232, %v1263, %v1267
        %v1270 = vshrl.u32 %v1171, 16
        %v1272 = vshll.u32 %v1171, 16
        %v1274 = vrot.slane %v1272, 1
        %v1275 = vor.u32 %v1270, %v1274
        %v1277 = vshll.u32 %v1219, 16
        %v1279 = vrot.slane %v1277, 1
        %v1280 = vsel %vm1232, %v1275, %v1279
        %v1282 = vshrl.u32 %v1172, 16
        %v1284 = vshll.u32 %v1172, 16
        %v1286 = vrot.slane %v1284, 1
        %v1287 = vor.u32 %v1282, %v1286
        %v1289 = vshll.u32 %v1220, 16
        %v1291 = vrot.slane %v1289, 1
        %v1292 = vsel %vm1232, %v1287, %v1291
        %v1294 = vshrl.u32 %v1173, 16
        %v1296 = vshll.u32 %v1173, 16
        %v1298 = vrot.slane %v1296, 1
        %v1299 = vor.u32 %v1294, %v1298
        %v1301 = vshll.u32 %v1221, 16
        %v1303 = vrot.slane %v1301, 1
        %v1304 = vsel %vm1232, %v1299, %v1303
        %v1306 = vshrl.u32 %v1174, 16
        %v1308 = vshll.u32 %v1174, 16
        %v1310 = vrot.slane %v1308, 1
        %v1311 = vor.u32 %v1306, %v1310
        %v1313 = vshll.u32 %v1222, 16
        %v1315 = vrot.slane %v1313, 1
        %v1316 = vsel %vm1232, %v1311, %v1315
        %v1318 = vshrl.u32 %v1175, 16
        %v1320 = vshll.u32 %v1175, 16
        %v1322 = vrot.slane %v1320, 1
        %v1323 = vor.u32 %v1318, %v1322
        %v1325 = vshll.u32 %v1223, 16
        %v1327 = vrot.slane %v1325, 1
        %v1328 = vsel %vm1232, %v1323, %v1327
        %v1330 = vshrl.u32 %v1176, 16
        %v1332 = vshll.u32 %v1176, 16
        %v1334 = vrot.slane %v1332, 1
        %v1335 = vor.u32 %v1330, %v1334
        %v1337 = vshll.u32 %v1224, 16
        %v1339 = vrot.slane %v1337, 1
        %v1340 = vsel %vm1232, %v1335, %v1339
        %v1342 = vshrl.u32 %v1177, 16
        %v1344 = vshll.u32 %v1177, 16
        %v1346 = vrot.slane %v1344, 1
        %v1347 = vor.u32 %v1342, %v1346
        %v1349 = vshll.u32 %v1225, 16
        %v1351 = vrot.slane %v1349, 1
        %v1352 = vsel %vm1232, %v1347, %v1351
        %v1354 = vshrl.u32 %v1178, 16
        %v1356 = vshll.u32 %v1178, 16
        %v1358 = vrot.slane %v1356, 1
        %v1359 = vor.u32 %v1354, %v1358
        %v1361 = vshll.u32 %v1226, 16
        %v1363 = vrot.slane %v1361, 1
        %v1364 = vsel %vm1232, %v1359, %v1363
        %v1366 = vshrl.u32 %v1179, 16
        %v1368 = vshll.u32 %v1179, 16
        %v1370 = vrot.slane %v1368, 1
        %v1371 = vor.u32 %v1366, %v1370
        %v1373 = vshll.u32 %v1227, 16
        %v1375 = vrot.slane %v1373, 1
        %v1376 = vsel %vm1232, %v1371, %v1375
        %v1378 = vshrl.u32 %v1180, 16
        %v1380 = vshll.u32 %v1180, 16
        %v1382 = vrot.slane %v1380, 1
        %v1383 = vor.u32 %v1378, %v1382
        %v1385 = vshll.u32 %v1228, 16
        %v1387 = vrot.slane %v1385, 1
        %v1388 = vsel %vm1232, %v1383, %v1387
        %v1390 = vshrl.u32 %v1181, 16
        %v1392 = vshll.u32 %v1181, 16
        %v1394 = vrot.slane %v1392, 1
        %v1395 = vor.u32 %v1390, %v1394
        %v1397 = vshll.u32 %v1229, 16
        %v1399 = vrot.slane %v1397, 1
        %v1400 = vsel %vm1232, %v1395, %v1399
        %v1402 = vshrl.u32 %v1182, 16
        %v1404 = vshll.u32 %v1182, 16
        %v1406 = vrot.slane %v1404, 1
        %v1407 = vor.u32 %v1402, %v1406
        %v1409 = vshll.u32 %v1230, 16
        %v1411 = vrot.slane %v1409, 1
        %v1412 = vsel %vm1232, %v1407, %v1411
        %v1414 = vshrl.u32 %v1183, 16
        %v1416 = vshll.u32 %v1183, 16
        %v1418 = vrot.slane %v1416, 1
        %v1419 = vor.u32 %v1414, %v1418
        %v1421 = vshll.u32 %v1231, 16
        %v1423 = vrot.slane %v1421, 1
        %v1424 = vsel %vm1232, %v1419, %v1423
        %1425 = vrot.lane.b32.xlu0 %v1244, 64
        %v1426 = vpop.permute.xlu0 %1425
        %1427 = vrot.lane.b32.xlu0 %v1256, 64
        %v1428 = vpop.permute.xlu0 %1427
        %1429 = vrot.lane.b32.xlu0 %v1268, 64
        %v1430 = vpop.permute.xlu0 %1429
        %1431 = vrot.lane.b32.xlu0 %v1280, 64
        %v1432 = vpop.permute.xlu0 %1431
        %1433 = vrot.lane.b32.xlu0 %v1292, 64
        %v1434 = vpop.permute.xlu0 %1433
        %1435 = vrot.lane.b32.xlu0 %v1304, 64
        %v1436 = vpop.permute.xlu0 %1435
        %1437 = vrot.lane.b32.xlu0 %v1316, 64
        %v1438 = vpop.permute.xlu0 %1437
        %1439 = vrot.lane.b32.xlu0 %v1328, 64
        %v1440 = vpop.permute.xlu0 %1439
        %1441 = vrot.lane.b32.xlu0 %v1340, 64
        %v1442 = vpop.permute.xlu0 %1441
        %1443 = vrot.lane.b32.xlu0 %v1352, 64
        %v1444 = vpop.permute.xlu0 %1443
        %1445 = vrot.lane.b32.xlu0 %v1364, 64
        %v1446 = vpop.permute.xlu0 %1445
        %1447 = vrot.lane.b32.xlu0 %v1376, 64
        %v1448 = vpop.permute.xlu0 %1447
        %1449 = vrot.lane.b32.xlu0 %v1388, 64
        %v1450 = vpop.permute.xlu0 %1449
        %1451 = vrot.lane.b32.xlu0 %v1400, 64
        %v1452 = vpop.permute.xlu0 %1451
        %1453 = vrot.lane.b32.xlu0 %v1412, 64
        %v1454 = vpop.permute.xlu0 %1453
        %1455 = vrot.lane.b32.xlu0 %v1424, 64
        %v1456 = vpop.permute.xlu0 %1455
        %v1473 = vunpack.c.l.b16 %v959
        %v1474 = vunpack.c.l.b16 %v960
        %v1475 = vunpack.c.l.b16 %v961
        %v1476 = vunpack.c.l.b16 %v962
        %v1477 = vunpack.c.l.b16 %v963
        %v1478 = vunpack.c.l.b16 %v964
        %v1479 = vunpack.c.l.b16 %v965
        %v1480 = vunpack.c.l.b16 %v966
        %v1481 = vunpack.c.l.b16 %v967
        %v1482 = vunpack.c.l.b16 %v968
        %v1483 = vunpack.c.l.b16 %v969
        %v1484 = vunpack.c.l.b16 %v970
        %v1485 = vunpack.c.l.b16 %v971
        %v1486 = vunpack.c.l.b16 %v972
        %v1487 = vunpack.c.l.b16 %v973
        %v1488 = vunpack.c.l.b16 %v974
        %v1489 = vpack.c.b16 %v1137, %v1473
        %v1490 = vpack.c.b16 %v1139, %v1474
        %v1491 = vpack.c.b16 %v1141, %v1475
        %v1492 = vpack.c.b16 %v1143, %v1476
        %v1493 = vpack.c.b16 %v1145, %v1477
        %v1494 = vpack.c.b16 %v1147, %v1478
        %v1495 = vpack.c.b16 %v1149, %v1479
        %v1496 = vpack.c.b16 %v1151, %v1480
        %v1497 = vpack.c.b16 %v1153, %v1481
        %v1498 = vpack.c.b16 %v1155, %v1482
        %v1499 = vpack.c.b16 %v1157, %v1483
        %v1500 = vpack.c.b16 %v1159, %v1484
        %v1501 = vpack.c.b16 %v1161, %v1485
        %v1502 = vpack.c.b16 %v1163, %v1486
        %v1503 = vpack.c.b16 %v1165, %v1487
        %v1504 = vpack.c.b16 %v1167, %v1488
        %vm1505 = vcmask 1046528
        %v1506 = vrot.slane %v1489, 1
        %v1507 = vrot.slane %v1216, 1
        %v1508 = vsel %vm1505, %v1506, %v1507
        %v1509 = vrot.slane %v1490, 1
        %v1510 = vrot.slane %v1217, 1
        %v1511 = vsel %vm1505, %v1509, %v1510
        %v1512 = vrot.slane %v1491, 1
        %v1513 = vrot.slane %v1218, 1
        %v1514 = vsel %vm1505, %v1512, %v1513
        %v1515 = vrot.slane %v1492, 1
        %v1516 = vrot.slane %v1219, 1
        %v1517 = vsel %vm1505, %v1515, %v1516
        %v1518 = vrot.slane %v1493, 1
        %v1519 = vrot.slane %v1220, 1
        %v1520 = vsel %vm1505, %v1518, %v1519
        %v1521 = vrot.slane %v1494, 1
        %v1522 = vrot.slane %v1221, 1
        %v1523 = vsel %vm1505, %v1521, %v1522
        %v1524 = vrot.slane %v1495, 1
        %v1525 = vrot.slane %v1222, 1
        %v1526 = vsel %vm1505, %v1524, %v1525
        %v1527 = vrot.slane %v1496, 1
        %v1528 = vrot.slane %v1223, 1
        %v1529 = vsel %vm1505, %v1527, %v1528
        %v1530 = vrot.slane %v1497, 1
        %v1531 = vrot.slane %v1224, 1
        %v1532 = vsel %vm1505, %v1530, %v1531
        %v1533 = vrot.slane %v1498, 1
        %v1534 = vrot.slane %v1225, 1
        %v1535 = vsel %vm1505, %v1533, %v1534
        %v1536 = vrot.slane %v1499, 1
        %v1537 = vrot.slane %v1226, 1
        %v1538 = vsel %vm1505, %v1536, %v1537
        %v1539 = vrot.slane %v1500, 1
        %v1540 = vrot.slane %v1227, 1
        %v1541 = vsel %vm1505, %v1539, %v1540
        %v1542 = vrot.slane %v1501, 1
        %v1543 = vrot.slane %v1228, 1
        %v1544 = vsel %vm1505, %v1542, %v1543
        %v1545 = vrot.slane %v1502, 1
        %v1546 = vrot.slane %v1229, 1
        %v1547 = vsel %vm1505, %v1545, %v1546
        %v1548 = vrot.slane %v1503, 1
        %v1549 = vrot.slane %v1230, 1
        %v1550 = vsel %vm1505, %v1548, %v1549
        %v1551 = vrot.slane %v1504, 1
        %v1552 = vrot.slane %v1231, 1
        %v1553 = vsel %vm1505, %v1551, %v1552
        %v1586 = vunpack.c.l.b16 %v975
        %v1587 = vunpack.c.l.b16 %v976
        %v1588 = vunpack.c.l.b16 %v977
        %v1589 = vunpack.c.l.b16 %v978
        %v1590 = vunpack.c.l.b16 %v979
        %v1591 = vunpack.c.l.b16 %v980
        %v1592 = vunpack.c.l.b16 %v981
        %v1593 = vunpack.c.l.b16 %v982
        %v1594 = vunpack.c.l.b16 %v983
        %v1595 = vunpack.c.l.b16 %v984
        %v1596 = vunpack.c.l.b16 %v985
        %v1597 = vunpack.c.l.b16 %v986
        %v1598 = vunpack.c.l.b16 %v987
        %v1599 = vunpack.c.l.b16 %v988
        %v1600 = vunpack.c.l.b16 %v989
        %v1601 = vunpack.c.l.b16 %v990
        %v1602 = vunpack.c.l.b16 %v991
        %v1603 = vunpack.c.l.b16 %v992
        %v1604 = vunpack.c.l.b16 %v993
        %v1605 = vunpack.c.l.b16 %v994
        %v1606 = vunpack.c.l.b16 %v995
        %v1607 = vunpack.c.l.b16 %v996
        %v1608 = vunpack.c.l.b16 %v997
        %v1609 = vunpack.c.l.b16 %v998
        %v1610 = vunpack.c.l.b16 %v999
        %v1611 = vunpack.c.l.b16 %v1000
        %v1612 = vunpack.c.l.b16 %v1001
        %v1613 = vunpack.c.l.b16 %v1002
        %v1614 = vunpack.c.l.b16 %v1003
        %v1615 = vunpack.c.l.b16 %v1004
        %v1616 = vunpack.c.l.b16 %v1005
        %v1617 = vunpack.c.l.b16 %v1006
        %v1618 = vpack.c.b16 %v1587, %v1586
        %v1619 = vpack.c.b16 %v1589, %v1588
        %v1620 = vpack.c.b16 %v1591, %v1590
        %v1621 = vpack.c.b16 %v1593, %v1592
        %v1622 = vpack.c.b16 %v1595, %v1594
        %v1623 = vpack.c.b16 %v1597, %v1596
        %v1624 = vpack.c.b16 %v1599, %v1598
        %v1625 = vpack.c.b16 %v1601, %v1600
        %v1626 = vpack.c.b16 %v1603, %v1602
        %v1627 = vpack.c.b16 %v1605, %v1604
        %v1628 = vpack.c.b16 %v1607, %v1606
        %v1629 = vpack.c.b16 %v1609, %v1608
        %v1630 = vpack.c.b16 %v1611, %v1610
        %v1631 = vpack.c.b16 %v1613, %v1612
        %v1632 = vpack.c.b16 %v1615, %v1614
        %v1633 = vpack.c.b16 %v1617, %v1616
        %1634 = vrot.lane.b32.xlu0 %v1618, 64
        %v1635 = vpop.permute.xlu0 %1634
        %1636 = vrot.lane.b32.xlu0 %v1619, 64
        %v1637 = vpop.permute.xlu0 %1636
        %1638 = vrot.lane.b32.xlu0 %v1620, 64
        %v1639 = vpop.permute.xlu0 %1638
        %1640 = vrot.lane.b32.xlu0 %v1621, 64
        %v1641 = vpop.permute.xlu0 %1640
        %1642 = vrot.lane.b32.xlu0 %v1622, 64
        %v1643 = vpop.permute.xlu0 %1642
        %1644 = vrot.lane.b32.xlu0 %v1623, 64
        %v1645 = vpop.permute.xlu0 %1644
        %1646 = vrot.lane.b32.xlu0 %v1624, 64
        %v1647 = vpop.permute.xlu0 %1646
        %1648 = vrot.lane.b32.xlu0 %v1625, 64
        %v1649 = vpop.permute.xlu0 %1648
        %1650 = vrot.lane.b32.xlu0 %v1626, 64
        %v1651 = vpop.permute.xlu0 %1650
        %1652 = vrot.lane.b32.xlu0 %v1627, 64
        %v1653 = vpop.permute.xlu0 %1652
        %1654 = vrot.lane.b32.xlu0 %v1628, 64
        %v1655 = vpop.permute.xlu0 %1654
        %1656 = vrot.lane.b32.xlu0 %v1629, 64
        %v1657 = vpop.permute.xlu0 %1656
        %1658 = vrot.lane.b32.xlu0 %v1630, 64
        %v1659 = vpop.permute.xlu0 %1658
        %1660 = vrot.lane.b32.xlu0 %v1631, 64
        %v1661 = vpop.permute.xlu0 %1660
        %1662 = vrot.lane.b32.xlu0 %v1632, 64
        %v1663 = vpop.permute.xlu0 %1662
        %1664 = vrot.lane.b32.xlu0 %v1633, 64
        %v1665 = vpop.permute.xlu0 %1664
        %v1682 = vunpack.c.l.b16 %v1007
        %v1683 = vunpack.c.l.b16 %v1008
        %v1684 = vunpack.c.l.b16 %v1009
        %v1685 = vunpack.c.l.b16 %v1010
        %v1686 = vunpack.c.l.b16 %v1011
        %v1687 = vunpack.c.l.b16 %v1012
        %v1688 = vunpack.c.l.b16 %v1013
        %v1689 = vunpack.c.l.b16 %v1014
        %v1690 = vunpack.c.l.b16 %v1015
        %v1691 = vunpack.c.l.b16 %v1016
        %v1692 = vunpack.c.l.b16 %v1017
        %v1693 = vunpack.c.l.b16 %v1018
        %v1694 = vunpack.c.l.b16 %v1019
        %v1695 = vunpack.c.l.b16 %v1020
        %v1696 = vunpack.c.l.b16 %v1021
        %v1697 = vunpack.c.l.b16 %v1022
        %v1698 = vpack.c.b16 %v1682, %v1682
        %v1699 = vpack.c.b16 %v1683, %v1683
        %v1700 = vpack.c.b16 %v1684, %v1684
        %v1701 = vpack.c.b16 %v1685, %v1685
        %v1702 = vpack.c.b16 %v1686, %v1686
        %v1703 = vpack.c.b16 %v1687, %v1687
        %v1704 = vpack.c.b16 %v1688, %v1688
        %v1705 = vpack.c.b16 %v1689, %v1689
        %v1706 = vpack.c.b16 %v1690, %v1690
        %v1707 = vpack.c.b16 %v1691, %v1691
        %v1708 = vpack.c.b16 %v1692, %v1692
        %v1709 = vpack.c.b16 %v1693, %v1693
        %v1710 = vpack.c.b16 %v1694, %v1694
        %v1711 = vpack.c.b16 %v1695, %v1695
        %v1712 = vpack.c.b16 %v1696, %v1696
        %v1713 = vpack.c.b16 %v1697, %v1697
        %v1715 = vshrl.u32 %v1618, 16
        %v1717 = vshll.u32 %v1618, 16
        %v1719 = vrot.slane %v1717, 1
        %v1720 = vor.u32 %v1715, %v1719
        %v1722 = vshll.u32 %v1698, 16
        %v1724 = vrot.slane %v1722, 1
        %v1725 = vsel %vm1232, %v1720, %v1724
        %v1727 = vshrl.u32 %v1619, 16
        %v1729 = vshll.u32 %v1619, 16
        %v1731 = vrot.slane %v1729, 1
        %v1732 = vor.u32 %v1727, %v1731
        %v1734 = vshll.u32 %v1699, 16
        %v1736 = vrot.slane %v1734, 1
        %v1737 = vsel %vm1232, %v1732, %v1736
        %v1739 = vshrl.u32 %v1620, 16
        %v1741 = vshll.u32 %v1620, 16
        %v1743 = vrot.slane %v1741, 1
        %v1744 = vor.u32 %v1739, %v1743
        %v1746 = vshll.u32 %v1700, 16
        %v1748 = vrot.slane %v1746, 1
        %v1749 = vsel %vm1232, %v1744, %v1748
        %v1751 = vshrl.u32 %v1621, 16
        %v1753 = vshll.u32 %v1621, 16
        %v1755 = vrot.slane %v1753, 1
        %v1756 = vor.u32 %v1751, %v1755
        %v1758 = vshll.u32 %v1701, 16
        %v1760 = vrot.slane %v1758, 1
        %v1761 = vsel %vm1232, %v1756, %v1760
        %v1763 = vshrl.u32 %v1622, 16
        %v1765 = vshll.u32 %v1622, 16
        %v1767 = vrot.slane %v1765, 1
        %v1768 = vor.u32 %v1763, %v1767
        %v1770 = vshll.u32 %v1702, 16
        %v1772 = vrot.slane %v1770, 1
        %v1773 = vsel %vm1232, %v1768, %v1772
        %v1775 = vshrl.u32 %v1623, 16
        %v1777 = vshll.u32 %v1623, 16
        %v1779 = vrot.slane %v1777, 1
        %v1780 = vor.u32 %v1775, %v1779
        %v1782 = vshll.u32 %v1703, 16
        %v1784 = vrot.slane %v1782, 1
        %v1785 = vsel %vm1232, %v1780, %v1784
        %v1787 = vshrl.u32 %v1624, 16
        %v1789 = vshll.u32 %v1624, 16
        %v1791 = vrot.slane %v1789, 1
        %v1792 = vor.u32 %v1787, %v1791
        %v1794 = vshll.u32 %v1704, 16
        %v1796 = vrot.slane %v1794, 1
        %v1797 = vsel %vm1232, %v1792, %v1796
        %v1799 = vshrl.u32 %v1625, 16
        %v1801 = vshll.u32 %v1625, 16
        %v1803 = vrot.slane %v1801, 1
        %v1804 = vor.u32 %v1799, %v1803
        %v1806 = vshll.u32 %v1705, 16
        %v1808 = vrot.slane %v1806, 1
        %v1809 = vsel %vm1232, %v1804, %v1808
        %v1811 = vshrl.u32 %v1626, 16
        %v1813 = vshll.u32 %v1626, 16
        %v1815 = vrot.slane %v1813, 1
        %v1816 = vor.u32 %v1811, %v1815
        %v1818 = vshll.u32 %v1706, 16
        %v1820 = vrot.slane %v1818, 1
        %v1821 = vsel %vm1232, %v1816, %v1820
        %v1823 = vshrl.u32 %v1627, 16
        %v1825 = vshll.u32 %v1627, 16
        %v1827 = vrot.slane %v1825, 1
        %v1828 = vor.u32 %v1823, %v1827
        %v1830 = vshll.u32 %v1707, 16
        %v1832 = vrot.slane %v1830, 1
        %v1833 = vsel %vm1232, %v1828, %v1832
        %v1835 = vshrl.u32 %v1628, 16
        %v1837 = vshll.u32 %v1628, 16
        %v1839 = vrot.slane %v1837, 1
        %v1840 = vor.u32 %v1835, %v1839
        %v1842 = vshll.u32 %v1708, 16
        %v1844 = vrot.slane %v1842, 1
        %v1845 = vsel %vm1232, %v1840, %v1844
        %v1847 = vshrl.u32 %v1629, 16
        %v1849 = vshll.u32 %v1629, 16
        %v1851 = vrot.slane %v1849, 1
        %v1852 = vor.u32 %v1847, %v1851
        %v1854 = vshll.u32 %v1709, 16
        %v1856 = vrot.slane %v1854, 1
        %v1857 = vsel %vm1232, %v1852, %v1856
        %v1859 = vshrl.u32 %v1630, 16
        %v1861 = vshll.u32 %v1630, 16
        %v1863 = vrot.slane %v1861, 1
        %v1864 = vor.u32 %v1859, %v1863
        %v1866 = vshll.u32 %v1710, 16
        %v1868 = vrot.slane %v1866, 1
        %v1869 = vsel %vm1232, %v1864, %v1868
        %v1871 = vshrl.u32 %v1631, 16
        %v1873 = vshll.u32 %v1631, 16
        %v1875 = vrot.slane %v1873, 1
        %v1876 = vor.u32 %v1871, %v1875
        %v1878 = vshll.u32 %v1711, 16
        %v1880 = vrot.slane %v1878, 1
        %v1881 = vsel %vm1232, %v1876, %v1880
        %v1883 = vshrl.u32 %v1632, 16
        %v1885 = vshll.u32 %v1632, 16
        %v1887 = vrot.slane %v1885, 1
        %v1888 = vor.u32 %v1883, %v1887
        %v1890 = vshll.u32 %v1712, 16
        %v1892 = vrot.slane %v1890, 1
        %v1893 = vsel %vm1232, %v1888, %v1892
        %v1895 = vshrl.u32 %v1633, 16
        %v1897 = vshll.u32 %v1633, 16
        %v1899 = vrot.slane %v1897, 1
        %v1900 = vor.u32 %v1895, %v1899
        %v1902 = vshll.u32 %v1713, 16
        %v1904 = vrot.slane %v1902, 1
        %v1905 = vsel %vm1232, %v1900, %v1904
        %v1922 = vunpack.c.l.b16 %v1023
        %v1923 = vunpack.c.l.b16 %v1024
        %v1924 = vunpack.c.l.b16 %v1025
        %v1925 = vunpack.c.l.b16 %v1026
        %v1926 = vunpack.c.l.b16 %v1027
        %v1927 = vunpack.c.l.b16 %v1028
        %v1928 = vunpack.c.l.b16 %v1029
        %v1929 = vunpack.c.l.b16 %v1030
        %v1930 = vunpack.c.l.b16 %v1031
        %v1931 = vunpack.c.l.b16 %v1032
        %v1932 = vunpack.c.l.b16 %v1033
        %v1933 = vunpack.c.l.b16 %v1034
        %v1934 = vunpack.c.l.b16 %v1035
        %v1935 = vunpack.c.l.b16 %v1036
        %v1936 = vunpack.c.l.b16 %v1037
        %v1937 = vunpack.c.l.b16 %v1038
        %v1938 = vpack.c.b16 %v1587, %v1922
        %v1939 = vpack.c.b16 %v1589, %v1923
        %v1940 = vpack.c.b16 %v1591, %v1924
        %v1941 = vpack.c.b16 %v1593, %v1925
        %v1942 = vpack.c.b16 %v1595, %v1926
        %v1943 = vpack.c.b16 %v1597, %v1927
        %v1944 = vpack.c.b16 %v1599, %v1928
        %v1945 = vpack.c.b16 %v1601, %v1929
        %v1946 = vpack.c.b16 %v1603, %v1930
        %v1947 = vpack.c.b16 %v1605, %v1931
        %v1948 = vpack.c.b16 %v1607, %v1932
        %v1949 = vpack.c.b16 %v1609, %v1933
        %v1950 = vpack.c.b16 %v1611, %v1934
        %v1951 = vpack.c.b16 %v1613, %v1935
        %v1952 = vpack.c.b16 %v1615, %v1936
        %v1953 = vpack.c.b16 %v1617, %v1937
        %v1954 = vrot.slane %v1938, 1
        %v1955 = vrot.slane %v1698, 1
        %v1956 = vsel %vm1505, %v1954, %v1955
        %v1957 = vrot.slane %v1939, 1
        %v1958 = vrot.slane %v1699, 1
        %v1959 = vsel %vm1505, %v1957, %v1958
        %v1960 = vrot.slane %v1940, 1
        %v1961 = vrot.slane %v1700, 1
        %v1962 = vsel %vm1505, %v1960, %v1961
        %v1963 = vrot.slane %v1941, 1
        %v1964 = vrot.slane %v1701, 1
        %v1965 = vsel %vm1505, %v1963, %v1964
        %v1966 = vrot.slane %v1942, 1
        %v1967 = vrot.slane %v1702, 1
        %v1968 = vsel %vm1505, %v1966, %v1967
        %v1969 = vrot.slane %v1943, 1
        %v1970 = vrot.slane %v1703, 1
        %v1971 = vsel %vm1505, %v1969, %v1970
        %v1972 = vrot.slane %v1944, 1
        %v1973 = vrot.slane %v1704, 1
        %v1974 = vsel %vm1505, %v1972, %v1973
        %v1975 = vrot.slane %v1945, 1
        %v1976 = vrot.slane %v1705, 1
        %v1977 = vsel %vm1505, %v1975, %v1976
        %v1978 = vrot.slane %v1946, 1
        %v1979 = vrot.slane %v1706, 1
        %v1980 = vsel %vm1505, %v1978, %v1979
        %v1981 = vrot.slane %v1947, 1
        %v1982 = vrot.slane %v1707, 1
        %v1983 = vsel %vm1505, %v1981, %v1982
        %v1984 = vrot.slane %v1948, 1
        %v1985 = vrot.slane %v1708, 1
        %v1986 = vsel %vm1505, %v1984, %v1985
        %v1987 = vrot.slane %v1949, 1
        %v1988 = vrot.slane %v1709, 1
        %v1989 = vsel %vm1505, %v1987, %v1988
        %v1990 = vrot.slane %v1950, 1
        %v1991 = vrot.slane %v1710, 1
        %v1992 = vsel %vm1505, %v1990, %v1991
        %v1993 = vrot.slane %v1951, 1
        %v1994 = vrot.slane %v1711, 1
        %v1995 = vsel %vm1505, %v1993, %v1994
        %v1996 = vrot.slane %v1952, 1
        %v1997 = vrot.slane %v1712, 1
        %v1998 = vsel %vm1505, %v1996, %v1997
        %v1999 = vrot.slane %v1953, 1
        %v2000 = vrot.slane %v1713, 1
        %v2001 = vsel %vm1505, %v1999, %v2000
        %2002 = vrot.lane.b32.xlu0 %v1956, 64
        %v2003 = vpop.permute.xlu0 %2002
        %2004 = vrot.lane.b32.xlu0 %v1959, 64
        %v2005 = vpop.permute.xlu0 %2004
        %2006 = vrot.lane.b32.xlu0 %v1962, 64
        %v2007 = vpop.permute.xlu0 %2006
        %2008 = vrot.lane.b32.xlu0 %v1965, 64
        %v2009 = vpop.permute.xlu0 %2008
        %2010 = vrot.lane.b32.xlu0 %v1968, 64
        %v2011 = vpop.permute.xlu0 %2010
        %2012 = vrot.lane.b32.xlu0 %v1971, 64
        %v2013 = vpop.permute.xlu0 %2012
        %2014 = vrot.lane.b32.xlu0 %v1974, 64
        %v2015 = vpop.permute.xlu0 %2014
        %2016 = vrot.lane.b32.xlu0 %v1977, 64
        %v2017 = vpop.permute.xlu0 %2016
        %2018 = vrot.lane.b32.xlu0 %v1980, 64
        %v2019 = vpop.permute.xlu0 %2018
        %2020 = vrot.lane.b32.xlu0 %v1983, 64
        %v2021 = vpop.permute.xlu0 %2020
        %2022 = vrot.lane.b32.xlu0 %v1986, 64
        %v2023 = vpop.permute.xlu0 %2022
        %2024 = vrot.lane.b32.xlu0 %v1989, 64
        %v2025 = vpop.permute.xlu0 %2024
        %2026 = vrot.lane.b32.xlu0 %v1992, 64
        %v2027 = vpop.permute.xlu0 %2026
        %2028 = vrot.lane.b32.xlu0 %v1995, 64
        %v2029 = vpop.permute.xlu0 %2028
        %2030 = vrot.lane.b32.xlu0 %v1998, 64
        %v2031 = vpop.permute.xlu0 %2030
        %2032 = vrot.lane.b32.xlu0 %v2001, 64
        %v2033 = vpop.permute.xlu0 %2032
        %v2066 = vunpack.c.l.b16 %v1040
        %v2067 = vunpack.c.l.b16 %v1041
        %v2068 = vunpack.c.l.b16 %v1042
        %v2069 = vunpack.c.l.b16 %v1043
        %v2070 = vunpack.c.l.b16 %v1044
        %v2071 = vunpack.c.l.b16 %v1045
        %v2072 = vunpack.c.l.b16 %v1046
        %v2073 = vunpack.c.l.b16 %v1047
        %v2074 = vunpack.c.l.b16 %v1048
        %v2075 = vunpack.c.l.b16 %v1049
        %v2076 = vunpack.c.l.b16 %v1050
        %v2077 = vunpack.c.l.b16 %v1051
        %v2078 = vunpack.c.l.b16 %v1052
        %v2079 = vunpack.c.l.b16 %v1053
        %v2080 = vunpack.c.l.b16 %v1054
        %v2081 = vunpack.c.l.b16 %v1055
        %v2082 = vunpack.c.l.b16 %v1056
        %v2083 = vunpack.c.l.b16 %v1057
        %v2084 = vunpack.c.l.b16 %v1058
        %v2085 = vunpack.c.l.b16 %v1059
        %v2086 = vunpack.c.l.b16 %v1060
        %v2087 = vunpack.c.l.b16 %v1061
        %v2088 = vunpack.c.l.b16 %v1062
        %v2089 = vunpack.c.l.b16 %v1063
        %v2090 = vunpack.c.l.b16 %v1064
        %v2091 = vunpack.c.l.b16 %v1065
        %v2092 = vunpack.c.l.b16 %v1066
        %v2093 = vunpack.c.l.b16 %v1067
        %v2094 = vunpack.c.l.b16 %v1068
        %v2095 = vunpack.c.l.b16 %v1069
        %v2096 = vunpack.c.l.b16 %v1070
        %v2097 = vunpack.c.l.b16 %v1071
        %v2098 = vpack.c.b16 %v2067, %v2066
        %v2099 = vpack.c.b16 %v2069, %v2068
        %v2100 = vpack.c.b16 %v2071, %v2070
        %v2101 = vpack.c.b16 %v2073, %v2072
        %v2102 = vpack.c.b16 %v2075, %v2074
        %v2103 = vpack.c.b16 %v2077, %v2076
        %v2104 = vpack.c.b16 %v2079, %v2078
        %v2105 = vpack.c.b16 %v2081, %v2080
        %v2106 = vpack.c.b16 %v2083, %v2082
        %v2107 = vpack.c.b16 %v2085, %v2084
        %v2108 = vpack.c.b16 %v2087, %v2086
        %v2109 = vpack.c.b16 %v2089, %v2088
        %v2110 = vpack.c.b16 %v2091, %v2090
        %v2111 = vpack.c.b16 %v2093, %v2092
        %v2112 = vpack.c.b16 %v2095, %v2094
        %v2113 = vpack.c.b16 %v2097, %v2096
        %v2130 = vunpack.c.l.b16 %v1072
        %v2131 = vunpack.c.l.b16 %v1073
        %v2132 = vunpack.c.l.b16 %v1074
        %v2133 = vunpack.c.l.b16 %v1075
        %v2134 = vunpack.c.l.b16 %v1076
        %v2135 = vunpack.c.l.b16 %v1077
        %v2136 = vunpack.c.l.b16 %v1078
        %v2137 = vunpack.c.l.b16 %v1079
        %v2138 = vunpack.c.l.b16 %v1080
        %v2139 = vunpack.c.l.b16 %v1081
        %v2140 = vunpack.c.l.b16 %v1082
        %v2141 = vunpack.c.l.b16 %v1083
        %v2142 = vunpack.c.l.b16 %v1084
        %v2143 = vunpack.c.l.b16 %v1085
        %v2144 = vunpack.c.l.b16 %v1086
        %v2145 = vunpack.c.l.b16 %v1087
        %v2146 = vpack.c.b16 %v2130, %v2130
        %v2147 = vpack.c.b16 %v2131, %v2131
        %v2148 = vpack.c.b16 %v2132, %v2132
        %v2149 = vpack.c.b16 %v2133, %v2133
        %v2150 = vpack.c.b16 %v2134, %v2134
        %v2151 = vpack.c.b16 %v2135, %v2135
        %v2152 = vpack.c.b16 %v2136, %v2136
        %v2153 = vpack.c.b16 %v2137, %v2137
        %v2154 = vpack.c.b16 %v2138, %v2138
        %v2155 = vpack.c.b16 %v2139, %v2139
        %v2156 = vpack.c.b16 %v2140, %v2140
        %v2157 = vpack.c.b16 %v2141, %v2141
        %v2158 = vpack.c.b16 %v2142, %v2142
        %v2159 = vpack.c.b16 %v2143, %v2143
        %v2160 = vpack.c.b16 %v2144, %v2144
        %v2161 = vpack.c.b16 %v2145, %v2145
        %v2163 = vshrl.u32 %v2098, 16
        %v2165 = vshll.u32 %v2098, 16
        %v2167 = vrot.slane %v2165, 1
        %v2168 = vor.u32 %v2163, %v2167
        %v2170 = vshll.u32 %v2146, 16
        %v2172 = vrot.slane %v2170, 1
        %v2173 = vsel %vm1232, %v2168, %v2172
        %v2175 = vshrl.u32 %v2099, 16
        %v2177 = vshll.u32 %v2099, 16
        %v2179 = vrot.slane %v2177, 1
        %v2180 = vor.u32 %v2175, %v2179
        %v2182 = vshll.u32 %v2147, 16
        %v2184 = vrot.slane %v2182, 1
        %v2185 = vsel %vm1232, %v2180, %v2184
        %v2187 = vshrl.u32 %v2100, 16
        %v2189 = vshll.u32 %v2100, 16
        %v2191 = vrot.slane %v2189, 1
        %v2192 = vor.u32 %v2187, %v2191
        %v2194 = vshll.u32 %v2148, 16
        %v2196 = vrot.slane %v2194, 1
        %v2197 = vsel %vm1232, %v2192, %v2196
        %v2199 = vshrl.u32 %v2101, 16
        %v2201 = vshll.u32 %v2101, 16
        %v2203 = vrot.slane %v2201, 1
        %v2204 = vor.u32 %v2199, %v2203
        %v2206 = vshll.u32 %v2149, 16
        %v2208 = vrot.slane %v2206, 1
        %v2209 = vsel %vm1232, %v2204, %v2208
        %v2211 = vshrl.u32 %v2102, 16
        %v2213 = vshll.u32 %v2102, 16
        %v2215 = vrot.slane %v2213, 1
        %v2216 = vor.u32 %v2211, %v2215
        %v2218 = vshll.u32 %v2150, 16
        %v2220 = vrot.slane %v2218, 1
        %v2221 = vsel %vm1232, %v2216, %v2220
        %v2223 = vshrl.u32 %v2103, 16
        %v2225 = vshll.u32 %v2103, 16
        %v2227 = vrot.slane %v2225, 1
        %v2228 = vor.u32 %v2223, %v2227
        %v2230 = vshll.u32 %v2151, 16
        %v2232 = vrot.slane %v2230, 1
        %v2233 = vsel %vm1232, %v2228, %v2232
        %v2235 = vshrl.u32 %v2104, 16
        %v2237 = vshll.u32 %v2104, 16
        %v2239 = vrot.slane %v2237, 1
        %v2240 = vor.u32 %v2235, %v2239
        %v2242 = vshll.u32 %v2152, 16
        %v2244 = vrot.slane %v2242, 1
        %v2245 = vsel %vm1232, %v2240, %v2244
        %v2247 = vshrl.u32 %v2105, 16
        %v2249 = vshll.u32 %v2105, 16
        %v2251 = vrot.slane %v2249, 1
        %v2252 = vor.u32 %v2247, %v2251
        %v2254 = vshll.u32 %v2153, 16
        %v2256 = vrot.slane %v2254, 1
        %v2257 = vsel %vm1232, %v2252, %v2256
        %v2259 = vshrl.u32 %v2106, 16
        %v2261 = vshll.u32 %v2106, 16
        %v2263 = vrot.slane %v2261, 1
        %v2264 = vor.u32 %v2259, %v2263
        %v2266 = vshll.u32 %v2154, 16
        %v2268 = vrot.slane %v2266, 1
        %v2269 = vsel %vm1232, %v2264, %v2268
        %v2271 = vshrl.u32 %v2107, 16
        %v2273 = vshll.u32 %v2107, 16
        %v2275 = vrot.slane %v2273, 1
        %v2276 = vor.u32 %v2271, %v2275
        %v2278 = vshll.u32 %v2155, 16
        %v2280 = vrot.slane %v2278, 1
        %v2281 = vsel %vm1232, %v2276, %v2280
        %v2283 = vshrl.u32 %v2108, 16
        %v2285 = vshll.u32 %v2108, 16
        %v2287 = vrot.slane %v2285, 1
        %v2288 = vor.u32 %v2283, %v2287
        %v2290 = vshll.u32 %v2156, 16
        %v2292 = vrot.slane %v2290, 1
        %v2293 = vsel %vm1232, %v2288, %v2292
        %v2295 = vshrl.u32 %v2109, 16
        %v2297 = vshll.u32 %v2109, 16
        %v2299 = vrot.slane %v2297, 1
        %v2300 = vor.u32 %v2295, %v2299
        %v2302 = vshll.u32 %v2157, 16
        %v2304 = vrot.slane %v2302, 1
        %v2305 = vsel %vm1232, %v2300, %v2304
        %v2307 = vshrl.u32 %v2110, 16
        %v2309 = vshll.u32 %v2110, 16
        %v2311 = vrot.slane %v2309, 1
        %v2312 = vor.u32 %v2307, %v2311
        %v2314 = vshll.u32 %v2158, 16
        %v2316 = vrot.slane %v2314, 1
        %v2317 = vsel %vm1232, %v2312, %v2316
        %v2319 = vshrl.u32 %v2111, 16
        %v2321 = vshll.u32 %v2111, 16
        %v2323 = vrot.slane %v2321, 1
        %v2324 = vor.u32 %v2319, %v2323
        %v2326 = vshll.u32 %v2159, 16
        %v2328 = vrot.slane %v2326, 1
        %v2329 = vsel %vm1232, %v2324, %v2328
        %v2331 = vshrl.u32 %v2112, 16
        %v2333 = vshll.u32 %v2112, 16
        %v2335 = vrot.slane %v2333, 1
        %v2336 = vor.u32 %v2331, %v2335
        %v2338 = vshll.u32 %v2160, 16
        %v2340 = vrot.slane %v2338, 1
        %v2341 = vsel %vm1232, %v2336, %v2340
        %v2343 = vshrl.u32 %v2113, 16
        %v2345 = vshll.u32 %v2113, 16
        %v2347 = vrot.slane %v2345, 1
        %v2348 = vor.u32 %v2343, %v2347
        %v2350 = vshll.u32 %v2161, 16
        %v2352 = vrot.slane %v2350, 1
        %v2353 = vsel %vm1232, %v2348, %v2352
        %2354 = vrot.lane.b32.xlu0 %v2173, 64
        %v2355 = vpop.permute.xlu0 %2354
        %2356 = vrot.lane.b32.xlu0 %v2185, 64
        %v2357 = vpop.permute.xlu0 %2356
        %2358 = vrot.lane.b32.xlu0 %v2197, 64
        %v2359 = vpop.permute.xlu0 %2358
        %2360 = vrot.lane.b32.xlu0 %v2209, 64
        %v2361 = vpop.permute.xlu0 %2360
        %2362 = vrot.lane.b32.xlu0 %v2221, 64
        %v2363 = vpop.permute.xlu0 %2362
        %2364 = vrot.lane.b32.xlu0 %v2233, 64
        %v2365 = vpop.permute.xlu0 %2364
        %2366 = vrot.lane.b32.xlu0 %v2245, 64
        %v2367 = vpop.permute.xlu0 %2366
        %2368 = vrot.lane.b32.xlu0 %v2257, 64
        %v2369 = vpop.permute.xlu0 %2368
        %2370 = vrot.lane.b32.xlu0 %v2269, 64
        %v2371 = vpop.permute.xlu0 %2370
        %2372 = vrot.lane.b32.xlu0 %v2281, 64
        %v2373 = vpop.permute.xlu0 %2372
        %2374 = vrot.lane.b32.xlu0 %v2293, 64
        %v2375 = vpop.permute.xlu0 %2374
        %2376 = vrot.lane.b32.xlu0 %v2305, 64
        %v2377 = vpop.permute.xlu0 %2376
        %2378 = vrot.lane.b32.xlu0 %v2317, 64
        %v2379 = vpop.permute.xlu0 %2378
        %2380 = vrot.lane.b32.xlu0 %v2329, 64
        %v2381 = vpop.permute.xlu0 %2380
        %2382 = vrot.lane.b32.xlu0 %v2341, 64
        %v2383 = vpop.permute.xlu0 %2382
        %2384 = vrot.lane.b32.xlu0 %v2353, 64
        %v2385 = vpop.permute.xlu0 %2384
        %v2402 = vunpack.c.l.b16 %v1088
        %v2403 = vunpack.c.l.b16 %v1089
        %v2404 = vunpack.c.l.b16 %v1090
        %v2405 = vunpack.c.l.b16 %v1091
        %v2406 = vunpack.c.l.b16 %v1092
        %v2407 = vunpack.c.l.b16 %v1093
        %v2408 = vunpack.c.l.b16 %v1094
        %v2409 = vunpack.c.l.b16 %v1095
        %v2410 = vunpack.c.l.b16 %v1096
        %v2411 = vunpack.c.l.b16 %v1097
        %v2412 = vunpack.c.l.b16 %v1098
        %v2413 = vunpack.c.l.b16 %v1099
        %v2414 = vunpack.c.l.b16 %v1100
        %v2415 = vunpack.c.l.b16 %v1101
        %v2416 = vunpack.c.l.b16 %v1102
        %v2417 = vunpack.c.l.b16 %v1103
        %v2418 = vpack.c.b16 %v2067, %v2402
        %v2419 = vpack.c.b16 %v2069, %v2403
        %v2420 = vpack.c.b16 %v2071, %v2404
        %v2421 = vpack.c.b16 %v2073, %v2405
        %v2422 = vpack.c.b16 %v2075, %v2406
        %v2423 = vpack.c.b16 %v2077, %v2407
        %v2424 = vpack.c.b16 %v2079, %v2408
        %v2425 = vpack.c.b16 %v2081, %v2409
        %v2426 = vpack.c.b16 %v2083, %v2410
        %v2427 = vpack.c.b16 %v2085, %v2411
        %v2428 = vpack.c.b16 %v2087, %v2412
        %v2429 = vpack.c.b16 %v2089, %v2413
        %v2430 = vpack.c.b16 %v2091, %v2414
        %v2431 = vpack.c.b16 %v2093, %v2415
        %v2432 = vpack.c.b16 %v2095, %v2416
        %v2433 = vpack.c.b16 %v2097, %v2417
        %v2434 = vrot.slane %v2418, 1
        %v2435 = vrot.slane %v2146, 1
        %v2436 = vsel %vm1505, %v2434, %v2435
        %v2437 = vrot.slane %v2419, 1
        %v2438 = vrot.slane %v2147, 1
        %v2439 = vsel %vm1505, %v2437, %v2438
        %v2440 = vrot.slane %v2420, 1
        %v2441 = vrot.slane %v2148, 1
        %v2442 = vsel %vm1505, %v2440, %v2441
        %v2443 = vrot.slane %v2421, 1
        %v2444 = vrot.slane %v2149, 1
        %v2445 = vsel %vm1505, %v2443, %v2444
        %v2446 = vrot.slane %v2422, 1
        %v2447 = vrot.slane %v2150, 1
        %v2448 = vsel %vm1505, %v2446, %v2447
        %v2449 = vrot.slane %v2423, 1
        %v2450 = vrot.slane %v2151, 1
        %v2451 = vsel %vm1505, %v2449, %v2450
        %v2452 = vrot.slane %v2424, 1
        %v2453 = vrot.slane %v2152, 1
        %v2454 = vsel %vm1505, %v2452, %v2453
        %v2455 = vrot.slane %v2425, 1
        %v2456 = vrot.slane %v2153, 1
        %v2457 = vsel %vm1505, %v2455, %v2456
        %v2458 = vrot.slane %v2426, 1
        %v2459 = vrot.slane %v2154, 1
        %v2460 = vsel %vm1505, %v2458, %v2459
        %v2461 = vrot.slane %v2427, 1
        %v2462 = vrot.slane %v2155, 1
        %v2463 = vsel %vm1505, %v2461, %v2462
        %v2464 = vrot.slane %v2428, 1
        %v2465 = vrot.slane %v2156, 1
        %v2466 = vsel %vm1505, %v2464, %v2465
        %v2467 = vrot.slane %v2429, 1
        %v2468 = vrot.slane %v2157, 1
        %v2469 = vsel %vm1505, %v2467, %v2468
        %v2470 = vrot.slane %v2430, 1
        %v2471 = vrot.slane %v2158, 1
        %v2472 = vsel %vm1505, %v2470, %v2471
        %v2473 = vrot.slane %v2431, 1
        %v2474 = vrot.slane %v2159, 1
        %v2475 = vsel %vm1505, %v2473, %v2474
        %v2476 = vrot.slane %v2432, 1
        %v2477 = vrot.slane %v2160, 1
        %v2478 = vsel %vm1505, %v2476, %v2477
        %v2479 = vrot.slane %v2433, 1
        %v2480 = vrot.slane %v2161, 1
        %v2481 = vsel %vm1505, %v2479, %v2480
        %vm2482 = vcmask 523264
        %v2484 = vsel %vm2482, %v1168, %v1426
        %v2487 = vsel %vm2482, %v1169, %v1428
        %v2490 = vsel %vm2482, %v1170, %v1430
        %v2493 = vsel %vm2482, %v1171, %v1432
        %v2496 = vsel %vm2482, %v1172, %v1434
        %v2499 = vsel %vm2482, %v1173, %v1436
        %v2502 = vsel %vm2482, %v1174, %v1438
        %v2505 = vsel %vm2482, %v1175, %v1440
        %v2508 = vsel %vm2482, %v1176, %v1442
        %v2511 = vsel %vm2482, %v1177, %v1444
        %v2514 = vsel %vm2482, %v1178, %v1446
        %v2517 = vsel %vm2482, %v1179, %v1448
        %v2520 = vsel %vm2482, %v1180, %v1450
        %v2523 = vsel %vm2482, %v1181, %v1452
        %v2526 = vsel %vm2482, %v1182, %v1454
        %v2529 = vsel %vm2482, %v1183, %v1456
        %v2533 = vsel %vm2482, %v1508, %v1635
        %v2537 = vsel %vm2482, %v1511, %v1637
        %v2541 = vsel %vm2482, %v1514, %v1639
        %v2545 = vsel %vm2482, %v1517, %v1641
        %v2549 = vsel %vm2482, %v1520, %v1643
        %v2553 = vsel %vm2482, %v1523, %v1645
        %v2557 = vsel %vm2482, %v1526, %v1647
        %v2561 = vsel %vm2482, %v1529, %v1649
        %v2565 = vsel %vm2482, %v1532, %v1651
        %v2569 = vsel %vm2482, %v1535, %v1653
        %v2573 = vsel %vm2482, %v1538, %v1655
        %v2577 = vsel %vm2482, %v1541, %v1657
        %v2581 = vsel %vm2482, %v1544, %v1659
        %v2585 = vsel %vm2482, %v1547, %v1661
        %v2589 = vsel %vm2482, %v1550, %v1663
        %v2593 = vsel %vm2482, %v1553, %v1665
        %v2597 = vsel %vm2482, %v1725, %v2003
        %v2601 = vsel %vm2482, %v1737, %v2005
        %v2605 = vsel %vm2482, %v1749, %v2007
        %v2609 = vsel %vm2482, %v1761, %v2009
        %v2613 = vsel %vm2482, %v1773, %v2011
        %v2617 = vsel %vm2482, %v1785, %v2013
        %v2621 = vsel %vm2482, %v1797, %v2015
        %v2625 = vsel %vm2482, %v1809, %v2017
        %v2629 = vsel %vm2482, %v1821, %v2019
        %v2633 = vsel %vm2482, %v1833, %v2021
        %v2637 = vsel %vm2482, %v1845, %v2023
        %v2641 = vsel %vm2482, %v1857, %v2025
        %v2645 = vsel %vm2482, %v1869, %v2027
        %v2649 = vsel %vm2482, %v1881, %v2029
        %v2653 = vsel %vm2482, %v1893, %v2031
        %v2657 = vsel %vm2482, %v1905, %v2033
        %v2660 = vsel %vm2482, %v2098, %v2355
        %v2663 = vsel %vm2482, %v2099, %v2357
        %v2666 = vsel %vm2482, %v2100, %v2359
        %v2669 = vsel %vm2482, %v2101, %v2361
        %v2672 = vsel %vm2482, %v2102, %v2363
        %v2675 = vsel %vm2482, %v2103, %v2365
        %v2678 = vsel %vm2482, %v2104, %v2367
        %v2681 = vsel %vm2482, %v2105, %v2369
        %v2684 = vsel %vm2482, %v2106, %v2371
        %v2687 = vsel %vm2482, %v2107, %v2373
        %v2690 = vsel %vm2482, %v2108, %v2375
        %v2693 = vsel %vm2482, %v2109, %v2377
        %v2696 = vsel %vm2482, %v2110, %v2379
        %v2699 = vsel %vm2482, %v2111, %v2381
        %v2702 = vsel %vm2482, %v2112, %v2383
        %v2705 = vsel %vm2482, %v2113, %v2385
        %v2707 = vld [vmem:[%s1] sm:$0xf]
        %v2708 = vld [vmem:[%s1 + $0x4] sm:$0xf]
        %v2709 = vld [vmem:[%s1 + $0x8] sm:$0xf]
        %v2710 = vld [vmem:[%s1 + $0xc] sm:$0xf]
        %v2711 = vld [vmem:[%s1 + $0x10] sm:$0xf]
        %v2712 = vld [vmem:[%s1 + $0x14] sm:$0xf]
        %v2713 = vld [vmem:[%s1 + $0x18] sm:$0xf]
        %v2714 = vld [vmem:[%s1 + $0x1c] sm:$0xf]
        %v2715 = vld [vmem:[%s1 + $0x20] sm:$0xf]
        %v2716 = vld [vmem:[%s1 + $0x24] sm:$0xf]
        %v2717 = vld [vmem:[%s1 + $0x28] sm:$0xf]
        %v2718 = vld [vmem:[%s1 + $0x2c] sm:$0xf]
        %v2719 = vld [vmem:[%s1 + $0x30] sm:$0xf]
        %v2720 = vld [vmem:[%s1 + $0x34] sm:$0xf]
        %v2721 = vld [vmem:[%s1 + $0x38] sm:$0xf]
        %v2722 = vld [vmem:[%s1 + $0x3c] sm:$0xf]
        %v2723 = vld [vmem:[%s1 + $0x40] sm:$0xf]
        %v2724 = vld [vmem:[%s1 + $0x44] sm:$0xf]
        %v2725 = vld [vmem:[%s1 + $0x48] sm:$0xf]
        %v2726 = vld [vmem:[%s1 + $0x4c] sm:$0xf]
        %v2727 = vld [vmem:[%s1 + $0x50] sm:$0xf]
        %v2728 = vld [vmem:[%s1 + $0x54] sm:$0xf]
        %v2729 = vld [vmem:[%s1 + $0x58] sm:$0xf]
        %v2730 = vld [vmem:[%s1 + $0x5c] sm:$0xf]
        %v2731 = vld [vmem:[%s1 + $0x60] sm:$0xf]
        %v2732 = vld [vmem:[%s1 + $0x64] sm:$0xf]
        %v2733 = vld [vmem:[%s1 + $0x68] sm:$0xf]
        %v2734 = vld [vmem:[%s1 + $0x6c] sm:$0xf]
        %v2735 = vld [vmem:[%s1 + $0x70] sm:$0xf]
        %v2736 = vld [vmem:[%s1 + $0x74] sm:$0xf]
        %v2737 = vld [vmem:[%s1 + $0x78] sm:$0xf]
        %v2738 = vld [vmem:[%s1 + $0x7c] sm:$0xf]
        %v2739 = vld [vmem:[%s1 + $0x80] sm:$0xf]
        %v2740 = vld [vmem:[%s1 + $0x84] sm:$0xf]
        %v2741 = vld [vmem:[%s1 + $0x88] sm:$0xf]
        %v2742 = vld [vmem:[%s1 + $0x8c] sm:$0xf]
        %v2743 = vld [vmem:[%s1 + $0x90] sm:$0xf]
        %v2744 = vld [vmem:[%s1 + $0x94] sm:$0xf]
        %v2745 = vld [vmem:[%s1 + $0x98] sm:$0xf]
        %v2746 = vld [vmem:[%s1 + $0x9c] sm:$0xf]
        %v2747 = vld [vmem:[%s1 + $0xa0] sm:$0xf]
        %v2748 = vld [vmem:[%s1 + $0xa4] sm:$0xf]
        %v2749 = vld [vmem:[%s1 + $0xa8] sm:$0xf]
        %v2750 = vld [vmem:[%s1 + $0xac] sm:$0xf]
        %v2751 = vld [vmem:[%s1 + $0xb0] sm:$0xf]
        %v2752 = vld [vmem:[%s1 + $0xb4] sm:$0xf]
        %v2753 = vld [vmem:[%s1 + $0xb8] sm:$0xf]
        %v2754 = vld [vmem:[%s1 + $0xbc] sm:$0xf]
        %v2755 = vld [vmem:[%s1 + $0xc0] sm:$0xf]
        %v2756 = vld [vmem:[%s1 + $0xc4] sm:$0xf]
        %v2757 = vld [vmem:[%s1 + $0xc8] sm:$0xf]
        %v2758 = vld [vmem:[%s1 + $0xcc] sm:$0xf]
        %v2759 = vld [vmem:[%s1 + $0xd0] sm:$0xf]
        %v2760 = vld [vmem:[%s1 + $0xd4] sm:$0xf]
        %v2761 = vld [vmem:[%s1 + $0xd8] sm:$0xf]
        %v2762 = vld [vmem:[%s1 + $0xdc] sm:$0xf]
        %v2763 = vld [vmem:[%s1 + $0xe0] sm:$0xf]
        %v2764 = vld [vmem:[%s1 + $0xe4] sm:$0xf]
        %v2765 = vld [vmem:[%s1 + $0xe8] sm:$0xf]
        %v2766 = vld [vmem:[%s1 + $0xec] sm:$0xf]
        %v2767 = vld [vmem:[%s1 + $0xf0] sm:$0xf]
        %v2768 = vld [vmem:[%s1 + $0xf4] sm:$0xf]
        %v2769 = vld [vmem:[%s1 + $0xf8] sm:$0xf]
        %v2770 = vld [vmem:[%s1 + $0xfc] sm:$0xf]
        %v2771 = vld [vmem:[%s1 + $0x100] sm:$0xf]
        %v2772 = vld [vmem:[%s1 + $0x104] sm:$0xf]
        %v2773 = vld [vmem:[%s1 + $0x108] sm:$0xf]
        %v2774 = vld [vmem:[%s1 + $0x10c] sm:$0xf]
        %v2775 = vld [vmem:[%s1 + $0x110] sm:$0xf]
        %v2776 = vld [vmem:[%s1 + $0x114] sm:$0xf]
        %v2777 = vld [vmem:[%s1 + $0x118] sm:$0xf]
        %v2778 = vld [vmem:[%s1 + $0x11c] sm:$0xf]
        %v2779 = vld [vmem:[%s2] sm:$0x1]
        %v2781 = vlaneseq
        %v2782 = vshrl.u32 %v2781, 7
        %v2783 = vsub.s32 0, %v2782
        %v2784 = vrot.slane %v2779, %v2783
        %v2858 = vunpack.c.l.b16 %v2707
        %v2859 = vunpack.c.l.b16 %v2708
        %v2860 = vunpack.c.l.b16 %v2709
        %v2861 = vunpack.c.l.b16 %v2710
        %v2862 = vunpack.c.l.b16 %v2711
        %v2863 = vunpack.c.l.b16 %v2712
        %v2864 = vunpack.c.l.b16 %v2713
        %v2865 = vunpack.c.l.b16 %v2714
        %v2866 = vunpack.c.l.b16 %v2715
        %v2867 = vunpack.c.l.b16 %v2716
        %v2868 = vunpack.c.l.b16 %v2717
        %v2869 = vunpack.c.l.b16 %v2718
        %v2870 = vunpack.c.l.b16 %v2719
        %v2871 = vunpack.c.l.b16 %v2720
        %v2872 = vunpack.c.l.b16 %v2721
        %v2873 = vunpack.c.l.b16 %v2722
        %v2874 = vunpack.c.l.b16 %v2723
        %v2875 = vunpack.c.l.b16 %v2724
        %v2876 = vunpack.c.l.b16 %v2725
        %v2877 = vunpack.c.l.b16 %v2726
        %v2878 = vunpack.c.l.b16 %v2727
        %v2879 = vunpack.c.l.b16 %v2728
        %v2880 = vunpack.c.l.b16 %v2729
        %v2881 = vunpack.c.l.b16 %v2730
        %v2882 = vunpack.c.l.b16 %v2731
        %v2883 = vunpack.c.l.b16 %v2732
        %v2884 = vunpack.c.l.b16 %v2733
        %v2885 = vunpack.c.l.b16 %v2734
        %v2886 = vunpack.c.l.b16 %v2735
        %v2887 = vunpack.c.l.b16 %v2736
        %v2888 = vunpack.c.l.b16 %v2737
        %v2889 = vunpack.c.l.b16 %v2738
        %v2890 = vunpack.c.l.b16 %v2739
        %v2891 = vunpack.c.l.b16 %v2740
        %v2892 = vunpack.c.l.b16 %v2741
        %v2893 = vunpack.c.l.b16 %v2742
        %v2894 = vunpack.c.l.b16 %v2743
        %v2895 = vunpack.c.l.b16 %v2744
        %v2896 = vunpack.c.l.b16 %v2745
        %v2897 = vunpack.c.l.b16 %v2746
        %v2898 = vunpack.c.l.b16 %v2747
        %v2899 = vunpack.c.l.b16 %v2748
        %v2900 = vunpack.c.l.b16 %v2749
        %v2901 = vunpack.c.l.b16 %v2750
        %v2902 = vunpack.c.l.b16 %v2751
        %v2903 = vunpack.c.l.b16 %v2752
        %v2904 = vunpack.c.l.b16 %v2753
        %v2905 = vunpack.c.l.b16 %v2754
        %v2906 = vunpack.c.l.b16 %v2755
        %v2907 = vunpack.c.l.b16 %v2756
        %v2908 = vunpack.c.l.b16 %v2757
        %v2909 = vunpack.c.l.b16 %v2758
        %v2910 = vunpack.c.l.b16 %v2759
        %v2911 = vunpack.c.l.b16 %v2760
        %v2912 = vunpack.c.l.b16 %v2761
        %v2913 = vunpack.c.l.b16 %v2762
        %v2914 = vunpack.c.l.b16 %v2763
        %v2915 = vunpack.c.l.b16 %v2764
        %v2916 = vunpack.c.l.b16 %v2765
        %v2917 = vunpack.c.l.b16 %v2766
        %v2918 = vunpack.c.l.b16 %v2767
        %v2919 = vunpack.c.l.b16 %v2768
        %v2920 = vunpack.c.l.b16 %v2769
        %v2921 = vunpack.c.l.b16 %v2770
        %v2922 = vunpack.c.l.b16 %v2771
        %v2923 = vunpack.c.l.b16 %v2772
        %v2924 = vunpack.c.l.b16 %v2773
        %v2925 = vunpack.c.l.b16 %v2774
        %v2926 = vunpack.c.l.b16 %v2775
        %v2927 = vunpack.c.l.b16 %v2776
        %v2928 = vunpack.c.l.b16 %v2777
        %v2929 = vunpack.c.l.b16 %v2778
        %v2930 = vpack.c.b16 %v2859, %v2858
        %v2931 = vpack.c.b16 %v2861, %v2860
        %v2932 = vpack.c.b16 %v2863, %v2862
        %v2933 = vpack.c.b16 %v2865, %v2864
        %v2934 = vpack.c.b16 %v2867, %v2866
        %v2935 = vpack.c.b16 %v2869, %v2868
        %v2936 = vpack.c.b16 %v2871, %v2870
        %v2937 = vpack.c.b16 %v2873, %v2872
        %v2938 = vpack.c.b16 %v2875, %v2874
        %v2939 = vpack.c.b16 %v2877, %v2876
        %v2940 = vpack.c.b16 %v2879, %v2878
        %v2941 = vpack.c.b16 %v2881, %v2880
        %v2942 = vpack.c.b16 %v2883, %v2882
        %v2943 = vpack.c.b16 %v2885, %v2884
        %v2944 = vpack.c.b16 %v2887, %v2886
        %v2945 = vpack.c.b16 %v2889, %v2888
        %v2946 = vpack.c.b16 %v2891, %v2890
        %v2947 = vpack.c.b16 %v2893, %v2892
        %v2948 = vpack.c.b16 %v2895, %v2894
        %v2949 = vpack.c.b16 %v2897, %v2896
        %v2950 = vpack.c.b16 %v2899, %v2898
        %v2951 = vpack.c.b16 %v2901, %v2900
        %v2952 = vpack.c.b16 %v2903, %v2902
        %v2953 = vpack.c.b16 %v2905, %v2904
        %v2954 = vpack.c.b16 %v2907, %v2906
        %v2955 = vpack.c.b16 %v2909, %v2908
        %v2956 = vpack.c.b16 %v2911, %v2910
        %v2957 = vpack.c.b16 %v2913, %v2912
        %v2958 = vpack.c.b16 %v2915, %v2914
        %v2959 = vpack.c.b16 %v2917, %v2916
        %v2960 = vpack.c.b16 %v2919, %v2918
        %v2961 = vpack.c.b16 %v2921, %v2920
        %v2962 = vpack.c.b16 %v2923, %v2922
        %v2963 = vpack.c.b16 %v2925, %v2924
        %v2964 = vpack.c.b16 %v2927, %v2926
        %v2965 = vpack.c.b16 %v2929, %v2928
        %v3003 = vsel %vm2482, %v2436, 0
        %v3006 = vsel %vm2482, %v2439, 0
        %v3009 = vsel %vm2482, %v2442, 0
        %v3012 = vsel %vm2482, %v2445, 0
        %v3015 = vsel %vm2482, %v2448, 0
        %v3018 = vsel %vm2482, %v2451, 0
        %v3021 = vsel %vm2482, %v2454, 0
        %v3024 = vsel %vm2482, %v2457, 0
        %v3027 = vsel %vm2482, %v2460, 0
        %v3030 = vsel %vm2482, %v2463, 0
        %v3033 = vsel %vm2482, %v2466, 0
        %v3036 = vsel %vm2482, %v2469, 0
        %v3039 = vsel %vm2482, %v2472, 0
        %v3042 = vsel %vm2482, %v2475, 0
        %v3045 = vsel %vm2482, %v2478, 0
        %v3048 = vsel %vm2482, %v2481, 0
        %3050 = vmatprep.subr.bf16.mxu0 0
        %3051 = vmatpush1.bf16.msra.mxu0 %v2930
        %3052 = vmatprep.subr.bf16.mxu0 0
        %3053 = vmatpush1.bf16.msra.mxu0 %v2931
        %3054 = vmatprep.subr.bf16.mxu0 0
        %3055 = vmatpush1.bf16.msra.mxu0 %v2932
        %3056 = vmatprep.subr.bf16.mxu0 0
        %3057 = vmatpush1.bf16.msra.mxu0 %v2933
        %3058 = vmatprep.subr.bf16.mxu0 0
        %3059 = vmatpush1.bf16.msra.mxu0 %v2934
        %3060 = vmatprep.subr.bf16.mxu0 0
        %3061 = vmatpush1.bf16.msra.mxu0 %v2935
        %3062 = vmatprep.subr.bf16.mxu0 0
        %3063 = vmatpush1.bf16.msra.mxu0 %v2936
        %3064 = vmatprep.subr.bf16.mxu0 0
        %3065 = vmatpush1.bf16.msra.mxu0 %v2937
        %3066 = vmatprep.subr.bf16.mxu0 0
        %3067 = vmatpush1.bf16.msra.mxu0 %v2938
        %3068 = vmatprep.subr.bf16.mxu0 0
        %3069 = vmatpush1.bf16.msra.mxu0 %v2939
        %3070 = vmatprep.subr.bf16.mxu0 0
        %3071 = vmatpush1.bf16.msra.mxu0 %v2940
        %3072 = vmatprep.subr.bf16.mxu0 0
        %3073 = vmatpush1.bf16.msra.mxu0 %v2941
        %3074 = vmatprep.subr.bf16.mxu0 0
        %3075 = vmatpush1.bf16.msra.mxu0 %v2942
        %3076 = vmatprep.subr.bf16.mxu0 0
        %3077 = vmatpush1.bf16.msra.mxu0 %v2943
        %3078 = vmatprep.subr.bf16.mxu0 0
        %3079 = vmatpush1.bf16.msra.mxu0 %v2944
        %3080 = vmatprep.subr.bf16.mxu0 0
        %3081 = vmatpush1.bf16.msra.mxu0 %v2945
        %3082 = vmatprep.mubr.bf16.mxu0 %v2533
        %3083 = vmatmul.mubr.bf16.gmra.mrb[0].mxu0 %v2484
        %v3084 = vpop.f32.mrb[0].mxu0
        %v3085 = vadd.f32 %v2784, %v3084
        %v3086 = vpop.f32.mrb[0].mxu0
        %v3087 = vpop.f32.mrb[0].mxu0
        %v3088 = vadd.f32 %v2784, %v3087
        %v3089 = vpop.f32.mrb[0].mxu0
        %3090 = vmatprep.mubr.bf16.mxu0 %v2537
        %3091 = vmatmul.mubr.bf16.gmra.mrb[0].mxu0 %v2487
        %v3092 = vpop.f32.mrb[0].mxu0
        %v3093 = vadd.f32 %v2784, %v3092
        %v3094 = vpop.f32.mrb[0].mxu0
        %v3095 = vpop.f32.mrb[0].mxu0
        %v3096 = vadd.f32 %v2784, %v3095
        %v3097 = vpop.f32.mrb[0].mxu0
        %3098 = vmatprep.mubr.bf16.mxu0 %v2541
        %3099 = vmatmul.mubr.bf16.gmra.mrb[0].mxu0 %v2490
        %v3100 = vpop.f32.mrb[0].mxu0
        %v3101 = vadd.f32 %v2784, %v3100
        %v3102 = vpop.f32.mrb[0].mxu0
        %v3103 = vpop.f32.mrb[0].mxu0
        %v3104 = vadd.f32 %v2784, %v3103
        %v3105 = vpop.f32.mrb[0].mxu0
        %3106 = vmatprep.mubr.bf16.mxu0 %v2545
        %3107 = vmatmul.mubr.bf16.gmra.mrb[0].mxu0 %v2493
        %v3108 = vpop.f32.mrb[0].mxu0
        %v3109 = vadd.f32 %v2784, %v3108
        %v3110 = vpop.f32.mrb[0].mxu0
        %v3111 = vpop.f32.mrb[0].mxu0
        %v3112 = vadd.f32 %v2784, %v3111
        %v3113 = vpop.f32.mrb[0].mxu0
        %3114 = vmatprep.mubr.bf16.mxu0 %v2549
        %3115 = vmatmul.mubr.bf16.gmra.mrb[0].mxu0 %v2496
        %v3116 = vpop.f32.mrb[0].mxu0
        %v3117 = vadd.f32 %v2784, %v3116
        %v3118 = vpop.f32.mrb[0].mxu0
        %v3119 = vpop.f32.mrb[0].mxu0
        %v3120 = vadd.f32 %v2784, %v3119
        %v3121 = vpop.f32.mrb[0].mxu0
        %3122 = vmatprep.mubr.bf16.mxu0 %v2553
        %3123 = vmatmul.mubr.bf16.gmra.mrb[0].mxu0 %v2499
        %v3124 = vpop.f32.mrb[0].mxu0
        %v3125 = vadd.f32 %v2784, %v3124
        %v3126 = vpop.f32.mrb[0].mxu0
        %v3127 = vpop.f32.mrb[0].mxu0
        %v3128 = vadd.f32 %v2784, %v3127
        %v3129 = vpop.f32.mrb[0].mxu0
        %3130 = vmatprep.mubr.bf16.mxu0 %v2557
        %3131 = vmatmul.mubr.bf16.gmra.mrb[0].mxu0 %v2502
        %v3132 = vpop.f32.mrb[0].mxu0
        %v3133 = vadd.f32 %v2784, %v3132
        %v3134 = vpop.f32.mrb[0].mxu0
        %v3135 = vpop.f32.mrb[0].mxu0
        %v3136 = vadd.f32 %v2784, %v3135
        %v3137 = vpop.f32.mrb[0].mxu0
        %3138 = vmatprep.mubr.bf16.mxu0 %v2561
        %3139 = vmatmul.mubr.bf16.gmra.mrb[0].mxu0 %v2505
        %v3140 = vpop.f32.mrb[0].mxu0
        %v3141 = vadd.f32 %v2784, %v3140
        %v3142 = vpop.f32.mrb[0].mxu0
        %v3143 = vpop.f32.mrb[0].mxu0
        %v3144 = vadd.f32 %v2784, %v3143
        %v3145 = vpop.f32.mrb[0].mxu0
        %3146 = vmatprep.mubr.bf16.mxu0 %v2565
        %3147 = vmatmul.mubr.bf16.gmra.mrb[0].mxu0 %v2508
        %v3148 = vpop.f32.mrb[0].mxu0
        %v3149 = vadd.f32 %v2784, %v3148
        %v3150 = vpop.f32.mrb[0].mxu0
        %v3151 = vpop.f32.mrb[0].mxu0
        %v3152 = vadd.f32 %v2784, %v3151
        %v3153 = vpop.f32.mrb[0].mxu0
        %3154 = vmatprep.mubr.bf16.mxu0 %v2569
        %3155 = vmatmul.mubr.bf16.gmra.mrb[0].mxu0 %v2511
        %v3156 = vpop.f32.mrb[0].mxu0
        %v3157 = vadd.f32 %v2784, %v3156
        %v3158 = vpop.f32.mrb[0].mxu0
        %v3159 = vpop.f32.mrb[0].mxu0
        %v3160 = vadd.f32 %v2784, %v3159
        %v3161 = vpop.f32.mrb[0].mxu0
        %3162 = vmatprep.mubr.bf16.mxu0 %v2573
        %3163 = vmatmul.mubr.bf16.gmra.mrb[0].mxu0 %v2514
        %v3164 = vpop.f32.mrb[0].mxu0
        %v3165 = vadd.f32 %v2784, %v3164
        %v3166 = vpop.f32.mrb[0].mxu0
        %v3167 = vpop.f32.mrb[0].mxu0
        %v3168 = vadd.f32 %v2784, %v3167
        %v3169 = vpop.f32.mrb[0].mxu0
        %3170 = vmatprep.mubr.bf16.mxu0 %v2577
        %3171 = vmatmul.mubr.bf16.gmra.mrb[0].mxu0 %v2517
        %v3172 = vpop.f32.mrb[0].mxu0
        %v3173 = vadd.f32 %v2784, %v3172
        %v3174 = vpop.f32.mrb[0].mxu0
        %v3175 = vpop.f32.mrb[0].mxu0
        %v3176 = vadd.f32 %v2784, %v3175
        %v3177 = vpop.f32.mrb[0].mxu0
        %3178 = vmatprep.mubr.bf16.mxu0 %v2581
        %3179 = vmatmul.mubr.bf16.gmra.mrb[0].mxu0 %v2520
        %v3180 = vpop.f32.mrb[0].mxu0
        %v3181 = vadd.f32 %v2784, %v3180
        %v3182 = vpop.f32.mrb[0].mxu0
        %v3183 = vpop.f32.mrb[0].mxu0
        %v3184 = vadd.f32 %v2784, %v3183
        %v3185 = vpop.f32.mrb[0].mxu0
        %3186 = vmatprep.mubr.bf16.mxu0 %v2585
        %3187 = vmatmul.mubr.bf16.gmra.mrb[0].mxu0 %v2523
        %v3188 = vpop.f32.mrb[0].mxu0
        %v3189 = vadd.f32 %v2784, %v3188
        %v3190 = vpop.f32.mrb[0].mxu0
        %v3191 = vpop.f32.mrb[0].mxu0
        %v3192 = vadd.f32 %v2784, %v3191
        %v3193 = vpop.f32.mrb[0].mxu0
        %3194 = vmatprep.mubr.bf16.mxu0 %v2589
        %3195 = vmatmul.mubr.bf16.gmra.mrb[0].mxu0 %v2526
        %v3196 = vpop.f32.mrb[0].mxu0
        %v3197 = vadd.f32 %v2784, %v3196
        %v3198 = vpop.f32.mrb[0].mxu0
        %v3199 = vpop.f32.mrb[0].mxu0
        %v3200 = vadd.f32 %v2784, %v3199
        %v3201 = vpop.f32.mrb[0].mxu0
        %3202 = vmatprep.mubr.bf16.mxu0 %v2593
        %3203 = vmatmul.mubr.bf16.gmra.mrb[0].mxu0 %v2529
        %v3204 = vpop.f32.mrb[0].mxu0
        %v3205 = vadd.f32 %v2784, %v3204
        %v3206 = vpop.f32.mrb[0].mxu0
        %v3207 = vpop.f32.mrb[0].mxu0
        %v3208 = vadd.f32 %v2784, %v3207
        %v3209 = vpop.f32.mrb[0].mxu0
        %3210 = vdwg.mxu0
        %3211 = vmatprep.subr.bf16.mxu0 0
        %3212 = vmatpush1.bf16.msra.mxu0 %v2946
        %3213 = vmatprep.subr.bf16.mxu0 0
        %3214 = vmatpush1.bf16.msra.mxu0 %v2947
        %3215 = vmatprep.subr.bf16.mxu0 0
        %3216 = vmatpush1.bf16.msra.mxu0 %v2948
        %3217 = vmatprep.subr.bf16.mxu0 0
        %3218 = vmatpush1.bf16.msra.mxu0 %v2949
        %3219 = vmatprep.subr.bf16.mxu0 0
        %3220 = vmatpush1.bf16.msra.mxu0 %v2950
        %3221 = vmatprep.subr.bf16.mxu0 0
        %3222 = vmatpush1.bf16.msra.mxu0 %v2951
        %3223 = vmatprep.subr.bf16.mxu0 0
        %3224 = vmatpush1.bf16.msra.mxu0 %v2952
        %3225 = vmatprep.subr.bf16.mxu0 0
        %3226 = vmatpush1.bf16.msra.mxu0 %v2953
        %3227 = vmatprep.subr.bf16.mxu0 0
        %3228 = vmatpush1.bf16.msra.mxu0 %v2954
        %3229 = vmatprep.subr.bf16.mxu0 0
        %3230 = vmatpush1.bf16.msra.mxu0 %v2955
        %3231 = vmatprep.subr.bf16.mxu0 0
        %3232 = vmatpush1.bf16.msra.mxu0 %v2956
        %3233 = vmatprep.subr.bf16.mxu0 0
        %3234 = vmatpush1.bf16.msra.mxu0 %v2957
        %3235 = vmatprep.subr.bf16.mxu0 0
        %3236 = vmatpush1.bf16.msra.mxu0 %v2958
        %3237 = vmatprep.subr.bf16.mxu0 0
        %3238 = vmatpush1.bf16.msra.mxu0 %v2959
        %3239 = vmatprep.subr.bf16.mxu0 0
        %3240 = vmatpush1.bf16.msra.mxu0 %v2960
        %3241 = vmatprep.subr.bf16.mxu0 0
        %3242 = vmatpush1.bf16.msra.mxu0 %v2961
        %3243 = vmatprep.mubr.bf16.mxu0 %v2660
        %3244 = vmatmul.mubr.bf16.gmra.mrb[0].mxu0 %v2597
        %v3245 = vpop.f32.mrb[0].mxu0
        %v3246 = vadd.f32 %v3085, %v3245
        %v3247 = vpop.f32.mrb[0].mxu0
        %v3248 = vpop.f32.mrb[0].mxu0
        %v3249 = vadd.f32 %v3088, %v3248
        %v3250 = vpop.f32.mrb[0].mxu0
        %3251 = vmatprep.mubr.bf16.mxu0 %v2663
        %3252 = vmatmul.mubr.bf16.gmra.mrb[0].mxu0 %v2601
        %v3253 = vpop.f32.mrb[0].mxu0
        %v3254 = vadd.f32 %v3093, %v3253
        %v3255 = vpop.f32.mrb[0].mxu0
        %v3256 = vpop.f32.mrb[0].mxu0
        %v3257 = vadd.f32 %v3096, %v3256
        %v3258 = vpop.f32.mrb[0].mxu0
        %3259 = vmatprep.mubr.bf16.mxu0 %v2666
        %3260 = vmatmul.mubr.bf16.gmra.mrb[0].mxu0 %v2605
        %v3261 = vpop.f32.mrb[0].mxu0
        %v3262 = vadd.f32 %v3101, %v3261
        %v3263 = vpop.f32.mrb[0].mxu0
        %v3264 = vpop.f32.mrb[0].mxu0
        %v3265 = vadd.f32 %v3104, %v3264
        %v3266 = vpop.f32.mrb[0].mxu0
        %3267 = vmatprep.mubr.bf16.mxu0 %v2669
        %3268 = vmatmul.mubr.bf16.gmra.mrb[0].mxu0 %v2609
        %v3269 = vpop.f32.mrb[0].mxu0
        %v3270 = vadd.f32 %v3109, %v3269
        %v3271 = vpop.f32.mrb[0].mxu0
        %v3272 = vpop.f32.mrb[0].mxu0
        %v3273 = vadd.f32 %v3112, %v3272
        %v3274 = vpop.f32.mrb[0].mxu0
        %3275 = vmatprep.mubr.bf16.mxu0 %v2672
        %3276 = vmatmul.mubr.bf16.gmra.mrb[0].mxu0 %v2613
        %v3277 = vpop.f32.mrb[0].mxu0
        %v3278 = vadd.f32 %v3117, %v3277
        %v3279 = vpop.f32.mrb[0].mxu0
        %v3280 = vpop.f32.mrb[0].mxu0
        %v3281 = vadd.f32 %v3120, %v3280
        %v3282 = vpop.f32.mrb[0].mxu0
        %3283 = vmatprep.mubr.bf16.mxu0 %v2675
        %3284 = vmatmul.mubr.bf16.gmra.mrb[0].mxu0 %v2617
        %v3285 = vpop.f32.mrb[0].mxu0
        %v3286 = vadd.f32 %v3125, %v3285
        %v3287 = vpop.f32.mrb[0].mxu0
        %v3288 = vpop.f32.mrb[0].mxu0
        %v3289 = vadd.f32 %v3128, %v3288
        %v3290 = vpop.f32.mrb[0].mxu0
        %3291 = vmatprep.mubr.bf16.mxu0 %v2678
        %3292 = vmatmul.mubr.bf16.gmra.mrb[0].mxu0 %v2621
        %v3293 = vpop.f32.mrb[0].mxu0
        %v3294 = vadd.f32 %v3133, %v3293
        %v3295 = vpop.f32.mrb[0].mxu0
        %v3296 = vpop.f32.mrb[0].mxu0
        %v3297 = vadd.f32 %v3136, %v3296
        %v3298 = vpop.f32.mrb[0].mxu0
        %3299 = vmatprep.mubr.bf16.mxu0 %v2681
        %3300 = vmatmul.mubr.bf16.gmra.mrb[0].mxu0 %v2625
        %v3301 = vpop.f32.mrb[0].mxu0
        %v3302 = vadd.f32 %v3141, %v3301
        %v3303 = vpop.f32.mrb[0].mxu0
        %v3304 = vpop.f32.mrb[0].mxu0
        %v3305 = vadd.f32 %v3144, %v3304
        %v3306 = vpop.f32.mrb[0].mxu0
        %3307 = vmatprep.mubr.bf16.mxu0 %v2684
        %3308 = vmatmul.mubr.bf16.gmra.mrb[0].mxu0 %v2629
        %v3309 = vpop.f32.mrb[0].mxu0
        %v3310 = vadd.f32 %v3149, %v3309
        %v3311 = vpop.f32.mrb[0].mxu0
        %v3312 = vpop.f32.mrb[0].mxu0
        %v3313 = vadd.f32 %v3152, %v3312
        %v3314 = vpop.f32.mrb[0].mxu0
        %3315 = vmatprep.mubr.bf16.mxu0 %v2687
        %3316 = vmatmul.mubr.bf16.gmra.mrb[0].mxu0 %v2633
        %v3317 = vpop.f32.mrb[0].mxu0
        %v3318 = vadd.f32 %v3157, %v3317
        %v3319 = vpop.f32.mrb[0].mxu0
        %v3320 = vpop.f32.mrb[0].mxu0
        %v3321 = vadd.f32 %v3160, %v3320
        %v3322 = vpop.f32.mrb[0].mxu0
        %3323 = vmatprep.mubr.bf16.mxu0 %v2690
        %3324 = vmatmul.mubr.bf16.gmra.mrb[0].mxu0 %v2637
        %v3325 = vpop.f32.mrb[0].mxu0
        %v3326 = vadd.f32 %v3165, %v3325
        %v3327 = vpop.f32.mrb[0].mxu0
        %v3328 = vpop.f32.mrb[0].mxu0
        %v3329 = vadd.f32 %v3168, %v3328
        %v3330 = vpop.f32.mrb[0].mxu0
        %3331 = vmatprep.mubr.bf16.mxu0 %v2693
        %3332 = vmatmul.mubr.bf16.gmra.mrb[0].mxu0 %v2641
        %v3333 = vpop.f32.mrb[0].mxu0
        %v3334 = vadd.f32 %v3173, %v3333
        %v3335 = vpop.f32.mrb[0].mxu0
        %v3336 = vpop.f32.mrb[0].mxu0
        %v3337 = vadd.f32 %v3176, %v3336
        %v3338 = vpop.f32.mrb[0].mxu0
        %3339 = vmatprep.mubr.bf16.mxu0 %v2696
        %3340 = vmatmul.mubr.bf16.gmra.mrb[0].mxu0 %v2645
        %v3341 = vpop.f32.mrb[0].mxu0
        %v3342 = vadd.f32 %v3181, %v3341
        %v3343 = vpop.f32.mrb[0].mxu0
        %v3344 = vpop.f32.mrb[0].mxu0
        %v3345 = vadd.f32 %v3184, %v3344
        %v3346 = vpop.f32.mrb[0].mxu0
        %3347 = vmatprep.mubr.bf16.mxu0 %v2699
        %3348 = vmatmul.mubr.bf16.gmra.mrb[0].mxu0 %v2649
        %v3349 = vpop.f32.mrb[0].mxu0
        %v3350 = vadd.f32 %v3189, %v3349
        %v3351 = vpop.f32.mrb[0].mxu0
        %v3352 = vpop.f32.mrb[0].mxu0
        %v3353 = vadd.f32 %v3192, %v3352
        %v3354 = vpop.f32.mrb[0].mxu0
        %3355 = vmatprep.mubr.bf16.mxu0 %v2702
        %3356 = vmatmul.mubr.bf16.gmra.mrb[0].mxu0 %v2653
        %v3357 = vpop.f32.mrb[0].mxu0
        %v3358 = vadd.f32 %v3197, %v3357
        %v3359 = vpop.f32.mrb[0].mxu0
        %v3360 = vpop.f32.mrb[0].mxu0
        %v3361 = vadd.f32 %v3200, %v3360
        %v3362 = vpop.f32.mrb[0].mxu0
        %3363 = vmatprep.mubr.bf16.mxu0 %v2705
        %3364 = vmatmul.mubr.bf16.gmra.mrb[0].mxu0 %v2657
        %v3365 = vpop.f32.mrb[0].mxu0
        %v3366 = vadd.f32 %v3205, %v3365
        %v3367 = vpop.f32.mrb[0].mxu0
        %v3368 = vpop.f32.mrb[0].mxu0
        %v3369 = vadd.f32 %v3208, %v3368
        %v3370 = vpop.f32.mrb[0].mxu0
        %3371 = vdwg.mxu0
        %3372 = vmatprep.subr.bf16.mxu0 0
        %3373 = vmatpush1.bf16.msra.mxu0 %v2962
        %3374 = vmatprep.subr.bf16.mxu0 0
        %3375 = vmatpush1.bf16.msra.mxu0 %v2963
        %3376 = vmatprep.subr.bf16.mxu0 0
        %3377 = vmatpush1.bf16.msra.mxu0 %v2964
        %3378 = vmatprep.subr.bf16.mxu0 0
        %3379 = vmatpush1.bf16.msra.mxu0 %v2965
        %3380 = vmatprep.subr.bf16.mxu0 0
        %3381 = vmatpush1.bf16.msra.mxu0 0
        %3382 = vmatprep.subr.bf16.mxu0 0
        %3383 = vmatpush1.bf16.msra.mxu0 0
        %3384 = vmatprep.subr.bf16.mxu0 0
        %3385 = vmatpush1.bf16.msra.mxu0 0
        %3386 = vmatprep.subr.bf16.mxu0 0
        %3387 = vmatpush1.bf16.msra.mxu0 0
        %3388 = vmatprep.subr.bf16.mxu0 0
        %3389 = vmatpush1.bf16.msra.mxu0 0
        %3390 = vmatprep.subr.bf16.mxu0 0
        %3391 = vmatpush1.bf16.msra.mxu0 0
        %3392 = vmatprep.subr.bf16.mxu0 0
        %3393 = vmatpush1.bf16.msra.mxu0 0
        %3394 = vmatprep.subr.bf16.mxu0 0
        %3395 = vmatpush1.bf16.msra.mxu0 0
        %3396 = vmatprep.subr.bf16.mxu0 0
        %3397 = vmatpush1.bf16.msra.mxu0 0
        %3398 = vmatprep.subr.bf16.mxu0 0
        %3399 = vmatpush1.bf16.msra.mxu0 0
        %3400 = vmatprep.subr.bf16.mxu0 0
        %3401 = vmatpush1.bf16.msra.mxu0 0
        %3402 = vmatprep.subr.bf16.mxu0 0
        %3403 = vmatpush1.bf16.msra.mxu0 0
        %3404 = vmatprep.mubr.bf16.mxu0 0
        %3405 = vmatmul.mubr.bf16.gmra.mrb[0].mxu0 %v3003
        %v3406 = vpop.f32.mrb[0].mxu0
        %v3407 = vadd.f32 %v3246, %v3406
        %v3408 = vpop.f32.mrb[0].mxu0
        %v3409 = vpop.f32.mrb[0].mxu0
        %v3410 = vadd.f32 %v3249, %v3409
        %v3411 = vpop.f32.mrb[0].mxu0
        %3412 = vmatprep.mubr.bf16.mxu0 0
        %3413 = vmatmul.mubr.bf16.gmra.mrb[0].mxu0 %v3006
        %v3414 = vpop.f32.mrb[0].mxu0
        %v3415 = vadd.f32 %v3254, %v3414
        %v3416 = vpop.f32.mrb[0].mxu0
        %v3417 = vpop.f32.mrb[0].mxu0
        %v3418 = vadd.f32 %v3257, %v3417
        %v3419 = vpop.f32.mrb[0].mxu0
        %3420 = vmatprep.mubr.bf16.mxu0 0
        %3421 = vmatmul.mubr.bf16.gmra.mrb[0].mxu0 %v3009
        %v3422 = vpop.f32.mrb[0].mxu0
        %v3423 = vadd.f32 %v3262, %v3422
        %v3424 = vpop.f32.mrb[0].mxu0
        %v3425 = vpop.f32.mrb[0].mxu0
        %v3426 = vadd.f32 %v3265, %v3425
        %v3427 = vpop.f32.mrb[0].mxu0
        %3428 = vmatprep.mubr.bf16.mxu0 0
        %3429 = vmatmul.mubr.bf16.gmra.mrb[0].mxu0 %v3012
        %v3430 = vpop.f32.mrb[0].mxu0
        %v3431 = vadd.f32 %v3270, %v3430
        %v3432 = vpop.f32.mrb[0].mxu0
        %v3433 = vpop.f32.mrb[0].mxu0
        %v3434 = vadd.f32 %v3273, %v3433
        %v3435 = vpop.f32.mrb[0].mxu0
        %3436 = vmatprep.mubr.bf16.mxu0 0
        %3437 = vmatmul.mubr.bf16.gmra.mrb[0].mxu0 %v3015
        %v3438 = vpop.f32.mrb[0].mxu0
        %v3439 = vadd.f32 %v3278, %v3438
        %v3440 = vpop.f32.mrb[0].mxu0
        %v3441 = vpop.f32.mrb[0].mxu0
        %v3442 = vadd.f32 %v3281, %v3441
        %v3443 = vpop.f32.mrb[0].mxu0
        %3444 = vmatprep.mubr.bf16.mxu0 0
        %3445 = vmatmul.mubr.bf16.gmra.mrb[0].mxu0 %v3018
        %v3446 = vpop.f32.mrb[0].mxu0
        %v3447 = vadd.f32 %v3286, %v3446
        %v3448 = vpop.f32.mrb[0].mxu0
        %v3449 = vpop.f32.mrb[0].mxu0
        %v3450 = vadd.f32 %v3289, %v3449
        %v3451 = vpop.f32.mrb[0].mxu0
        %3452 = vmatprep.mubr.bf16.mxu0 0
        %3453 = vmatmul.mubr.bf16.gmra.mrb[0].mxu0 %v3021
        %v3454 = vpop.f32.mrb[0].mxu0
        %v3455 = vadd.f32 %v3294, %v3454
        %v3456 = vpop.f32.mrb[0].mxu0
        %v3457 = vpop.f32.mrb[0].mxu0
        %v3458 = vadd.f32 %v3297, %v3457
        %v3459 = vpop.f32.mrb[0].mxu0
        %3460 = vmatprep.mubr.bf16.mxu0 0
        %3461 = vmatmul.mubr.bf16.gmra.mrb[0].mxu0 %v3024
        %v3462 = vpop.f32.mrb[0].mxu0
        %v3463 = vadd.f32 %v3302, %v3462
        %v3464 = vpop.f32.mrb[0].mxu0
        %v3465 = vpop.f32.mrb[0].mxu0
        %v3466 = vadd.f32 %v3305, %v3465
        %v3467 = vpop.f32.mrb[0].mxu0
        %3468 = vmatprep.mubr.bf16.mxu0 0
        %3469 = vmatmul.mubr.bf16.gmra.mrb[0].mxu0 %v3027
        %v3470 = vpop.f32.mrb[0].mxu0
        %v3471 = vadd.f32 %v3310, %v3470
        %v3472 = vpop.f32.mrb[0].mxu0
        %v3473 = vpop.f32.mrb[0].mxu0
        %v3474 = vadd.f32 %v3313, %v3473
        %v3475 = vpop.f32.mrb[0].mxu0
        %3476 = vmatprep.mubr.bf16.mxu0 0
        %3477 = vmatmul.mubr.bf16.gmra.mrb[0].mxu0 %v3030
        %v3478 = vpop.f32.mrb[0].mxu0
        %v3479 = vadd.f32 %v3318, %v3478
        %v3480 = vpop.f32.mrb[0].mxu0
        %v3481 = vpop.f32.mrb[0].mxu0
        %v3482 = vadd.f32 %v3321, %v3481
        %v3483 = vpop.f32.mrb[0].mxu0
        %3484 = vmatprep.mubr.bf16.mxu0 0
        %3485 = vmatmul.mubr.bf16.gmra.mrb[0].mxu0 %v3033
        %v3486 = vpop.f32.mrb[0].mxu0
        %v3487 = vadd.f32 %v3326, %v3486
        %v3488 = vpop.f32.mrb[0].mxu0
        %v3489 = vpop.f32.mrb[0].mxu0
        %v3490 = vadd.f32 %v3329, %v3489
        %v3491 = vpop.f32.mrb[0].mxu0
        %3492 = vmatprep.mubr.bf16.mxu0 0
        %3493 = vmatmul.mubr.bf16.gmra.mrb[0].mxu0 %v3036
        %v3494 = vpop.f32.mrb[0].mxu0
        %v3495 = vadd.f32 %v3334, %v3494
        %v3496 = vpop.f32.mrb[0].mxu0
        %v3497 = vpop.f32.mrb[0].mxu0
        %v3498 = vadd.f32 %v3337, %v3497
        %v3499 = vpop.f32.mrb[0].mxu0
        %3500 = vmatprep.mubr.bf16.mxu0 0
        %3501 = vmatmul.mubr.bf16.gmra.mrb[0].mxu0 %v3039
        %v3502 = vpop.f32.mrb[0].mxu0
        %v3503 = vadd.f32 %v3342, %v3502
        %v3504 = vpop.f32.mrb[0].mxu0
        %v3505 = vpop.f32.mrb[0].mxu0
        %v3506 = vadd.f32 %v3345, %v3505
        %v3507 = vpop.f32.mrb[0].mxu0
        %3508 = vmatprep.mubr.bf16.mxu0 0
        %3509 = vmatmul.mubr.bf16.gmra.mrb[0].mxu0 %v3042
        %v3510 = vpop.f32.mrb[0].mxu0
        %v3511 = vadd.f32 %v3350, %v3510
        %v3512 = vpop.f32.mrb[0].mxu0
        %v3513 = vpop.f32.mrb[0].mxu0
        %v3514 = vadd.f32 %v3353, %v3513
        %v3515 = vpop.f32.mrb[0].mxu0
        %3516 = vmatprep.mubr.bf16.mxu0 0
        %3517 = vmatmul.mubr.bf16.gmra.mrb[0].mxu0 %v3045
        %v3518 = vpop.f32.mrb[0].mxu0
        %v3519 = vadd.f32 %v3358, %v3518
        %v3520 = vpop.f32.mrb[0].mxu0
        %v3521 = vpop.f32.mrb[0].mxu0
        %v3522 = vadd.f32 %v3361, %v3521
        %v3523 = vpop.f32.mrb[0].mxu0
        %3524 = vmatprep.mubr.bf16.mxu0 0
        %3525 = vmatmul.mubr.bf16.gmra.mrb[0].mxu0 %v3048
        %v3526 = vpop.f32.mrb[0].mxu0
        %v3527 = vadd.f32 %v3366, %v3526
        %v3528 = vpop.f32.mrb[0].mxu0
        %v3529 = vpop.f32.mrb[0].mxu0
        %v3530 = vadd.f32 %v3369, %v3529
        %v3531 = vpop.f32.mrb[0].mxu0
        %3532 = vdwg.mxu0
        %v3533 = vmax.f32 %v3407, 0.0
        %v3534 = vmax.f32 %v3410, 0.0
        %v3535 = vmax.f32 %v3415, 0.0
        %v3536 = vmax.f32 %v3418, 0.0
        %v3537 = vmax.f32 %v3423, 0.0
        %v3538 = vmax.f32 %v3426, 0.0
        %v3539 = vmax.f32 %v3431, 0.0
        %v3540 = vmax.f32 %v3434, 0.0
        %v3541 = vmax.f32 %v3439, 0.0
        %v3542 = vmax.f32 %v3442, 0.0
        %v3543 = vmax.f32 %v3447, 0.0
        %v3544 = vmax.f32 %v3450, 0.0
        %v3545 = vmax.f32 %v3455, 0.0
        %v3546 = vmax.f32 %v3458, 0.0
        %v3547 = vmax.f32 %v3463, 0.0
        %v3548 = vmax.f32 %v3466, 0.0
        %v3549 = vmax.f32 %v3471, 0.0
        %v3550 = vmax.f32 %v3474, 0.0
        %v3551 = vmax.f32 %v3479, 0.0
        %v3552 = vmax.f32 %v3482, 0.0
        %v3553 = vmax.f32 %v3487, 0.0
        %v3554 = vmax.f32 %v3490, 0.0
        %v3555 = vmax.f32 %v3495, 0.0
        %v3556 = vmax.f32 %v3498, 0.0
        %v3557 = vmax.f32 %v3503, 0.0
        %v3558 = vmax.f32 %v3506, 0.0
        %v3559 = vmax.f32 %v3511, 0.0
        %v3560 = vmax.f32 %v3514, 0.0
        %v3561 = vmax.f32 %v3519, 0.0
        %v3562 = vmax.f32 %v3522, 0.0
        %v3563 = vmax.f32 %v3527, 0.0
        %v3564 = vmax.f32 %v3530, 0.0
        %v3565 = vpack.c.bf16 %v3534, %v3533
        %v3566 = vpack.c.bf16 %v3536, %v3535
        %v3567 = vpack.c.bf16 %v3538, %v3537
        %v3568 = vpack.c.bf16 %v3540, %v3539
        %v3569 = vpack.c.bf16 %v3542, %v3541
        %v3570 = vpack.c.bf16 %v3544, %v3543
        %v3571 = vpack.c.bf16 %v3546, %v3545
        %v3572 = vpack.c.bf16 %v3548, %v3547
        %v3573 = vpack.c.bf16 %v3550, %v3549
        %v3574 = vpack.c.bf16 %v3552, %v3551
        %v3575 = vpack.c.bf16 %v3554, %v3553
        %v3576 = vpack.c.bf16 %v3556, %v3555
        %v3577 = vpack.c.bf16 %v3558, %v3557
        %v3578 = vpack.c.bf16 %v3560, %v3559
        %v3579 = vpack.c.bf16 %v3562, %v3561
        %v3580 = vpack.c.bf16 %v3564, %v3563
        %v3597 = vunpack.c.l.b16 %v3565
        %v3598 = vunpack.c.h.b16 %v3565
        %v3599 = vunpack.c.l.b16 %v3566
        %v3600 = vunpack.c.h.b16 %v3566
        %v3601 = vunpack.c.l.b16 %v3567
        %v3602 = vunpack.c.h.b16 %v3567
        %v3603 = vunpack.c.l.b16 %v3568
        %v3604 = vunpack.c.h.b16 %v3568
        %v3605 = vunpack.c.l.b16 %v3569
        %v3606 = vunpack.c.h.b16 %v3569
        %v3607 = vunpack.c.l.b16 %v3570
        %v3608 = vunpack.c.h.b16 %v3570
        %v3609 = vunpack.c.l.b16 %v3571
        %v3610 = vunpack.c.h.b16 %v3571
        %v3611 = vunpack.c.l.b16 %v3572
        %v3612 = vunpack.c.h.b16 %v3572
        %v3613 = vunpack.c.l.b16 %v3573
        %v3614 = vunpack.c.h.b16 %v3573
        %v3615 = vunpack.c.l.b16 %v3574
        %v3616 = vunpack.c.h.b16 %v3574
        %v3617 = vunpack.c.l.b16 %v3575
        %v3618 = vunpack.c.h.b16 %v3575
        %v3619 = vunpack.c.l.b16 %v3576
        %v3620 = vunpack.c.h.b16 %v3576
        %v3621 = vunpack.c.l.b16 %v3577
        %v3622 = vunpack.c.h.b16 %v3577
        %v3623 = vunpack.c.l.b16 %v3578
        %v3624 = vunpack.c.h.b16 %v3578
        %v3625 = vunpack.c.l.b16 %v3579
        %v3626 = vunpack.c.h.b16 %v3579
        %v3627 = vunpack.c.l.b16 %v3580
        %v3628 = vunpack.c.h.b16 %v3580
        %v3629 = vpack.c.b16 %v3597, %v3597
        %v3630 = vpack.c.b16 %v3598, %v3598
        %v3631 = vpack.c.b16 %v3599, %v3599
        %v3632 = vpack.c.b16 %v3600, %v3600
        %v3633 = vpack.c.b16 %v3601, %v3601
        %v3634 = vpack.c.b16 %v3602, %v3602
        %v3635 = vpack.c.b16 %v3603, %v3603
        %v3636 = vpack.c.b16 %v3604, %v3604
        %v3637 = vpack.c.b16 %v3605, %v3605
        %v3638 = vpack.c.b16 %v3606, %v3606
        %v3639 = vpack.c.b16 %v3607, %v3607
        %v3640 = vpack.c.b16 %v3608, %v3608
        %v3641 = vpack.c.b16 %v3609, %v3609
        %v3642 = vpack.c.b16 %v3610, %v3610
        %v3643 = vpack.c.b16 %v3611, %v3611
        %v3644 = vpack.c.b16 %v3612, %v3612
        %v3645 = vpack.c.b16 %v3613, %v3613
        %v3646 = vpack.c.b16 %v3614, %v3614
        %v3647 = vpack.c.b16 %v3615, %v3615
        %v3648 = vpack.c.b16 %v3616, %v3616
        %v3649 = vpack.c.b16 %v3617, %v3617
        %v3650 = vpack.c.b16 %v3618, %v3618
        %v3651 = vpack.c.b16 %v3619, %v3619
        %v3652 = vpack.c.b16 %v3620, %v3620
        %v3653 = vpack.c.b16 %v3621, %v3621
        %v3654 = vpack.c.b16 %v3622, %v3622
        %v3655 = vpack.c.b16 %v3623, %v3623
        %v3656 = vpack.c.b16 %v3624, %v3624
        %v3657 = vpack.c.b16 %v3625, %v3625
        %v3658 = vpack.c.b16 %v3626, %v3626
        %v3659 = vpack.c.b16 %v3627, %v3627
        %v3660 = vpack.c.b16 %v3628, %v3628
        %v3662 = vshrl.u32 %v3629, 16
        %v3664 = vrot.slane %v3662, 7
        %v3665 = vshll.u32 %v3629, 16
        %v3667 = vor.u32 %v3664, %v3665
        %v3668 = vrot.slane %v3664, 4
        %v3670 = vshrl.u32 %v3630, 16
        %v3672 = vrot.slane %v3670, 7
        %v3673 = vshll.u32 %v3630, 16
        %v3675 = vor.u32 %v3672, %v3673
        %v3676 = vsel %vm475, %v3668, %v3675
        %v3677 = vrot.slane %v3672, 4
        %v3679 = vshrl.u32 %v3631, 16
        %v3681 = vrot.slane %v3679, 7
        %v3682 = vshll.u32 %v3631, 16
        %v3684 = vor.u32 %v3681, %v3682
        %v3685 = vrot.slane %v3681, 4
        %v3687 = vshrl.u32 %v3632, 16
        %v3689 = vrot.slane %v3687, 7
        %v3690 = vshll.u32 %v3632, 16
        %v3692 = vor.u32 %v3689, %v3690
        %v3693 = vsel %vm475, %v3685, %v3692
        %v3694 = vrot.slane %v3689, 4
        %v3696 = vshrl.u32 %v3633, 16
        %v3698 = vrot.slane %v3696, 7
        %v3699 = vshll.u32 %v3633, 16
        %v3701 = vor.u32 %v3698, %v3699
        %v3702 = vrot.slane %v3698, 4
        %v3704 = vshrl.u32 %v3634, 16
        %v3706 = vrot.slane %v3704, 7
        %v3707 = vshll.u32 %v3634, 16
        %v3709 = vor.u32 %v3706, %v3707
        %v3710 = vsel %vm475, %v3702, %v3709
        %v3711 = vrot.slane %v3706, 4
        %v3713 = vshrl.u32 %v3635, 16
        %v3715 = vrot.slane %v3713, 7
        %v3716 = vshll.u32 %v3635, 16
        %v3718 = vor.u32 %v3715, %v3716
        %v3719 = vrot.slane %v3715, 4
        %v3721 = vshrl.u32 %v3636, 16
        %v3723 = vrot.slane %v3721, 7
        %v3724 = vshll.u32 %v3636, 16
        %v3726 = vor.u32 %v3723, %v3724
        %v3727 = vsel %vm475, %v3719, %v3726
        %v3728 = vrot.slane %v3723, 4
        %v3730 = vshrl.u32 %v3637, 16
        %v3732 = vrot.slane %v3730, 7
        %v3733 = vshll.u32 %v3637, 16
        %v3735 = vor.u32 %v3732, %v3733
        %v3736 = vrot.slane %v3732, 4
        %v3738 = vshrl.u32 %v3638, 16
        %v3740 = vrot.slane %v3738, 7
        %v3741 = vshll.u32 %v3638, 16
        %v3743 = vor.u32 %v3740, %v3741
        %v3744 = vsel %vm475, %v3736, %v3743
        %v3745 = vrot.slane %v3740, 4
        %v3747 = vshrl.u32 %v3639, 16
        %v3749 = vrot.slane %v3747, 7
        %v3750 = vshll.u32 %v3639, 16
        %v3752 = vor.u32 %v3749, %v3750
        %v3753 = vrot.slane %v3749, 4
        %v3755 = vshrl.u32 %v3640, 16
        %v3757 = vrot.slane %v3755, 7
        %v3758 = vshll.u32 %v3640, 16
        %v3760 = vor.u32 %v3757, %v3758
        %v3761 = vsel %vm475, %v3753, %v3760
        %v3762 = vrot.slane %v3757, 4
        %v3764 = vshrl.u32 %v3641, 16
        %v3766 = vrot.slane %v3764, 7
        %v3767 = vshll.u32 %v3641, 16
        %v3769 = vor.u32 %v3766, %v3767
        %v3770 = vrot.slane %v3766, 4
        %v3772 = vshrl.u32 %v3642, 16
        %v3774 = vrot.slane %v3772, 7
        %v3775 = vshll.u32 %v3642, 16
        %v3777 = vor.u32 %v3774, %v3775
        %v3778 = vsel %vm475, %v3770, %v3777
        %v3779 = vrot.slane %v3774, 4
        %v3781 = vshrl.u32 %v3643, 16
        %v3783 = vrot.slane %v3781, 7
        %v3784 = vshll.u32 %v3643, 16
        %v3786 = vor.u32 %v3783, %v3784
        %v3787 = vrot.slane %v3783, 4
        %v3789 = vshrl.u32 %v3644, 16
        %v3791 = vrot.slane %v3789, 7
        %v3792 = vshll.u32 %v3644, 16
        %v3794 = vor.u32 %v3791, %v3792
        %v3795 = vsel %vm475, %v3787, %v3794
        %v3796 = vrot.slane %v3791, 4
        %v3798 = vshrl.u32 %v3645, 16
        %v3800 = vrot.slane %v3798, 7
        %v3801 = vshll.u32 %v3645, 16
        %v3803 = vor.u32 %v3800, %v3801
        %v3804 = vrot.slane %v3800, 4
        %v3806 = vshrl.u32 %v3646, 16
        %v3808 = vrot.slane %v3806, 7
        %v3809 = vshll.u32 %v3646, 16
        %v3811 = vor.u32 %v3808, %v3809
        %v3812 = vsel %vm475, %v3804, %v3811
        %v3813 = vrot.slane %v3808, 4
        %v3815 = vshrl.u32 %v3647, 16
        %v3817 = vrot.slane %v3815, 7
        %v3818 = vshll.u32 %v3647, 16
        %v3820 = vor.u32 %v3817, %v3818
        %v3821 = vrot.slane %v3817, 4
        %v3823 = vshrl.u32 %v3648, 16
        %v3825 = vrot.slane %v3823, 7
        %v3826 = vshll.u32 %v3648, 16
        %v3828 = vor.u32 %v3825, %v3826
        %v3829 = vsel %vm475, %v3821, %v3828
        %v3830 = vrot.slane %v3825, 4
        %v3832 = vshrl.u32 %v3649, 16
        %v3834 = vrot.slane %v3832, 7
        %v3835 = vshll.u32 %v3649, 16
        %v3837 = vor.u32 %v3834, %v3835
        %v3838 = vrot.slane %v3834, 4
        %v3840 = vshrl.u32 %v3650, 16
        %v3842 = vrot.slane %v3840, 7
        %v3843 = vshll.u32 %v3650, 16
        %v3845 = vor.u32 %v3842, %v3843
        %v3846 = vsel %vm475, %v3838, %v3845
        %v3847 = vrot.slane %v3842, 4
        %v3849 = vshrl.u32 %v3651, 16
        %v3851 = vrot.slane %v3849, 7
        %v3852 = vshll.u32 %v3651, 16
        %v3854 = vor.u32 %v3851, %v3852
        %v3855 = vrot.slane %v3851, 4
        %v3857 = vshrl.u32 %v3652, 16
        %v3859 = vrot.slane %v3857, 7
        %v3860 = vshll.u32 %v3652, 16
        %v3862 = vor.u32 %v3859, %v3860
        %v3863 = vsel %vm475, %v3855, %v3862
        %v3864 = vrot.slane %v3859, 4
        %v3866 = vshrl.u32 %v3653, 16
        %v3868 = vrot.slane %v3866, 7
        %v3869 = vshll.u32 %v3653, 16
        %v3871 = vor.u32 %v3868, %v3869
        %v3872 = vrot.slane %v3868, 4
        %v3874 = vshrl.u32 %v3654, 16
        %v3876 = vrot.slane %v3874, 7
        %v3877 = vshll.u32 %v3654, 16
        %v3879 = vor.u32 %v3876, %v3877
        %v3880 = vsel %vm475, %v3872, %v3879
        %v3881 = vrot.slane %v3876, 4
        %v3883 = vshrl.u32 %v3655, 16
        %v3885 = vrot.slane %v3883, 7
        %v3886 = vshll.u32 %v3655, 16
        %v3888 = vor.u32 %v3885, %v3886
        %v3889 = vrot.slane %v3885, 4
        %v3891 = vshrl.u32 %v3656, 16
        %v3893 = vrot.slane %v3891, 7
        %v3894 = vshll.u32 %v3656, 16
        %v3896 = vor.u32 %v3893, %v3894
        %v3897 = vsel %vm475, %v3889, %v3896
        %v3898 = vrot.slane %v3893, 4
        %v3900 = vshrl.u32 %v3657, 16
        %v3902 = vrot.slane %v3900, 7
        %v3903 = vshll.u32 %v3657, 16
        %v3905 = vor.u32 %v3902, %v3903
        %v3906 = vrot.slane %v3902, 4
        %v3908 = vshrl.u32 %v3658, 16
        %v3910 = vrot.slane %v3908, 7
        %v3911 = vshll.u32 %v3658, 16
        %v3913 = vor.u32 %v3910, %v3911
        %v3914 = vsel %vm475, %v3906, %v3913
        %v3915 = vrot.slane %v3910, 4
        %v3917 = vshrl.u32 %v3659, 16
        %v3919 = vrot.slane %v3917, 7
        %v3920 = vshll.u32 %v3659, 16
        %v3922 = vor.u32 %v3919, %v3920
        %v3923 = vrot.slane %v3919, 4
        %v3925 = vshrl.u32 %v3660, 16
        %v3927 = vrot.slane %v3925, 7
        %v3928 = vshll.u32 %v3660, 16
        %v3930 = vor.u32 %v3927, %v3928
        %v3931 = vsel %vm475, %v3923, %v3930
        %v3932 = vrot.slane %v3927, 4
        %v3981 = vsel %vm798, %v3667, %v975
        %3982 = vst [vmem:[%s796] sm:$0xf] %v3981
        %3983 = vst.msk [vmem:[%s796 + $0x4] sm:$0xf] %vm224, %v3676
        %v3984 = vld [vmem:[%s796 + $0x8] sm:$0x1]
        %v3985 = vsel %vm235, %v3677, %v3984
        %3986 = vst [vmem:[%s796 + $0x8] sm:$0x1] %v3985
        %v3987 = vld [vmem:[%s796 + $0xc] sm:$0xf]
        %v3988 = vsel %vm798, %v3684, %v3987
        %3989 = vst [vmem:[%s796 + $0xc] sm:$0xf] %v3988
        %3990 = vst.msk [vmem:[%s796 + $0x10] sm:$0xf] %vm224, %v3693
        %v3991 = vld [vmem:[%s796 + $0x14] sm:$0x1]
        %v3992 = vsel %vm235, %v3694, %v3991
        %3993 = vst [vmem:[%s796 + $0x14] sm:$0x1] %v3992
        %v3994 = vld [vmem:[%s796 + $0x18] sm:$0xf]
        %v3995 = vsel %vm798, %v3701, %v3994
        %3996 = vst [vmem:[%s796 + $0x18] sm:$0xf] %v3995
        %3997 = vst.msk [vmem:[%s796 + $0x1c] sm:$0xf] %vm224, %v3710
        %v3998 = vld [vmem:[%s796 + $0x20] sm:$0x1]
        %v3999 = vsel %vm235, %v3711, %v3998
        %4000 = vst [vmem:[%s796 + $0x20] sm:$0x1] %v3999
        %v4001 = vld [vmem:[%s796 + $0x24] sm:$0xf]
        %v4002 = vsel %vm798, %v3718, %v4001
        %4003 = vst [vmem:[%s796 + $0x24] sm:$0xf] %v4002
        %4004 = vst.msk [vmem:[%s796 + $0x28] sm:$0xf] %vm224, %v3727
        %v4005 = vld [vmem:[%s796 + $0x2c] sm:$0x1]
        %v4006 = vsel %vm235, %v3728, %v4005
        %4007 = vst [vmem:[%s796 + $0x2c] sm:$0x1] %v4006
        %v4008 = vld [vmem:[%s796 + $0x30] sm:$0xf]
        %v4009 = vsel %vm798, %v3735, %v4008
        %4010 = vst [vmem:[%s796 + $0x30] sm:$0xf] %v4009
        %4011 = vst.msk [vmem:[%s796 + $0x34] sm:$0xf] %vm224, %v3744
        %v4012 = vld [vmem:[%s796 + $0x38] sm:$0x1]
        %v4013 = vsel %vm235, %v3745, %v4012
        %4014 = vst [vmem:[%s796 + $0x38] sm:$0x1] %v4013
        %v4015 = vld [vmem:[%s796 + $0x3c] sm:$0xf]
        %v4016 = vsel %vm798, %v3752, %v4015
        %4017 = vst [vmem:[%s796 + $0x3c] sm:$0xf] %v4016
        %4018 = vst.msk [vmem:[%s796 + $0x40] sm:$0xf] %vm224, %v3761
        %v4019 = vld [vmem:[%s796 + $0x44] sm:$0x1]
        %v4020 = vsel %vm235, %v3762, %v4019
        %4021 = vst [vmem:[%s796 + $0x44] sm:$0x1] %v4020
        %v4022 = vld [vmem:[%s796 + $0x48] sm:$0xf]
        %v4023 = vsel %vm798, %v3769, %v4022
        %4024 = vst [vmem:[%s796 + $0x48] sm:$0xf] %v4023
        %4025 = vst.msk [vmem:[%s796 + $0x4c] sm:$0xf] %vm224, %v3778
        %v4026 = vld [vmem:[%s796 + $0x50] sm:$0x1]
        %v4027 = vsel %vm235, %v3779, %v4026
        %4028 = vst [vmem:[%s796 + $0x50] sm:$0x1] %v4027
        %v4029 = vld [vmem:[%s796 + $0x54] sm:$0xf]
        %v4030 = vsel %vm798, %v3786, %v4029
        %4031 = vst [vmem:[%s796 + $0x54] sm:$0xf] %v4030
        %4032 = vst.msk [vmem:[%s796 + $0x58] sm:$0xf] %vm224, %v3795
        %v4033 = vld [vmem:[%s796 + $0x5c] sm:$0x1]
        %v4034 = vsel %vm235, %v3796, %v4033
        %4035 = vst [vmem:[%s796 + $0x5c] sm:$0x1] %v4034
        %v4036 = vld [vmem:[%s796 + $0x60] sm:$0xf]
        %v4037 = vsel %vm798, %v3803, %v4036
        %4038 = vst [vmem:[%s796 + $0x60] sm:$0xf] %v4037
        %4039 = vst.msk [vmem:[%s796 + $0x64] sm:$0xf] %vm224, %v3812
        %v4040 = vld [vmem:[%s796 + $0x68] sm:$0x1]
        %v4041 = vsel %vm235, %v3813, %v4040
        %4042 = vst [vmem:[%s796 + $0x68] sm:$0x1] %v4041
        %v4043 = vld [vmem:[%s796 + $0x6c] sm:$0xf]
        %v4044 = vsel %vm798, %v3820, %v4043
        %4045 = vst [vmem:[%s796 + $0x6c] sm:$0xf] %v4044
        %4046 = vst.msk [vmem:[%s796 + $0x70] sm:$0xf] %vm224, %v3829
        %v4047 = vld [vmem:[%s796 + $0x74] sm:$0x1]
        %v4048 = vsel %vm235, %v3830, %v4047
        %4049 = vst [vmem:[%s796 + $0x74] sm:$0x1] %v4048
        %v4050 = vld [vmem:[%s796 + $0x78] sm:$0xf]
        %v4051 = vsel %vm798, %v3837, %v4050
        %4052 = vst [vmem:[%s796 + $0x78] sm:$0xf] %v4051
        %4053 = vst.msk [vmem:[%s796 + $0x7c] sm:$0xf] %vm224, %v3846
        %v4054 = vld [vmem:[%s796 + $0x80] sm:$0x1]
        %v4055 = vsel %vm235, %v3847, %v4054
        %4056 = vst [vmem:[%s796 + $0x80] sm:$0x1] %v4055
        %v4057 = vld [vmem:[%s796 + $0x84] sm:$0xf]
        %v4058 = vsel %vm798, %v3854, %v4057
        %4059 = vst [vmem:[%s796 + $0x84] sm:$0xf] %v4058
        %4060 = vst.msk [vmem:[%s796 + $0x88] sm:$0xf] %vm224, %v3863
        %v4061 = vld [vmem:[%s796 + $0x8c] sm:$0x1]
        %v4062 = vsel %vm235, %v3864, %v4061
        %4063 = vst [vmem:[%s796 + $0x8c] sm:$0x1] %v4062
        %v4064 = vld [vmem:[%s796 + $0x90] sm:$0xf]
        %v4065 = vsel %vm798, %v3871, %v4064
        %4066 = vst [vmem:[%s796 + $0x90] sm:$0xf] %v4065
        %4067 = vst.msk [vmem:[%s796 + $0x94] sm:$0xf] %vm224, %v3880
        %v4068 = vld [vmem:[%s796 + $0x98] sm:$0x1]
        %v4069 = vsel %vm235, %v3881, %v4068
        %4070 = vst [vmem:[%s796 + $0x98] sm:$0x1] %v4069
        %v4071 = vld [vmem:[%s796 + $0x9c] sm:$0xf]
        %v4072 = vsel %vm798, %v3888, %v4071
        %4073 = vst [vmem:[%s796 + $0x9c] sm:$0xf] %v4072
        %4074 = vst.msk [vmem:[%s796 + $0xa0] sm:$0xf] %vm224, %v3897
        %v4075 = vld [vmem:[%s796 + $0xa4] sm:$0x1]
        %v4076 = vsel %vm235, %v3898, %v4075
        %4077 = vst [vmem:[%s796 + $0xa4] sm:$0x1] %v4076
        %v4078 = vld [vmem:[%s796 + $0xa8] sm:$0xf]
        %v4079 = vsel %vm798, %v3905, %v4078
        %4080 = vst [vmem:[%s796 + $0xa8] sm:$0xf] %v4079
        %4081 = vst.msk [vmem:[%s796 + $0xac] sm:$0xf] %vm224, %v3914
        %v4082 = vld [vmem:[%s796 + $0xb0] sm:$0x1]
        %v4083 = vsel %vm235, %v3915, %v4082
        %4084 = vst [vmem:[%s796 + $0xb0] sm:$0x1] %v4083
        %v4085 = vld [vmem:[%s796 + $0xb4] sm:$0xf]
        %v4086 = vsel %vm798, %v3922, %v4085
        %4087 = vst [vmem:[%s796 + $0xb4] sm:$0xf] %v4086
        %4088 = vst.msk [vmem:[%s796 + $0xb8] sm:$0xf] %vm224, %v3931
        %v4089 = vld [vmem:[%s796 + $0xbc] sm:$0x1]
        %v4090 = vsel %vm235, %v3932, %v4089
        %4091 = vst [vmem:[%s796 + $0xbc] sm:$0x1] %v4090
        %v4092 = vld [vmem:[#allocation2] sm:$0xf]
        %v4093 = vld [vmem:[#allocation2 + $0x4] sm:$0xf]
        %v4094 = vld [vmem:[#allocation2 + $0xc] sm:$0xf]
        %v4095 = vld [vmem:[#allocation2 + $0x10] sm:$0xf]
        %v4096 = vld [vmem:[#allocation2 + $0x18] sm:$0xf]
        %v4097 = vld [vmem:[#allocation2 + $0x1c] sm:$0xf]
        %v4098 = vld [vmem:[#allocation2 + $0x24] sm:$0xf]
        %v4099 = vld [vmem:[#allocation2 + $0x28] sm:$0xf]
        %v4100 = vld [vmem:[#allocation2 + $0x30] sm:$0xf]
        %v4101 = vld [vmem:[#allocation2 + $0x34] sm:$0xf]
        %v4102 = vld [vmem:[#allocation2 + $0x3c] sm:$0xf]
        %v4103 = vld [vmem:[#allocation2 + $0x40] sm:$0xf]
        %v4104 = vld [vmem:[#allocation2 + $0x48] sm:$0xf]
        %v4105 = vld [vmem:[#allocation2 + $0x4c] sm:$0xf]
        %v4106 = vld [vmem:[#allocation2 + $0x54] sm:$0xf]
        %v4107 = vld [vmem:[#allocation2 + $0x58] sm:$0xf]
        %v4108 = vld [vmem:[#allocation2 + $0x60] sm:$0xf]
        %v4109 = vld [vmem:[#allocation2 + $0x64] sm:$0xf]
        %v4110 = vld [vmem:[#allocation2 + $0x6c] sm:$0xf]
        %v4111 = vld [vmem:[#allocation2 + $0x70] sm:$0xf]
        %v4112 = vld [vmem:[#allocation2 + $0x78] sm:$0xf]
        %v4113 = vld [vmem:[#allocation2 + $0x7c] sm:$0xf]
        %v4114 = vld [vmem:[#allocation2 + $0x84] sm:$0xf]
        %v4115 = vld [vmem:[#allocation2 + $0x88] sm:$0xf]
        %v4116 = vld [vmem:[#allocation2 + $0x90] sm:$0xf]
        %v4117 = vld [vmem:[#allocation2 + $0x94] sm:$0xf]
        %v4118 = vld [vmem:[#allocation2 + $0x9c] sm:$0xf]
        %v4119 = vld [vmem:[#allocation2 + $0xa0] sm:$0xf]
        %v4120 = vld [vmem:[#allocation2 + $0xa8] sm:$0xf]
        %v4121 = vld [vmem:[#allocation2 + $0xac] sm:$0xf]
        %v4122 = vld [vmem:[#allocation2 + $0xb4] sm:$0xf]
        %v4123 = vld [vmem:[#allocation2 + $0xb8] sm:$0xf]
        %v4124 = vld [vmem:[#allocation2 + $0x8] sm:$0x1]
        %v4125 = vld [vmem:[#allocation2 + $0x14] sm:$0x1]
        %v4126 = vld [vmem:[#allocation2 + $0x20] sm:$0x1]
        %v4127 = vld [vmem:[#allocation2 + $0x2c] sm:$0x1]
        %v4128 = vld [vmem:[#allocation2 + $0x38] sm:$0x1]
        %v4129 = vld [vmem:[#allocation2 + $0x44] sm:$0x1]
        %v4130 = vld [vmem:[#allocation2 + $0x50] sm:$0x1]
        %v4131 = vld [vmem:[#allocation2 + $0x5c] sm:$0x1]
        %v4132 = vld [vmem:[#allocation2 + $0x68] sm:$0x1]
        %v4133 = vld [vmem:[#allocation2 + $0x74] sm:$0x1]
        %v4134 = vld [vmem:[#allocation2 + $0x80] sm:$0x1]
        %v4135 = vld [vmem:[#allocation2 + $0x8c] sm:$0x1]
        %v4136 = vld [vmem:[#allocation2 + $0x98] sm:$0x1]
        %v4137 = vld [vmem:[#allocation2 + $0xa4] sm:$0x1]
        %v4138 = vld [vmem:[#allocation2 + $0xb0] sm:$0x1]
        %v4139 = vld [vmem:[#allocation2 + $0xbc] sm:$0x1]
        %v4140 = vld [vmem:[#allocation2] sm:$0xe]
        %v4141 = vld [vmem:[#allocation2 + $0xc] sm:$0xe]
        %v4142 = vld [vmem:[#allocation2 + $0x18] sm:$0xe]
        %v4143 = vld [vmem:[#allocation2 + $0x24] sm:$0xe]
        %v4144 = vld [vmem:[#allocation2 + $0x30] sm:$0xe]
        %v4145 = vld [vmem:[#allocation2 + $0x3c] sm:$0xe]
        %v4146 = vld [vmem:[#allocation2 + $0x48] sm:$0xe]
        %v4147 = vld [vmem:[#allocation2 + $0x54] sm:$0xe]
        %v4148 = vld [vmem:[#allocation2 + $0x60] sm:$0xe]
        %v4149 = vld [vmem:[#allocation2 + $0x6c] sm:$0xe]
        %v4150 = vld [vmem:[#allocation2 + $0x78] sm:$0xe]
        %v4151 = vld [vmem:[#allocation2 + $0x84] sm:$0xe]
        %v4152 = vld [vmem:[#allocation2 + $0x90] sm:$0xe]
        %v4153 = vld [vmem:[#allocation2 + $0x9c] sm:$0xe]
        %v4154 = vld [vmem:[#allocation2 + $0xa8] sm:$0xe]
        %v4155 = vld [vmem:[#allocation2 + $0xb4] sm:$0xe]
        %v4156 = vld [vmem:[%s796] sm:$0xf]
        %v4157 = vld [vmem:[%s796 + $0x4] sm:$0xf]
        %v4158 = vld [vmem:[%s796 + $0xc] sm:$0xf]
        %v4159 = vld [vmem:[%s796 + $0x10] sm:$0xf]
        %v4160 = vld [vmem:[%s796 + $0x18] sm:$0xf]
        %v4161 = vld [vmem:[%s796 + $0x1c] sm:$0xf]
        %v4162 = vld [vmem:[%s796 + $0x24] sm:$0xf]
        %v4163 = vld [vmem:[%s796 + $0x28] sm:$0xf]
        %v4164 = vld [vmem:[%s796 + $0x30] sm:$0xf]
        %v4165 = vld [vmem:[%s796 + $0x34] sm:$0xf]
        %v4166 = vld [vmem:[%s796 + $0x3c] sm:$0xf]
        %v4167 = vld [vmem:[%s796 + $0x40] sm:$0xf]
        %v4168 = vld [vmem:[%s796 + $0x48] sm:$0xf]
        %v4169 = vld [vmem:[%s796 + $0x4c] sm:$0xf]
        %v4170 = vld [vmem:[%s796 + $0x54] sm:$0xf]
        %v4171 = vld [vmem:[%s796 + $0x58] sm:$0xf]
        %v4172 = vld [vmem:[%s796 + $0x60] sm:$0xf]
        %v4173 = vld [vmem:[%s796 + $0x64] sm:$0xf]
        %v4174 = vld [vmem:[%s796 + $0x6c] sm:$0xf]
        %v4175 = vld [vmem:[%s796 + $0x70] sm:$0xf]
        %v4176 = vld [vmem:[%s796 + $0x78] sm:$0xf]
        %v4177 = vld [vmem:[%s796 + $0x7c] sm:$0xf]
        %v4178 = vld [vmem:[%s796 + $0x84] sm:$0xf]
        %v4179 = vld [vmem:[%s796 + $0x88] sm:$0xf]
        %v4180 = vld [vmem:[%s796 + $0x90] sm:$0xf]
        %v4181 = vld [vmem:[%s796 + $0x94] sm:$0xf]
        %v4182 = vld [vmem:[%s796 + $0x9c] sm:$0xf]
        %v4183 = vld [vmem:[%s796 + $0xa0] sm:$0xf]
        %v4184 = vld [vmem:[%s796 + $0xa8] sm:$0xf]
        %v4185 = vld [vmem:[%s796 + $0xac] sm:$0xf]
        %v4186 = vld [vmem:[%s796 + $0xb4] sm:$0xf]
        %v4187 = vld [vmem:[%s796 + $0xb8] sm:$0xf]
        %v4188 = vld [vmem:[%s796 + $0x8] sm:$0x1]
        %v4189 = vld [vmem:[%s796 + $0x14] sm:$0x1]
        %v4190 = vld [vmem:[%s796 + $0x20] sm:$0x1]
        %v4191 = vld [vmem:[%s796 + $0x2c] sm:$0x1]
        %v4192 = vld [vmem:[%s796 + $0x38] sm:$0x1]
        %v4193 = vld [vmem:[%s796 + $0x44] sm:$0x1]
        %v4194 = vld [vmem:[%s796 + $0x50] sm:$0x1]
        %v4195 = vld [vmem:[%s796 + $0x5c] sm:$0x1]
        %v4196 = vld [vmem:[%s796 + $0x68] sm:$0x1]
        %v4197 = vld [vmem:[%s796 + $0x74] sm:$0x1]
        %v4198 = vld [vmem:[%s796 + $0x80] sm:$0x1]
        %v4199 = vld [vmem:[%s796 + $0x8c] sm:$0x1]
        %v4200 = vld [vmem:[%s796 + $0x98] sm:$0x1]
        %v4201 = vld [vmem:[%s796 + $0xa4] sm:$0x1]
        %v4202 = vld [vmem:[%s796 + $0xb0] sm:$0x1]
        %v4203 = vld [vmem:[%s796 + $0xbc] sm:$0x1]
        %v4204 = vld [vmem:[%s796] sm:$0xe]
        %v4205 = vld [vmem:[%s796 + $0xc] sm:$0xe]
        %v4206 = vld [vmem:[%s796 + $0x18] sm:$0xe]
        %v4207 = vld [vmem:[%s796 + $0x24] sm:$0xe]
        %v4208 = vld [vmem:[%s796 + $0x30] sm:$0xe]
        %v4209 = vld [vmem:[%s796 + $0x3c] sm:$0xe]
        %v4210 = vld [vmem:[%s796 + $0x48] sm:$0xe]
        %v4211 = vld [vmem:[%s796 + $0x54] sm:$0xe]
        %v4212 = vld [vmem:[%s796 + $0x60] sm:$0xe]
        %v4213 = vld [vmem:[%s796 + $0x6c] sm:$0xe]
        %v4214 = vld [vmem:[%s796 + $0x78] sm:$0xe]
        %v4215 = vld [vmem:[%s796 + $0x84] sm:$0xe]
        %v4216 = vld [vmem:[%s796 + $0x90] sm:$0xe]
        %v4217 = vld [vmem:[%s796 + $0x9c] sm:$0xe]
        %v4218 = vld [vmem:[%s796 + $0xa8] sm:$0xe]
        %v4219 = vld [vmem:[%s796 + $0xb4] sm:$0xe]
        %v4220 = vld [vmem:[%s1039] sm:$0xf]
        %v4221 = vld [vmem:[%s1039 + $0x4] sm:$0xf]
        %v4222 = vld [vmem:[%s1039 + $0xc] sm:$0xf]
        %v4223 = vld [vmem:[%s1039 + $0x10] sm:$0xf]
        %v4224 = vld [vmem:[%s1039 + $0x18] sm:$0xf]
        %v4225 = vld [vmem:[%s1039 + $0x1c] sm:$0xf]
        %v4226 = vld [vmem:[%s1039 + $0x24] sm:$0xf]
        %v4227 = vld [vmem:[%s1039 + $0x28] sm:$0xf]
        %v4228 = vld [vmem:[%s1039 + $0x30] sm:$0xf]
        %v4229 = vld [vmem:[%s1039 + $0x34] sm:$0xf]
        %v4230 = vld [vmem:[%s1039 + $0x3c] sm:$0xf]
        %v4231 = vld [vmem:[%s1039 + $0x40] sm:$0xf]
        %v4232 = vld [vmem:[%s1039 + $0x48] sm:$0xf]
        %v4233 = vld [vmem:[%s1039 + $0x4c] sm:$0xf]
        %v4234 = vld [vmem:[%s1039 + $0x54] sm:$0xf]
        %v4235 = vld [vmem:[%s1039 + $0x58] sm:$0xf]
        %v4236 = vld [vmem:[%s1039 + $0x60] sm:$0xf]
        %v4237 = vld [vmem:[%s1039 + $0x64] sm:$0xf]
        %v4238 = vld [vmem:[%s1039 + $0x6c] sm:$0xf]
        %v4239 = vld [vmem:[%s1039 + $0x70] sm:$0xf]
        %v4240 = vld [vmem:[%s1039 + $0x78] sm:$0xf]
        %v4241 = vld [vmem:[%s1039 + $0x7c] sm:$0xf]
        %v4242 = vld [vmem:[%s1039 + $0x84] sm:$0xf]
        %v4243 = vld [vmem:[%s1039 + $0x88] sm:$0xf]
        %v4244 = vld [vmem:[%s1039 + $0x90] sm:$0xf]
        %v4245 = vld [vmem:[%s1039 + $0x94] sm:$0xf]
        %v4246 = vld [vmem:[%s1039 + $0x9c] sm:$0xf]
        %v4247 = vld [vmem:[%s1039 + $0xa0] sm:$0xf]
        %v4248 = vld [vmem:[%s1039 + $0xa8] sm:$0xf]
        %v4249 = vld [vmem:[%s1039 + $0xac] sm:$0xf]
        %v4250 = vld [vmem:[%s1039 + $0xb4] sm:$0xf]
        %v4251 = vld [vmem:[%s1039 + $0xb8] sm:$0xf]
        %v4252 = vld [vmem:[%s1039 + $0x8] sm:$0x1]
        %v4253 = vld [vmem:[%s1039 + $0x14] sm:$0x1]
        %v4254 = vld [vmem:[%s1039 + $0x20] sm:$0x1]
        %v4255 = vld [vmem:[%s1039 + $0x2c] sm:$0x1]
        %v4256 = vld [vmem:[%s1039 + $0x38] sm:$0x1]
        %v4257 = vld [vmem:[%s1039 + $0x44] sm:$0x1]
        %v4258 = vld [vmem:[%s1039 + $0x50] sm:$0x1]
        %v4259 = vld [vmem:[%s1039 + $0x5c] sm:$0x1]
        %v4260 = vld [vmem:[%s1039 + $0x68] sm:$0x1]
        %v4261 = vld [vmem:[%s1039 + $0x74] sm:$0x1]
        %v4262 = vld [vmem:[%s1039 + $0x80] sm:$0x1]
        %v4263 = vld [vmem:[%s1039 + $0x8c] sm:$0x1]
        %v4264 = vld [vmem:[%s1039 + $0x98] sm:$0x1]
        %v4265 = vld [vmem:[%s1039 + $0xa4] sm:$0x1]
        %v4266 = vld [vmem:[%s1039 + $0xb0] sm:$0x1]
        %v4267 = vld [vmem:[%s1039 + $0xbc] sm:$0x1]
        %v4268 = vld [vmem:[%s1039] sm:$0xe]
        %v4269 = vld [vmem:[%s1039 + $0xc] sm:$0xe]
        %v4270 = vld [vmem:[%s1039 + $0x18] sm:$0xe]
        %v4271 = vld [vmem:[%s1039 + $0x24] sm:$0xe]
        %v4272 = vld [vmem:[%s1039 + $0x30] sm:$0xe]
        %v4273 = vld [vmem:[%s1039 + $0x3c] sm:$0xe]
        %v4274 = vld [vmem:[%s1039 + $0x48] sm:$0xe]
        %v4275 = vld [vmem:[%s1039 + $0x54] sm:$0xe]
        %v4276 = vld [vmem:[%s1039 + $0x60] sm:$0xe]
        %v4277 = vld [vmem:[%s1039 + $0x6c] sm:$0xe]
        %v4278 = vld [vmem:[%s1039 + $0x78] sm:$0xe]
        %v4279 = vld [vmem:[%s1039 + $0x84] sm:$0xe]
        %v4280 = vld [vmem:[%s1039 + $0x90] sm:$0xe]
        %v4281 = vld [vmem:[%s1039 + $0x9c] sm:$0xe]
        %v4282 = vld [vmem:[%s1039 + $0xa8] sm:$0xe]
        %v4283 = vld [vmem:[%s1039 + $0xb4] sm:$0xe]
        %v4316 = vunpack.c.l.b16 %v4092
        %v4317 = vunpack.c.l.b16 %v4093
        %v4318 = vunpack.c.l.b16 %v4094
        %v4319 = vunpack.c.l.b16 %v4095
        %v4320 = vunpack.c.l.b16 %v4096
        %v4321 = vunpack.c.l.b16 %v4097
        %v4322 = vunpack.c.l.b16 %v4098
        %v4323 = vunpack.c.l.b16 %v4099
        %v4324 = vunpack.c.l.b16 %v4100
        %v4325 = vunpack.c.l.b16 %v4101
        %v4326 = vunpack.c.l.b16 %v4102
        %v4327 = vunpack.c.l.b16 %v4103
        %v4328 = vunpack.c.l.b16 %v4104
        %v4329 = vunpack.c.l.b16 %v4105
        %v4330 = vunpack.c.l.b16 %v4106
        %v4331 = vunpack.c.l.b16 %v4107
        %v4332 = vunpack.c.l.b16 %v4108
        %v4333 = vunpack.c.l.b16 %v4109
        %v4334 = vunpack.c.l.b16 %v4110
        %v4335 = vunpack.c.l.b16 %v4111
        %v4336 = vunpack.c.l.b16 %v4112
        %v4337 = vunpack.c.l.b16 %v4113
        %v4338 = vunpack.c.l.b16 %v4114
        %v4339 = vunpack.c.l.b16 %v4115
        %v4340 = vunpack.c.l.b16 %v4116
        %v4341 = vunpack.c.l.b16 %v4117
        %v4342 = vunpack.c.l.b16 %v4118
        %v4343 = vunpack.c.l.b16 %v4119
        %v4344 = vunpack.c.l.b16 %v4120
        %v4345 = vunpack.c.l.b16 %v4121
        %v4346 = vunpack.c.l.b16 %v4122
        %v4347 = vunpack.c.l.b16 %v4123
        %v4348 = vpack.c.b16 %v4317, %v4316
        %v4349 = vpack.c.b16 %v4319, %v4318
        %v4350 = vpack.c.b16 %v4321, %v4320
        %v4351 = vpack.c.b16 %v4323, %v4322
        %v4352 = vpack.c.b16 %v4325, %v4324
        %v4353 = vpack.c.b16 %v4327, %v4326
        %v4354 = vpack.c.b16 %v4329, %v4328
        %v4355 = vpack.c.b16 %v4331, %v4330
        %v4356 = vpack.c.b16 %v4333, %v4332
        %v4357 = vpack.c.b16 %v4335, %v4334
        %v4358 = vpack.c.b16 %v4337, %v4336
        %v4359 = vpack.c.b16 %v4339, %v4338
        %v4360 = vpack.c.b16 %v4341, %v4340
        %v4361 = vpack.c.b16 %v4343, %v4342
        %v4362 = vpack.c.b16 %v4345, %v4344
        %v4363 = vpack.c.b16 %v4347, %v4346
        %v4380 = vunpack.c.l.b16 %v4124
        %v4381 = vunpack.c.l.b16 %v4125
        %v4382 = vunpack.c.l.b16 %v4126
        %v4383 = vunpack.c.l.b16 %v4127
        %v4384 = vunpack.c.l.b16 %v4128
        %v4385 = vunpack.c.l.b16 %v4129
        %v4386 = vunpack.c.l.b16 %v4130
        %v4387 = vunpack.c.l.b16 %v4131
        %v4388 = vunpack.c.l.b16 %v4132
        %v4389 = vunpack.c.l.b16 %v4133
        %v4390 = vunpack.c.l.b16 %v4134
        %v4391 = vunpack.c.l.b16 %v4135
        %v4392 = vunpack.c.l.b16 %v4136
        %v4393 = vunpack.c.l.b16 %v4137
        %v4394 = vunpack.c.l.b16 %v4138
        %v4395 = vunpack.c.l.b16 %v4139
        %v4396 = vpack.c.b16 %v4380, %v4380
        %v4397 = vpack.c.b16 %v4381, %v4381
        %v4398 = vpack.c.b16 %v4382, %v4382
        %v4399 = vpack.c.b16 %v4383, %v4383
        %v4400 = vpack.c.b16 %v4384, %v4384
        %v4401 = vpack.c.b16 %v4385, %v4385
        %v4402 = vpack.c.b16 %v4386, %v4386
        %v4403 = vpack.c.b16 %v4387, %v4387
        %v4404 = vpack.c.b16 %v4388, %v4388
        %v4405 = vpack.c.b16 %v4389, %v4389
        %v4406 = vpack.c.b16 %v4390, %v4390
        %v4407 = vpack.c.b16 %v4391, %v4391
        %v4408 = vpack.c.b16 %v4392, %v4392
        %v4409 = vpack.c.b16 %v4393, %v4393
        %v4410 = vpack.c.b16 %v4394, %v4394
        %v4411 = vpack.c.b16 %v4395, %v4395
        %v4413 = vshrl.u32 %v4348, 16
        %v4415 = vshll.u32 %v4348, 16
        %v4417 = vrot.slane %v4415, 1
        %v4418 = vor.u32 %v4413, %v4417
        %v4420 = vshll.u32 %v4396, 16
        %v4422 = vrot.slane %v4420, 1
        %v4423 = vsel %vm1232, %v4418, %v4422
        %v4425 = vshrl.u32 %v4349, 16
        %v4427 = vshll.u32 %v4349, 16
        %v4429 = vrot.slane %v4427, 1
        %v4430 = vor.u32 %v4425, %v4429
        %v4432 = vshll.u32 %v4397, 16
        %v4434 = vrot.slane %v4432, 1
        %v4435 = vsel %vm1232, %v4430, %v4434
        %v4437 = vshrl.u32 %v4350, 16
        %v4439 = vshll.u32 %v4350, 16
        %v4441 = vrot.slane %v4439, 1
        %v4442 = vor.u32 %v4437, %v4441
        %v4444 = vshll.u32 %v4398, 16
        %v4446 = vrot.slane %v4444, 1
        %v4447 = vsel %vm1232, %v4442, %v4446
        %v4449 = vshrl.u32 %v4351, 16
        %v4451 = vshll.u32 %v4351, 16
        %v4453 = vrot.slane %v4451, 1
        %v4454 = vor.u32 %v4449, %v4453
        %v4456 = vshll.u32 %v4399, 16
        %v4458 = vrot.slane %v4456, 1
        %v4459 = vsel %vm1232, %v4454, %v4458
        %v4461 = vshrl.u32 %v4352, 16
        %v4463 = vshll.u32 %v4352, 16
        %v4465 = vrot.slane %v4463, 1
        %v4466 = vor.u32 %v4461, %v4465
        %v4468 = vshll.u32 %v4400, 16
        %v4470 = vrot.slane %v4468, 1
        %v4471 = vsel %vm1232, %v4466, %v4470
        %v4473 = vshrl.u32 %v4353, 16
        %v4475 = vshll.u32 %v4353, 16
        %v4477 = vrot.slane %v4475, 1
        %v4478 = vor.u32 %v4473, %v4477
        %v4480 = vshll.u32 %v4401, 16
        %v4482 = vrot.slane %v4480, 1
        %v4483 = vsel %vm1232, %v4478, %v4482
        %v4485 = vshrl.u32 %v4354, 16
        %v4487 = vshll.u32 %v4354, 16
        %v4489 = vrot.slane %v4487, 1
        %v4490 = vor.u32 %v4485, %v4489
        %v4492 = vshll.u32 %v4402, 16
        %v4494 = vrot.slane %v4492, 1
        %v4495 = vsel %vm1232, %v4490, %v4494
        %v4497 = vshrl.u32 %v4355, 16
        %v4499 = vshll.u32 %v4355, 16
        %v4501 = vrot.slane %v4499, 1
        %v4502 = vor.u32 %v4497, %v4501
        %v4504 = vshll.u32 %v4403, 16
        %v4506 = vrot.slane %v4504, 1
        %v4507 = vsel %vm1232, %v4502, %v4506
        %v4509 = vshrl.u32 %v4356, 16
        %v4511 = vshll.u32 %v4356, 16
        %v4513 = vrot.slane %v4511, 1
        %v4514 = vor.u32 %v4509, %v4513
        %v4516 = vshll.u32 %v4404, 16
        %v4518 = vrot.slane %v4516, 1
        %v4519 = vsel %vm1232, %v4514, %v4518
        %v4521 = vshrl.u32 %v4357, 16
        %v4523 = vshll.u32 %v4357, 16
        %v4525 = vrot.slane %v4523, 1
        %v4526 = vor.u32 %v4521, %v4525
        %v4528 = vshll.u32 %v4405, 16
        %v4530 = vrot.slane %v4528, 1
        %v4531 = vsel %vm1232, %v4526, %v4530
        %v4533 = vshrl.u32 %v4358, 16
        %v4535 = vshll.u32 %v4358, 16
        %v4537 = vrot.slane %v4535, 1
        %v4538 = vor.u32 %v4533, %v4537
        %v4540 = vshll.u32 %v4406, 16
        %v4542 = vrot.slane %v4540, 1
        %v4543 = vsel %vm1232, %v4538, %v4542
        %v4545 = vshrl.u32 %v4359, 16
        %v4547 = vshll.u32 %v4359, 16
        %v4549 = vrot.slane %v4547, 1
        %v4550 = vor.u32 %v4545, %v4549
        %v4552 = vshll.u32 %v4407, 16
        %v4554 = vrot.slane %v4552, 1
        %v4555 = vsel %vm1232, %v4550, %v4554
        %v4557 = vshrl.u32 %v4360, 16
        %v4559 = vshll.u32 %v4360, 16
        %v4561 = vrot.slane %v4559, 1
        %v4562 = vor.u32 %v4557, %v4561
        %v4564 = vshll.u32 %v4408, 16
        %v4566 = vrot.slane %v4564, 1
        %v4567 = vsel %vm1232, %v4562, %v4566
        %v4569 = vshrl.u32 %v4361, 16
        %v4571 = vshll.u32 %v4361, 16
        %v4573 = vrot.slane %v4571, 1
        %v4574 = vor.u32 %v4569, %v4573
        %v4576 = vshll.u32 %v4409, 16
        %v4578 = vrot.slane %v4576, 1
        %v4579 = vsel %vm1232, %v4574, %v4578
        %v4581 = vshrl.u32 %v4362, 16
        %v4583 = vshll.u32 %v4362, 16
        %v4585 = vrot.slane %v4583, 1
        %v4586 = vor.u32 %v4581, %v4585
        %v4588 = vshll.u32 %v4410, 16
        %v4590 = vrot.slane %v4588, 1
        %v4591 = vsel %vm1232, %v4586, %v4590
        %v4593 = vshrl.u32 %v4363, 16
        %v4595 = vshll.u32 %v4363, 16
        %v4597 = vrot.slane %v4595, 1
        %v4598 = vor.u32 %v4593, %v4597
        %v4600 = vshll.u32 %v4411, 16
        %v4602 = vrot.slane %v4600, 1
        %v4603 = vsel %vm1232, %v4598, %v4602
        %4604 = vrot.lane.b32.xlu0 %v4423, 64
        %v4605 = vpop.permute.xlu0 %4604
        %4606 = vrot.lane.b32.xlu0 %v4435, 64
        %v4607 = vpop.permute.xlu0 %4606
        %4608 = vrot.lane.b32.xlu0 %v4447, 64
        %v4609 = vpop.permute.xlu0 %4608
        %4610 = vrot.lane.b32.xlu0 %v4459, 64
        %v4611 = vpop.permute.xlu0 %4610
        %4612 = vrot.lane.b32.xlu0 %v4471, 64
        %v4613 = vpop.permute.xlu0 %4612
        %4614 = vrot.lane.b32.xlu0 %v4483, 64
        %v4615 = vpop.permute.xlu0 %4614
        %4616 = vrot.lane.b32.xlu0 %v4495, 64
        %v4617 = vpop.permute.xlu0 %4616
        %4618 = vrot.lane.b32.xlu0 %v4507, 64
        %v4619 = vpop.permute.xlu0 %4618
        %4620 = vrot.lane.b32.xlu0 %v4519, 64
        %v4621 = vpop.permute.xlu0 %4620
        %4622 = vrot.lane.b32.xlu0 %v4531, 64
        %v4623 = vpop.permute.xlu0 %4622
        %4624 = vrot.lane.b32.xlu0 %v4543, 64
        %v4625 = vpop.permute.xlu0 %4624
        %4626 = vrot.lane.b32.xlu0 %v4555, 64
        %v4627 = vpop.permute.xlu0 %4626
        %4628 = vrot.lane.b32.xlu0 %v4567, 64
        %v4629 = vpop.permute.xlu0 %4628
        %4630 = vrot.lane.b32.xlu0 %v4579, 64
        %v4631 = vpop.permute.xlu0 %4630
        %4632 = vrot.lane.b32.xlu0 %v4591, 64
        %v4633 = vpop.permute.xlu0 %4632
        %4634 = vrot.lane.b32.xlu0 %v4603, 64
        %v4635 = vpop.permute.xlu0 %4634
        %v4652 = vunpack.c.l.b16 %v4140
        %v4653 = vunpack.c.l.b16 %v4141
        %v4654 = vunpack.c.l.b16 %v4142
        %v4655 = vunpack.c.l.b16 %v4143
        %v4656 = vunpack.c.l.b16 %v4144
        %v4657 = vunpack.c.l.b16 %v4145
        %v4658 = vunpack.c.l.b16 %v4146
        %v4659 = vunpack.c.l.b16 %v4147
        %v4660 = vunpack.c.l.b16 %v4148
        %v4661 = vunpack.c.l.b16 %v4149
        %v4662 = vunpack.c.l.b16 %v4150
        %v4663 = vunpack.c.l.b16 %v4151
        %v4664 = vunpack.c.l.b16 %v4152
        %v4665 = vunpack.c.l.b16 %v4153
        %v4666 = vunpack.c.l.b16 %v4154
        %v4667 = vunpack.c.l.b16 %v4155
        %v4668 = vpack.c.b16 %v4317, %v4652
        %v4669 = vpack.c.b16 %v4319, %v4653
        %v4670 = vpack.c.b16 %v4321, %v4654
        %v4671 = vpack.c.b16 %v4323, %v4655
        %v4672 = vpack.c.b16 %v4325, %v4656
        %v4673 = vpack.c.b16 %v4327, %v4657
        %v4674 = vpack.c.b16 %v4329, %v4658
        %v4675 = vpack.c.b16 %v4331, %v4659
        %v4676 = vpack.c.b16 %v4333, %v4660
        %v4677 = vpack.c.b16 %v4335, %v4661
        %v4678 = vpack.c.b16 %v4337, %v4662
        %v4679 = vpack.c.b16 %v4339, %v4663
        %v4680 = vpack.c.b16 %v4341, %v4664
        %v4681 = vpack.c.b16 %v4343, %v4665
        %v4682 = vpack.c.b16 %v4345, %v4666
        %v4683 = vpack.c.b16 %v4347, %v4667
        %v4684 = vrot.slane %v4668, 1
        %v4685 = vrot.slane %v4396, 1
        %v4686 = vsel %vm1505, %v4684, %v4685
        %v4687 = vrot.slane %v4669, 1
        %v4688 = vrot.slane %v4397, 1
        %v4689 = vsel %vm1505, %v4687, %v4688
        %v4690 = vrot.slane %v4670, 1
        %v4691 = vrot.slane %v4398, 1
        %v4692 = vsel %vm1505, %v4690, %v4691
        %v4693 = vrot.slane %v4671, 1
        %v4694 = vrot.slane %v4399, 1
        %v4695 = vsel %vm1505, %v4693, %v4694
        %v4696 = vrot.slane %v4672, 1
        %v4697 = vrot.slane %v4400, 1
        %v4698 = vsel %vm1505, %v4696, %v4697
        %v4699 = vrot.slane %v4673, 1
        %v4700 = vrot.slane %v4401, 1
        %v4701 = vsel %vm1505, %v4699, %v4700
        %v4702 = vrot.slane %v4674, 1
        %v4703 = vrot.slane %v4402, 1
        %v4704 = vsel %vm1505, %v4702, %v4703
        %v4705 = vrot.slane %v4675, 1
        %v4706 = vrot.slane %v4403, 1
        %v4707 = vsel %vm1505, %v4705, %v4706
        %v4708 = vrot.slane %v4676, 1
        %v4709 = vrot.slane %v4404, 1
        %v4710 = vsel %vm1505, %v4708, %v4709
        %v4711 = vrot.slane %v4677, 1
        %v4712 = vrot.slane %v4405, 1
        %v4713 = vsel %vm1505, %v4711, %v4712
        %v4714 = vrot.slane %v4678, 1
        %v4715 = vrot.slane %v4406, 1
        %v4716 = vsel %vm1505, %v4714, %v4715
        %v4717 = vrot.slane %v4679, 1
        %v4718 = vrot.slane %v4407, 1
        %v4719 = vsel %vm1505, %v4717, %v4718
        %v4720 = vrot.slane %v4680, 1
        %v4721 = vrot.slane %v4408, 1
        %v4722 = vsel %vm1505, %v4720, %v4721
        %v4723 = vrot.slane %v4681, 1
        %v4724 = vrot.slane %v4409, 1
        %v4725 = vsel %vm1505, %v4723, %v4724
        %v4726 = vrot.slane %v4682, 1
        %v4727 = vrot.slane %v4410, 1
        %v4728 = vsel %vm1505, %v4726, %v4727
        %v4729 = vrot.slane %v4683, 1
        %v4730 = vrot.slane %v4411, 1
        %v4731 = vsel %vm1505, %v4729, %v4730
        %v4764 = vunpack.c.l.b16 %v4156
        %v4765 = vunpack.c.l.b16 %v4157
        %v4766 = vunpack.c.l.b16 %v4158
        %v4767 = vunpack.c.l.b16 %v4159
        %v4768 = vunpack.c.l.b16 %v4160
        %v4769 = vunpack.c.l.b16 %v4161
        %v4770 = vunpack.c.l.b16 %v4162
        %v4771 = vunpack.c.l.b16 %v4163
        %v4772 = vunpack.c.l.b16 %v4164
        %v4773 = vunpack.c.l.b16 %v4165
        %v4774 = vunpack.c.l.b16 %v4166
        %v4775 = vunpack.c.l.b16 %v4167
        %v4776 = vunpack.c.l.b16 %v4168
        %v4777 = vunpack.c.l.b16 %v4169
        %v4778 = vunpack.c.l.b16 %v4170
        %v4779 = vunpack.c.l.b16 %v4171
        %v4780 = vunpack.c.l.b16 %v4172
        %v4781 = vunpack.c.l.b16 %v4173
        %v4782 = vunpack.c.l.b16 %v4174
        %v4783 = vunpack.c.l.b16 %v4175
        %v4784 = vunpack.c.l.b16 %v4176
        %v4785 = vunpack.c.l.b16 %v4177
        %v4786 = vunpack.c.l.b16 %v4178
        %v4787 = vunpack.c.l.b16 %v4179
        %v4788 = vunpack.c.l.b16 %v4180
        %v4789 = vunpack.c.l.b16 %v4181
        %v4790 = vunpack.c.l.b16 %v4182
        %v4791 = vunpack.c.l.b16 %v4183
        %v4792 = vunpack.c.l.b16 %v4184
        %v4793 = vunpack.c.l.b16 %v4185
        %v4794 = vunpack.c.l.b16 %v4186
        %v4795 = vunpack.c.l.b16 %v4187
        %v4796 = vpack.c.b16 %v4765, %v4764
        %v4797 = vpack.c.b16 %v4767, %v4766
        %v4798 = vpack.c.b16 %v4769, %v4768
        %v4799 = vpack.c.b16 %v4771, %v4770
        %v4800 = vpack.c.b16 %v4773, %v4772
        %v4801 = vpack.c.b16 %v4775, %v4774
        %v4802 = vpack.c.b16 %v4777, %v4776
        %v4803 = vpack.c.b16 %v4779, %v4778
        %v4804 = vpack.c.b16 %v4781, %v4780
        %v4805 = vpack.c.b16 %v4783, %v4782
        %v4806 = vpack.c.b16 %v4785, %v4784
        %v4807 = vpack.c.b16 %v4787, %v4786
        %v4808 = vpack.c.b16 %v4789, %v4788
        %v4809 = vpack.c.b16 %v4791, %v4790
        %v4810 = vpack.c.b16 %v4793, %v4792
        %v4811 = vpack.c.b16 %v4795, %v4794
        %4812 = vrot.lane.b32.xlu0 %v4796, 64
        %v4813 = vpop.permute.xlu0 %4812
        %4814 = vrot.lane.b32.xlu0 %v4797, 64
        %v4815 = vpop.permute.xlu0 %4814
        %4816 = vrot.lane.b32.xlu0 %v4798, 64
        %v4817 = vpop.permute.xlu0 %4816
        %4818 = vrot.lane.b32.xlu0 %v4799, 64
        %v4819 = vpop.permute.xlu0 %4818
        %4820 = vrot.lane.b32.xlu0 %v4800, 64
        %v4821 = vpop.permute.xlu0 %4820
        %4822 = vrot.lane.b32.xlu0 %v4801, 64
        %v4823 = vpop.permute.xlu0 %4822
        %4824 = vrot.lane.b32.xlu0 %v4802, 64
        %v4825 = vpop.permute.xlu0 %4824
        %4826 = vrot.lane.b32.xlu0 %v4803, 64
        %v4827 = vpop.permute.xlu0 %4826
        %4828 = vrot.lane.b32.xlu0 %v4804, 64
        %v4829 = vpop.permute.xlu0 %4828
        %4830 = vrot.lane.b32.xlu0 %v4805, 64
        %v4831 = vpop.permute.xlu0 %4830
        %4832 = vrot.lane.b32.xlu0 %v4806, 64
        %v4833 = vpop.permute.xlu0 %4832
        %4834 = vrot.lane.b32.xlu0 %v4807, 64
        %v4835 = vpop.permute.xlu0 %4834
        %4836 = vrot.lane.b32.xlu0 %v4808, 64
        %v4837 = vpop.permute.xlu0 %4836
        %4838 = vrot.lane.b32.xlu0 %v4809, 64
        %v4839 = vpop.permute.xlu0 %4838
        %4840 = vrot.lane.b32.xlu0 %v4810, 64
        %v4841 = vpop.permute.xlu0 %4840
        %4842 = vrot.lane.b32.xlu0 %v4811, 64
        %v4843 = vpop.permute.xlu0 %4842
        %v4860 = vunpack.c.l.b16 %v4188
        %v4861 = vunpack.c.l.b16 %v4189
        %v4862 = vunpack.c.l.b16 %v4190
        %v4863 = vunpack.c.l.b16 %v4191
        %v4864 = vunpack.c.l.b16 %v4192
        %v4865 = vunpack.c.l.b16 %v4193
        %v4866 = vunpack.c.l.b16 %v4194
        %v4867 = vunpack.c.l.b16 %v4195
        %v4868 = vunpack.c.l.b16 %v4196
        %v4869 = vunpack.c.l.b16 %v4197
        %v4870 = vunpack.c.l.b16 %v4198
        %v4871 = vunpack.c.l.b16 %v4199
        %v4872 = vunpack.c.l.b16 %v4200
        %v4873 = vunpack.c.l.b16 %v4201
        %v4874 = vunpack.c.l.b16 %v4202
        %v4875 = vunpack.c.l.b16 %v4203
        %v4876 = vpack.c.b16 %v4860, %v4860
        %v4877 = vpack.c.b16 %v4861, %v4861
        %v4878 = vpack.c.b16 %v4862, %v4862
        %v4879 = vpack.c.b16 %v4863, %v4863
        %v4880 = vpack.c.b16 %v4864, %v4864
        %v4881 = vpack.c.b16 %v4865, %v4865
        %v4882 = vpack.c.b16 %v4866, %v4866
        %v4883 = vpack.c.b16 %v4867, %v4867
        %v4884 = vpack.c.b16 %v4868, %v4868
        %v4885 = vpack.c.b16 %v4869, %v4869
        %v4886 = vpack.c.b16 %v4870, %v4870
        %v4887 = vpack.c.b16 %v4871, %v4871
        %v4888 = vpack.c.b16 %v4872, %v4872
        %v4889 = vpack.c.b16 %v4873, %v4873
        %v4890 = vpack.c.b16 %v4874, %v4874
        %v4891 = vpack.c.b16 %v4875, %v4875
        %v4893 = vshrl.u32 %v4796, 16
        %v4895 = vshll.u32 %v4796, 16
        %v4897 = vrot.slane %v4895, 1
        %v4898 = vor.u32 %v4893, %v4897
        %v4900 = vshll.u32 %v4876, 16
        %v4902 = vrot.slane %v4900, 1
        %v4903 = vsel %vm1232, %v4898, %v4902
        %v4905 = vshrl.u32 %v4797, 16
        %v4907 = vshll.u32 %v4797, 16
        %v4909 = vrot.slane %v4907, 1
        %v4910 = vor.u32 %v4905, %v4909
        %v4912 = vshll.u32 %v4877, 16
        %v4914 = vrot.slane %v4912, 1
        %v4915 = vsel %vm1232, %v4910, %v4914
        %v4917 = vshrl.u32 %v4798, 16
        %v4919 = vshll.u32 %v4798, 16
        %v4921 = vrot.slane %v4919, 1
        %v4922 = vor.u32 %v4917, %v4921
        %v4924 = vshll.u32 %v4878, 16
        %v4926 = vrot.slane %v4924, 1
        %v4927 = vsel %vm1232, %v4922, %v4926
        %v4929 = vshrl.u32 %v4799, 16
        %v4931 = vshll.u32 %v4799, 16
        %v4933 = vrot.slane %v4931, 1
        %v4934 = vor.u32 %v4929, %v4933
        %v4936 = vshll.u32 %v4879, 16
        %v4938 = vrot.slane %v4936, 1
        %v4939 = vsel %vm1232, %v4934, %v4938
        %v4941 = vshrl.u32 %v4800, 16
        %v4943 = vshll.u32 %v4800, 16
        %v4945 = vrot.slane %v4943, 1
        %v4946 = vor.u32 %v4941, %v4945
        %v4948 = vshll.u32 %v4880, 16
        %v4950 = vrot.slane %v4948, 1
        %v4951 = vsel %vm1232, %v4946, %v4950
        %v4953 = vshrl.u32 %v4801, 16
        %v4955 = vshll.u32 %v4801, 16
        %v4957 = vrot.slane %v4955, 1
        %v4958 = vor.u32 %v4953, %v4957
        %v4960 = vshll.u32 %v4881, 16
        %v4962 = vrot.slane %v4960, 1
        %v4963 = vsel %vm1232, %v4958, %v4962
        %v4965 = vshrl.u32 %v4802, 16
        %v4967 = vshll.u32 %v4802, 16
        %v4969 = vrot.slane %v4967, 1
        %v4970 = vor.u32 %v4965, %v4969
        %v4972 = vshll.u32 %v4882, 16
        %v4974 = vrot.slane %v4972, 1
        %v4975 = vsel %vm1232, %v4970, %v4974
        %v4977 = vshrl.u32 %v4803, 16
        %v4979 = vshll.u32 %v4803, 16
        %v4981 = vrot.slane %v4979, 1
        %v4982 = vor.u32 %v4977, %v4981
        %v4984 = vshll.u32 %v4883, 16
        %v4986 = vrot.slane %v4984, 1
        %v4987 = vsel %vm1232, %v4982, %v4986
        %v4989 = vshrl.u32 %v4804, 16
        %v4991 = vshll.u32 %v4804, 16
        %v4993 = vrot.slane %v4991, 1
        %v4994 = vor.u32 %v4989, %v4993
        %v4996 = vshll.u32 %v4884, 16
        %v4998 = vrot.slane %v4996, 1
        %v4999 = vsel %vm1232, %v4994, %v4998
        %v5001 = vshrl.u32 %v4805, 16
        %v5003 = vshll.u32 %v4805, 16
        %v5005 = vrot.slane %v5003, 1
        %v5006 = vor.u32 %v5001, %v5005
        %v5008 = vshll.u32 %v4885, 16
        %v5010 = vrot.slane %v5008, 1
        %v5011 = vsel %vm1232, %v5006, %v5010
        %v5013 = vshrl.u32 %v4806, 16
        %v5015 = vshll.u32 %v4806, 16
        %v5017 = vrot.slane %v5015, 1
        %v5018 = vor.u32 %v5013, %v5017
        %v5020 = vshll.u32 %v4886, 16
        %v5022 = vrot.slane %v5020, 1
        %v5023 = vsel %vm1232, %v5018, %v5022
        %v5025 = vshrl.u32 %v4807, 16
        %v5027 = vshll.u32 %v4807, 16
        %v5029 = vrot.slane %v5027, 1
        %v5030 = vor.u32 %v5025, %v5029
        %v5032 = vshll.u32 %v4887, 16
        %v5034 = vrot.slane %v5032, 1
        %v5035 = vsel %vm1232, %v5030, %v5034
        %v5037 = vshrl.u32 %v4808, 16
        %v5039 = vshll.u32 %v4808, 16
        %v5041 = vrot.slane %v5039, 1
        %v5042 = vor.u32 %v5037, %v5041
        %v5044 = vshll.u32 %v4888, 16
        %v5046 = vrot.slane %v5044, 1
        %v5047 = vsel %vm1232, %v5042, %v5046
        %v5049 = vshrl.u32 %v4809, 16
        %v5051 = vshll.u32 %v4809, 16
        %v5053 = vrot.slane %v5051, 1
        %v5054 = vor.u32 %v5049, %v5053
        %v5056 = vshll.u32 %v4889, 16
        %v5058 = vrot.slane %v5056, 1
        %v5059 = vsel %vm1232, %v5054, %v5058
        %v5061 = vshrl.u32 %v4810, 16
        %v5063 = vshll.u32 %v4810, 16
        %v5065 = vrot.slane %v5063, 1
        %v5066 = vor.u32 %v5061, %v5065
        %v5068 = vshll.u32 %v4890, 16
        %v5070 = vrot.slane %v5068, 1
        %v5071 = vsel %vm1232, %v5066, %v5070
        %v5073 = vshrl.u32 %v4811, 16
        %v5075 = vshll.u32 %v4811, 16
        %v5077 = vrot.slane %v5075, 1
        %v5078 = vor.u32 %v5073, %v5077
        %v5080 = vshll.u32 %v4891, 16
        %v5082 = vrot.slane %v5080, 1
        %v5083 = vsel %vm1232, %v5078, %v5082
        %v5100 = vunpack.c.l.b16 %v4204
        %v5101 = vunpack.c.l.b16 %v4205
        %v5102 = vunpack.c.l.b16 %v4206
        %v5103 = vunpack.c.l.b16 %v4207
        %v5104 = vunpack.c.l.b16 %v4208
        %v5105 = vunpack.c.l.b16 %v4209
        %v5106 = vunpack.c.l.b16 %v4210
        %v5107 = vunpack.c.l.b16 %v4211
        %v5108 = vunpack.c.l.b16 %v4212
        %v5109 = vunpack.c.l.b16 %v4213
        %v5110 = vunpack.c.l.b16 %v4214
        %v5111 = vunpack.c.l.b16 %v4215
        %v5112 = vunpack.c.l.b16 %v4216
        %v5113 = vunpack.c.l.b16 %v4217
        %v5114 = vunpack.c.l.b16 %v4218
        %v5115 = vunpack.c.l.b16 %v4219
        %v5116 = vpack.c.b16 %v4765, %v5100
        %v5117 = vpack.c.b16 %v4767, %v5101
        %v5118 = vpack.c.b16 %v4769, %v5102
        %v5119 = vpack.c.b16 %v4771, %v5103
        %v5120 = vpack.c.b16 %v4773, %v5104
        %v5121 = vpack.c.b16 %v4775, %v5105
        %v5122 = vpack.c.b16 %v4777, %v5106
        %v5123 = vpack.c.b16 %v4779, %v5107
        %v5124 = vpack.c.b16 %v4781, %v5108
        %v5125 = vpack.c.b16 %v4783, %v5109
        %v5126 = vpack.c.b16 %v4785, %v5110
        %v5127 = vpack.c.b16 %v4787, %v5111
        %v5128 = vpack.c.b16 %v4789, %v5112
        %v5129 = vpack.c.b16 %v4791, %v5113
        %v5130 = vpack.c.b16 %v4793, %v5114
        %v5131 = vpack.c.b16 %v4795, %v5115
        %v5132 = vrot.slane %v5116, 1
        %v5133 = vrot.slane %v4876, 1
        %v5134 = vsel %vm1505, %v5132, %v5133
        %v5135 = vrot.slane %v5117, 1
        %v5136 = vrot.slane %v4877, 1
        %v5137 = vsel %vm1505, %v5135, %v5136
        %v5138 = vrot.slane %v5118, 1
        %v5139 = vrot.slane %v4878, 1
        %v5140 = vsel %vm1505, %v5138, %v5139
        %v5141 = vrot.slane %v5119, 1
        %v5142 = vrot.slane %v4879, 1
        %v5143 = vsel %vm1505, %v5141, %v5142
        %v5144 = vrot.slane %v5120, 1
        %v5145 = vrot.slane %v4880, 1
        %v5146 = vsel %vm1505, %v5144, %v5145
        %v5147 = vrot.slane %v5121, 1
        %v5148 = vrot.slane %v4881, 1
        %v5149 = vsel %vm1505, %v5147, %v5148
        %v5150 = vrot.slane %v5122, 1
        %v5151 = vrot.slane %v4882, 1
        %v5152 = vsel %vm1505, %v5150, %v5151
        %v5153 = vrot.slane %v5123, 1
        %v5154 = vrot.slane %v4883, 1
        %v5155 = vsel %vm1505, %v5153, %v5154
        %v5156 = vrot.slane %v5124, 1
        %v5157 = vrot.slane %v4884, 1
        %v5158 = vsel %vm1505, %v5156, %v5157
        %v5159 = vrot.slane %v5125, 1
        %v5160 = vrot.slane %v4885, 1
        %v5161 = vsel %vm1505, %v5159, %v5160
        %v5162 = vrot.slane %v5126, 1
        %v5163 = vrot.slane %v4886, 1
        %v5164 = vsel %vm1505, %v5162, %v5163
        %v5165 = vrot.slane %v5127, 1
        %v5166 = vrot.slane %v4887, 1
        %v5167 = vsel %vm1505, %v5165, %v5166
        %v5168 = vrot.slane %v5128, 1
        %v5169 = vrot.slane %v4888, 1
        %v5170 = vsel %vm1505, %v5168, %v5169
        %v5171 = vrot.slane %v5129, 1
        %v5172 = vrot.slane %v4889, 1
        %v5173 = vsel %vm1505, %v5171, %v5172
        %v5174 = vrot.slane %v5130, 1
        %v5175 = vrot.slane %v4890, 1
        %v5176 = vsel %vm1505, %v5174, %v5175
        %v5177 = vrot.slane %v5131, 1
        %v5178 = vrot.slane %v4891, 1
        %v5179 = vsel %vm1505, %v5177, %v5178
        %5180 = vrot.lane.b32.xlu0 %v5134, 64
        %v5181 = vpop.permute.xlu0 %5180
        %5182 = vrot.lane.b32.xlu0 %v5137, 64
        %v5183 = vpop.permute.xlu0 %5182
        %5184 = vrot.lane.b32.xlu0 %v5140, 64
        %v5185 = vpop.permute.xlu0 %5184
        %5186 = vrot.lane.b32.xlu0 %v5143, 64
        %v5187 = vpop.permute.xlu0 %5186
        %5188 = vrot.lane.b32.xlu0 %v5146, 64
        %v5189 = vpop.permute.xlu0 %5188
        %5190 = vrot.lane.b32.xlu0 %v5149, 64
        %v5191 = vpop.permute.xlu0 %5190
        %5192 = vrot.lane.b32.xlu0 %v5152, 64
        %v5193 = vpop.permute.xlu0 %5192
        %5194 = vrot.lane.b32.xlu0 %v5155, 64
        %v5195 = vpop.permute.xlu0 %5194
        %5196 = vrot.lane.b32.xlu0 %v5158, 64
        %v5197 = vpop.permute.xlu0 %5196
        %5198 = vrot.lane.b32.xlu0 %v5161, 64
        %v5199 = vpop.permute.xlu0 %5198
        %5200 = vrot.lane.b32.xlu0 %v5164, 64
        %v5201 = vpop.permute.xlu0 %5200
        %5202 = vrot.lane.b32.xlu0 %v5167, 64
        %v5203 = vpop.permute.xlu0 %5202
        %5204 = vrot.lane.b32.xlu0 %v5170, 64
        %v5205 = vpop.permute.xlu0 %5204
        %5206 = vrot.lane.b32.xlu0 %v5173, 64
        %v5207 = vpop.permute.xlu0 %5206
        %5208 = vrot.lane.b32.xlu0 %v5176, 64
        %v5209 = vpop.permute.xlu0 %5208
        %5210 = vrot.lane.b32.xlu0 %v5179, 64
        %v5211 = vpop.permute.xlu0 %5210
        %v5244 = vunpack.c.l.b16 %v4220
        %v5245 = vunpack.c.l.b16 %v4221
        %v5246 = vunpack.c.l.b16 %v4222
        %v5247 = vunpack.c.l.b16 %v4223
        %v5248 = vunpack.c.l.b16 %v4224
        %v5249 = vunpack.c.l.b16 %v4225
        %v5250 = vunpack.c.l.b16 %v4226
        %v5251 = vunpack.c.l.b16 %v4227
        %v5252 = vunpack.c.l.b16 %v4228
        %v5253 = vunpack.c.l.b16 %v4229
        %v5254 = vunpack.c.l.b16 %v4230
        %v5255 = vunpack.c.l.b16 %v4231
        %v5256 = vunpack.c.l.b16 %v4232
        %v5257 = vunpack.c.l.b16 %v4233
        %v5258 = vunpack.c.l.b16 %v4234
        %v5259 = vunpack.c.l.b16 %v4235
        %v5260 = vunpack.c.l.b16 %v4236
        %v5261 = vunpack.c.l.b16 %v4237
        %v5262 = vunpack.c.l.b16 %v4238
        %v5263 = vunpack.c.l.b16 %v4239
        %v5264 = vunpack.c.l.b16 %v4240
        %v5265 = vunpack.c.l.b16 %v4241
        %v5266 = vunpack.c.l.b16 %v4242
        %v5267 = vunpack.c.l.b16 %v4243
        %v5268 = vunpack.c.l.b16 %v4244
        %v5269 = vunpack.c.l.b16 %v4245
        %v5270 = vunpack.c.l.b16 %v4246
        %v5271 = vunpack.c.l.b16 %v4247
        %v5272 = vunpack.c.l.b16 %v4248
        %v5273 = vunpack.c.l.b16 %v4249
        %v5274 = vunpack.c.l.b16 %v4250
        %v5275 = vunpack.c.l.b16 %v4251
        %v5276 = vpack.c.b16 %v5245, %v5244
        %v5277 = vpack.c.b16 %v5247, %v5246
        %v5278 = vpack.c.b16 %v5249, %v5248
        %v5279 = vpack.c.b16 %v5251, %v5250
        %v5280 = vpack.c.b16 %v5253, %v5252
        %v5281 = vpack.c.b16 %v5255, %v5254
        %v5282 = vpack.c.b16 %v5257, %v5256
        %v5283 = vpack.c.b16 %v5259, %v5258
        %v5284 = vpack.c.b16 %v5261, %v5260
        %v5285 = vpack.c.b16 %v5263, %v5262
        %v5286 = vpack.c.b16 %v5265, %v5264
        %v5287 = vpack.c.b16 %v5267, %v5266
        %v5288 = vpack.c.b16 %v5269, %v5268
        %v5289 = vpack.c.b16 %v5271, %v5270
        %v5290 = vpack.c.b16 %v5273, %v5272
        %v5291 = vpack.c.b16 %v5275, %v5274
        %v5308 = vunpack.c.l.b16 %v4252
        %v5309 = vunpack.c.l.b16 %v4253
        %v5310 = vunpack.c.l.b16 %v4254
        %v5311 = vunpack.c.l.b16 %v4255
        %v5312 = vunpack.c.l.b16 %v4256
        %v5313 = vunpack.c.l.b16 %v4257
        %v5314 = vunpack.c.l.b16 %v4258
        %v5315 = vunpack.c.l.b16 %v4259
        %v5316 = vunpack.c.l.b16 %v4260
        %v5317 = vunpack.c.l.b16 %v4261
        %v5318 = vunpack.c.l.b16 %v4262
        %v5319 = vunpack.c.l.b16 %v4263
        %v5320 = vunpack.c.l.b16 %v4264
        %v5321 = vunpack.c.l.b16 %v4265
        %v5322 = vunpack.c.l.b16 %v4266
        %v5323 = vunpack.c.l.b16 %v4267
        %v5324 = vpack.c.b16 %v5308, %v5308
        %v5325 = vpack.c.b16 %v5309, %v5309
        %v5326 = vpack.c.b16 %v5310, %v5310
        %v5327 = vpack.c.b16 %v5311, %v5311
        %v5328 = vpack.c.b16 %v5312, %v5312
        %v5329 = vpack.c.b16 %v5313, %v5313
        %v5330 = vpack.c.b16 %v5314, %v5314
        %v5331 = vpack.c.b16 %v5315, %v5315
        %v5332 = vpack.c.b16 %v5316, %v5316
        %v5333 = vpack.c.b16 %v5317, %v5317
        %v5334 = vpack.c.b16 %v5318, %v5318
        %v5335 = vpack.c.b16 %v5319, %v5319
        %v5336 = vpack.c.b16 %v5320, %v5320
        %v5337 = vpack.c.b16 %v5321, %v5321
        %v5338 = vpack.c.b16 %v5322, %v5322
        %v5339 = vpack.c.b16 %v5323, %v5323
        %v5341 = vshrl.u32 %v5276, 16
        %v5343 = vshll.u32 %v5276, 16
        %v5345 = vrot.slane %v5343, 1
        %v5346 = vor.u32 %v5341, %v5345
        %v5348 = vshll.u32 %v5324, 16
        %v5350 = vrot.slane %v5348, 1
        %v5351 = vsel %vm1232, %v5346, %v5350
        %v5353 = vshrl.u32 %v5277, 16
        %v5355 = vshll.u32 %v5277, 16
        %v5357 = vrot.slane %v5355, 1
        %v5358 = vor.u32 %v5353, %v5357
        %v5360 = vshll.u32 %v5325, 16
        %v5362 = vrot.slane %v5360, 1
        %v5363 = vsel %vm1232, %v5358, %v5362
        %v5365 = vshrl.u32 %v5278, 16
        %v5367 = vshll.u32 %v5278, 16
        %v5369 = vrot.slane %v5367, 1
        %v5370 = vor.u32 %v5365, %v5369
        %v5372 = vshll.u32 %v5326, 16
        %v5374 = vrot.slane %v5372, 1
        %v5375 = vsel %vm1232, %v5370, %v5374
        %v5377 = vshrl.u32 %v5279, 16
        %v5379 = vshll.u32 %v5279, 16
        %v5381 = vrot.slane %v5379, 1
        %v5382 = vor.u32 %v5377, %v5381
        %v5384 = vshll.u32 %v5327, 16
        %v5386 = vrot.slane %v5384, 1
        %v5387 = vsel %vm1232, %v5382, %v5386
        %v5389 = vshrl.u32 %v5280, 16
        %v5391 = vshll.u32 %v5280, 16
        %v5393 = vrot.slane %v5391, 1
        %v5394 = vor.u32 %v5389, %v5393
        %v5396 = vshll.u32 %v5328, 16
        %v5398 = vrot.slane %v5396, 1
        %v5399 = vsel %vm1232, %v5394, %v5398
        %v5401 = vshrl.u32 %v5281, 16
        %v5403 = vshll.u32 %v5281, 16
        %v5405 = vrot.slane %v5403, 1
        %v5406 = vor.u32 %v5401, %v5405
        %v5408 = vshll.u32 %v5329, 16
        %v5410 = vrot.slane %v5408, 1
        %v5411 = vsel %vm1232, %v5406, %v5410
        %v5413 = vshrl.u32 %v5282, 16
        %v5415 = vshll.u32 %v5282, 16
        %v5417 = vrot.slane %v5415, 1
        %v5418 = vor.u32 %v5413, %v5417
        %v5420 = vshll.u32 %v5330, 16
        %v5422 = vrot.slane %v5420, 1
        %v5423 = vsel %vm1232, %v5418, %v5422
        %v5425 = vshrl.u32 %v5283, 16
        %v5427 = vshll.u32 %v5283, 16
        %v5429 = vrot.slane %v5427, 1
        %v5430 = vor.u32 %v5425, %v5429
        %v5432 = vshll.u32 %v5331, 16
        %v5434 = vrot.slane %v5432, 1
        %v5435 = vsel %vm1232, %v5430, %v5434
        %v5437 = vshrl.u32 %v5284, 16
        %v5439 = vshll.u32 %v5284, 16
        %v5441 = vrot.slane %v5439, 1
        %v5442 = vor.u32 %v5437, %v5441
        %v5444 = vshll.u32 %v5332, 16
        %v5446 = vrot.slane %v5444, 1
        %v5447 = vsel %vm1232, %v5442, %v5446
        %v5449 = vshrl.u32 %v5285, 16
        %v5451 = vshll.u32 %v5285, 16
        %v5453 = vrot.slane %v5451, 1
        %v5454 = vor.u32 %v5449, %v5453
        %v5456 = vshll.u32 %v5333, 16
        %v5458 = vrot.slane %v5456, 1
        %v5459 = vsel %vm1232, %v5454, %v5458
        %v5461 = vshrl.u32 %v5286, 16
        %v5463 = vshll.u32 %v5286, 16
        %v5465 = vrot.slane %v5463, 1
        %v5466 = vor.u32 %v5461, %v5465
        %v5468 = vshll.u32 %v5334, 16
        %v5470 = vrot.slane %v5468, 1
        %v5471 = vsel %vm1232, %v5466, %v5470
        %v5473 = vshrl.u32 %v5287, 16
        %v5475 = vshll.u32 %v5287, 16
        %v5477 = vrot.slane %v5475, 1
        %v5478 = vor.u32 %v5473, %v5477
        %v5480 = vshll.u32 %v5335, 16
        %v5482 = vrot.slane %v5480, 1
        %v5483 = vsel %vm1232, %v5478, %v5482
        %v5485 = vshrl.u32 %v5288, 16
        %v5487 = vshll.u32 %v5288, 16
        %v5489 = vrot.slane %v5487, 1
        %v5490 = vor.u32 %v5485, %v5489
        %v5492 = vshll.u32 %v5336, 16
        %v5494 = vrot.slane %v5492, 1
        %v5495 = vsel %vm1232, %v5490, %v5494
        %v5497 = vshrl.u32 %v5289, 16
        %v5499 = vshll.u32 %v5289, 16
        %v5501 = vrot.slane %v5499, 1
        %v5502 = vor.u32 %v5497, %v5501
        %v5504 = vshll.u32 %v5337, 16
        %v5506 = vrot.slane %v5504, 1
        %v5507 = vsel %vm1232, %v5502, %v5506
        %v5509 = vshrl.u32 %v5290, 16
        %v5511 = vshll.u32 %v5290, 16
        %v5513 = vrot.slane %v5511, 1
        %v5514 = vor.u32 %v5509, %v5513
        %v5516 = vshll.u32 %v5338, 16
        %v5518 = vrot.slane %v5516, 1
        %v5519 = vsel %vm1232, %v5514, %v5518
        %v5521 = vshrl.u32 %v5291, 16
        %v5523 = vshll.u32 %v5291, 16
        %v5525 = vrot.slane %v5523, 1
        %v5526 = vor.u32 %v5521, %v5525
        %v5528 = vshll.u32 %v5339, 16
        %v5530 = vrot.slane %v5528, 1
        %v5531 = vsel %vm1232, %v5526, %v5530
        %5532 = vrot.lane.b32.xlu0 %v5351, 64
        %v5533 = vpop.permute.xlu0 %5532
        %5534 = vrot.lane.b32.xlu0 %v5363, 64
        %v5535 = vpop.permute.xlu0 %5534
        %5536 = vrot.lane.b32.xlu0 %v5375, 64
        %v5537 = vpop.permute.xlu0 %5536
        %5538 = vrot.lane.b32.xlu0 %v5387, 64
        %v5539 = vpop.permute.xlu0 %5538
        %5540 = vrot.lane.b32.xlu0 %v5399, 64
        %v5541 = vpop.permute.xlu0 %5540
        %5542 = vrot.lane.b32.xlu0 %v5411, 64
        %v5543 = vpop.permute.xlu0 %5542
        %5544 = vrot.lane.b32.xlu0 %v5423, 64
        %v5545 = vpop.permute.xlu0 %5544
        %5546 = vrot.lane.b32.xlu0 %v5435, 64
        %v5547 = vpop.permute.xlu0 %5546
        %5548 = vrot.lane.b32.xlu0 %v5447, 64
        %v5549 = vpop.permute.xlu0 %5548
        %5550 = vrot.lane.b32.xlu0 %v5459, 64
        %v5551 = vpop.permute.xlu0 %5550
        %5552 = vrot.lane.b32.xlu0 %v5471, 64
        %v5553 = vpop.permute.xlu0 %5552
        %5554 = vrot.lane.b32.xlu0 %v5483, 64
        %v5555 = vpop.permute.xlu0 %5554
        %5556 = vrot.lane.b32.xlu0 %v5495, 64
        %v5557 = vpop.permute.xlu0 %5556
        %5558 = vrot.lane.b32.xlu0 %v5507, 64
        %v5559 = vpop.permute.xlu0 %5558
        %5560 = vrot.lane.b32.xlu0 %v5519, 64
        %v5561 = vpop.permute.xlu0 %5560
        %5562 = vrot.lane.b32.xlu0 %v5531, 64
        %v5563 = vpop.permute.xlu0 %5562
        %v5580 = vunpack.c.l.b16 %v4268
        %v5581 = vunpack.c.l.b16 %v4269
        %v5582 = vunpack.c.l.b16 %v4270
        %v5583 = vunpack.c.l.b16 %v4271
        %v5584 = vunpack.c.l.b16 %v4272
        %v5585 = vunpack.c.l.b16 %v4273
        %v5586 = vunpack.c.l.b16 %v4274
        %v5587 = vunpack.c.l.b16 %v4275
        %v5588 = vunpack.c.l.b16 %v4276
        %v5589 = vunpack.c.l.b16 %v4277
        %v5590 = vunpack.c.l.b16 %v4278
        %v5591 = vunpack.c.l.b16 %v4279
        %v5592 = vunpack.c.l.b16 %v4280
        %v5593 = vunpack.c.l.b16 %v4281
        %v5594 = vunpack.c.l.b16 %v4282
        %v5595 = vunpack.c.l.b16 %v4283
        %v5596 = vpack.c.b16 %v5245, %v5580
        %v5597 = vpack.c.b16 %v5247, %v5581
        %v5598 = vpack.c.b16 %v5249, %v5582
        %v5599 = vpack.c.b16 %v5251, %v5583
        %v5600 = vpack.c.b16 %v5253, %v5584
        %v5601 = vpack.c.b16 %v5255, %v5585
        %v5602 = vpack.c.b16 %v5257, %v5586
        %v5603 = vpack.c.b16 %v5259, %v5587
        %v5604 = vpack.c.b16 %v5261, %v5588
        %v5605 = vpack.c.b16 %v5263, %v5589
        %v5606 = vpack.c.b16 %v5265, %v5590
        %v5607 = vpack.c.b16 %v5267, %v5591
        %v5608 = vpack.c.b16 %v5269, %v5592
        %v5609 = vpack.c.b16 %v5271, %v5593
        %v5610 = vpack.c.b16 %v5273, %v5594
        %v5611 = vpack.c.b16 %v5275, %v5595
        %v5612 = vrot.slane %v5596, 1
        %v5613 = vrot.slane %v5324, 1
        %v5614 = vsel %vm1505, %v5612, %v5613
        %v5615 = vrot.slane %v5597, 1
        %v5616 = vrot.slane %v5325, 1
        %v5617 = vsel %vm1505, %v5615, %v5616
        %v5618 = vrot.slane %v5598, 1
        %v5619 = vrot.slane %v5326, 1
        %v5620 = vsel %vm1505, %v5618, %v5619
        %v5621 = vrot.slane %v5599, 1
        %v5622 = vrot.slane %v5327, 1
        %v5623 = vsel %vm1505, %v5621, %v5622
        %v5624 = vrot.slane %v5600, 1
        %v5625 = vrot.slane %v5328, 1
        %v5626 = vsel %vm1505, %v5624, %v5625
        %v5627 = vrot.slane %v5601, 1
        %v5628 = vrot.slane %v5329, 1
        %v5629 = vsel %vm1505, %v5627, %v5628
        %v5630 = vrot.slane %v5602, 1
        %v5631 = vrot.slane %v5330, 1
        %v5632 = vsel %vm1505, %v5630, %v5631
        %v5633 = vrot.slane %v5603, 1
        %v5634 = vrot.slane %v5331, 1
        %v5635 = vsel %vm1505, %v5633, %v5634
        %v5636 = vrot.slane %v5604, 1
        %v5637 = vrot.slane %v5332, 1
        %v5638 = vsel %vm1505, %v5636, %v5637
        %v5639 = vrot.slane %v5605, 1
        %v5640 = vrot.slane %v5333, 1
        %v5641 = vsel %vm1505, %v5639, %v5640
        %v5642 = vrot.slane %v5606, 1
        %v5643 = vrot.slane %v5334, 1
        %v5644 = vsel %vm1505, %v5642, %v5643
        %v5645 = vrot.slane %v5607, 1
        %v5646 = vrot.slane %v5335, 1
        %v5647 = vsel %vm1505, %v5645, %v5646
        %v5648 = vrot.slane %v5608, 1
        %v5649 = vrot.slane %v5336, 1
        %v5650 = vsel %vm1505, %v5648, %v5649
        %v5651 = vrot.slane %v5609, 1
        %v5652 = vrot.slane %v5337, 1
        %v5653 = vsel %vm1505, %v5651, %v5652
        %v5654 = vrot.slane %v5610, 1
        %v5655 = vrot.slane %v5338, 1
        %v5656 = vsel %vm1505, %v5654, %v5655
        %v5657 = vrot.slane %v5611, 1
        %v5658 = vrot.slane %v5339, 1
        %v5659 = vsel %vm1505, %v5657, %v5658
        %v5661 = vsel %vm2482, %v4348, %v4605
        %v5664 = vsel %vm2482, %v4349, %v4607
        %v5667 = vsel %vm2482, %v4350, %v4609
        %v5670 = vsel %vm2482, %v4351, %v4611
        %v5673 = vsel %vm2482, %v4352, %v4613
        %v5676 = vsel %vm2482, %v4353, %v4615
        %v5679 = vsel %vm2482, %v4354, %v4617
        %v5682 = vsel %vm2482, %v4355, %v4619
        %v5685 = vsel %vm2482, %v4356, %v4621
        %v5688 = vsel %vm2482, %v4357, %v4623
        %v5691 = vsel %vm2482, %v4358, %v4625
        %v5694 = vsel %vm2482, %v4359, %v4627
        %v5697 = vsel %vm2482, %v4360, %v4629
        %v5700 = vsel %vm2482, %v4361, %v4631
        %v5703 = vsel %vm2482, %v4362, %v4633
        %v5706 = vsel %vm2482, %v4363, %v4635
        %v5710 = vsel %vm2482, %v4686, %v4813
        %v5714 = vsel %vm2482, %v4689, %v4815
        %v5718 = vsel %vm2482, %v4692, %v4817
        %v5722 = vsel %vm2482, %v4695, %v4819
        %v5726 = vsel %vm2482, %v4698, %v4821
        %v5730 = vsel %vm2482, %v4701, %v4823
        %v5734 = vsel %vm2482, %v4704, %v4825
        %v5738 = vsel %vm2482, %v4707, %v4827
        %v5742 = vsel %vm2482, %v4710, %v4829
        %v5746 = vsel %vm2482, %v4713, %v4831
        %v5750 = vsel %vm2482, %v4716, %v4833
        %v5754 = vsel %vm2482, %v4719, %v4835
        %v5758 = vsel %vm2482, %v4722, %v4837
        %v5762 = vsel %vm2482, %v4725, %v4839
        %v5766 = vsel %vm2482, %v4728, %v4841
        %v5770 = vsel %vm2482, %v4731, %v4843
        %v5774 = vsel %vm2482, %v4903, %v5181
        %v5778 = vsel %vm2482, %v4915, %v5183
        %v5782 = vsel %vm2482, %v4927, %v5185
        %v5786 = vsel %vm2482, %v4939, %v5187
        %v5790 = vsel %vm2482, %v4951, %v5189
        %v5794 = vsel %vm2482, %v4963, %v5191
        %v5798 = vsel %vm2482, %v4975, %v5193
        %v5802 = vsel %vm2482, %v4987, %v5195
        %v5806 = vsel %vm2482, %v4999, %v5197
        %v5810 = vsel %vm2482, %v5011, %v5199
        %v5814 = vsel %vm2482, %v5023, %v5201
        %v5818 = vsel %vm2482, %v5035, %v5203
        %v5822 = vsel %vm2482, %v5047, %v5205
        %v5826 = vsel %vm2482, %v5059, %v5207
        %v5830 = vsel %vm2482, %v5071, %v5209
        %v5834 = vsel %vm2482, %v5083, %v5211
        %v5837 = vsel %vm2482, %v5276, %v5533
        %v5840 = vsel %vm2482, %v5277, %v5535
        %v5843 = vsel %vm2482, %v5278, %v5537
        %v5846 = vsel %vm2482, %v5279, %v5539
        %v5849 = vsel %vm2482, %v5280, %v5541
        %v5852 = vsel %vm2482, %v5281, %v5543
        %v5855 = vsel %vm2482, %v5282, %v5545
        %v5858 = vsel %vm2482, %v5283, %v5547
        %v5861 = vsel %vm2482, %v5284, %v5549
        %v5864 = vsel %vm2482, %v5285, %v5551
        %v5867 = vsel %vm2482, %v5286, %v5553
        %v5870 = vsel %vm2482, %v5287, %v5555
        %v5873 = vsel %vm2482, %v5288, %v5557
        %v5876 = vsel %vm2482, %v5289, %v5559
        %v5879 = vsel %vm2482, %v5290, %v5561
        %v5882 = vsel %vm2482, %v5291, %v5563
        %v5884 = vld [vmem:[%s3] sm:$0xf]
        %v5885 = vld [vmem:[%s3 + $0x4] sm:$0xf]
        %v5886 = vld [vmem:[%s3 + $0x8] sm:$0xf]
        %v5887 = vld [vmem:[%s3 + $0xc] sm:$0xf]
        %v5888 = vld [vmem:[%s3 + $0x10] sm:$0xf]
        %v5889 = vld [vmem:[%s3 + $0x14] sm:$0xf]
        %v5890 = vld [vmem:[%s3 + $0x18] sm:$0xf]
        %v5891 = vld [vmem:[%s3 + $0x1c] sm:$0xf]
        %v5892 = vld [vmem:[%s3 + $0x20] sm:$0xf]
        %v5893 = vld [vmem:[%s3 + $0x24] sm:$0xf]
        %v5894 = vld [vmem:[%s3 + $0x28] sm:$0xf]
        %v5895 = vld [vmem:[%s3 + $0x2c] sm:$0xf]
        %v5896 = vld [vmem:[%s3 + $0x30] sm:$0xf]
        %v5897 = vld [vmem:[%s3 + $0x34] sm:$0xf]
        %v5898 = vld [vmem:[%s3 + $0x38] sm:$0xf]
        %v5899 = vld [vmem:[%s3 + $0x3c] sm:$0xf]
        %v5900 = vld [vmem:[%s3 + $0x40] sm:$0xf]
        %v5901 = vld [vmem:[%s3 + $0x44] sm:$0xf]
        %v5902 = vld [vmem:[%s3 + $0x48] sm:$0xf]
        %v5903 = vld [vmem:[%s3 + $0x4c] sm:$0xf]
        %v5904 = vld [vmem:[%s3 + $0x50] sm:$0xf]
        %v5905 = vld [vmem:[%s3 + $0x54] sm:$0xf]
        %v5906 = vld [vmem:[%s3 + $0x58] sm:$0xf]
        %v5907 = vld [vmem:[%s3 + $0x5c] sm:$0xf]
        %v5908 = vld [vmem:[%s3 + $0x60] sm:$0xf]
        %v5909 = vld [vmem:[%s3 + $0x64] sm:$0xf]
        %v5910 = vld [vmem:[%s3 + $0x68] sm:$0xf]
        %v5911 = vld [vmem:[%s3 + $0x6c] sm:$0xf]
        %v5912 = vld [vmem:[%s3 + $0x70] sm:$0xf]
        %v5913 = vld [vmem:[%s3 + $0x74] sm:$0xf]
        %v5914 = vld [vmem:[%s3 + $0x78] sm:$0xf]
        %v5915 = vld [vmem:[%s3 + $0x7c] sm:$0xf]
        %v5916 = vld [vmem:[%s3 + $0x80] sm:$0xf]
        %v5917 = vld [vmem:[%s3 + $0x84] sm:$0xf]
        %v5918 = vld [vmem:[%s3 + $0x88] sm:$0xf]
        %v5919 = vld [vmem:[%s3 + $0x8c] sm:$0xf]
        %v5920 = vld [vmem:[%s3 + $0x90] sm:$0xf]
        %v5921 = vld [vmem:[%s3 + $0x94] sm:$0xf]
        %v5922 = vld [vmem:[%s3 + $0x98] sm:$0xf]
        %v5923 = vld [vmem:[%s3 + $0x9c] sm:$0xf]
        %v5924 = vld [vmem:[%s3 + $0xa0] sm:$0xf]
        %v5925 = vld [vmem:[%s3 + $0xa4] sm:$0xf]
        %v5926 = vld [vmem:[%s3 + $0xa8] sm:$0xf]
        %v5927 = vld [vmem:[%s3 + $0xac] sm:$0xf]
        %v5928 = vld [vmem:[%s3 + $0xb0] sm:$0xf]
        %v5929 = vld [vmem:[%s3 + $0xb4] sm:$0xf]
        %v5930 = vld [vmem:[%s3 + $0xb8] sm:$0xf]
        %v5931 = vld [vmem:[%s3 + $0xbc] sm:$0xf]
        %v5932 = vld [vmem:[%s3 + $0xc0] sm:$0xf]
        %v5933 = vld [vmem:[%s3 + $0xc4] sm:$0xf]
        %v5934 = vld [vmem:[%s3 + $0xc8] sm:$0xf]
        %v5935 = vld [vmem:[%s3 + $0xcc] sm:$0xf]
        %v5936 = vld [vmem:[%s3 + $0xd0] sm:$0xf]
        %v5937 = vld [vmem:[%s3 + $0xd4] sm:$0xf]
        %v5938 = vld [vmem:[%s3 + $0xd8] sm:$0xf]
        %v5939 = vld [vmem:[%s3 + $0xdc] sm:$0xf]
        %v5940 = vld [vmem:[%s3 + $0xe0] sm:$0xf]
        %v5941 = vld [vmem:[%s3 + $0xe4] sm:$0xf]
        %v5942 = vld [vmem:[%s3 + $0xe8] sm:$0xf]
        %v5943 = vld [vmem:[%s3 + $0xec] sm:$0xf]
        %v5944 = vld [vmem:[%s3 + $0xf0] sm:$0xf]
        %v5945 = vld [vmem:[%s3 + $0xf4] sm:$0xf]
        %v5946 = vld [vmem:[%s3 + $0xf8] sm:$0xf]
        %v5947 = vld [vmem:[%s3 + $0xfc] sm:$0xf]
        %v5948 = vld [vmem:[%s3 + $0x100] sm:$0xf]
        %v5949 = vld [vmem:[%s3 + $0x104] sm:$0xf]
        %v5950 = vld [vmem:[%s3 + $0x108] sm:$0xf]
        %v5951 = vld [vmem:[%s3 + $0x10c] sm:$0xf]
        %v5952 = vld [vmem:[%s3 + $0x110] sm:$0xf]
        %v5953 = vld [vmem:[%s3 + $0x114] sm:$0xf]
        %v5954 = vld [vmem:[%s3 + $0x118] sm:$0xf]
        %v5955 = vld [vmem:[%s3 + $0x11c] sm:$0xf]
        %v5956 = vld [vmem:[%s4] sm:$0x1]
        %v5958 = vlaneseq
        %v5959 = vshrl.u32 %v5958, 7
        %v5960 = vsub.s32 0, %v5959
        %v5961 = vrot.slane %v5956, %v5960
        %v6035 = vunpack.c.l.b16 %v5884
        %v6036 = vunpack.c.l.b16 %v5885
        %v6037 = vunpack.c.l.b16 %v5886
        %v6038 = vunpack.c.l.b16 %v5887
        %v6039 = vunpack.c.l.b16 %v5888
        %v6040 = vunpack.c.l.b16 %v5889
        %v6041 = vunpack.c.l.b16 %v5890
        %v6042 = vunpack.c.l.b16 %v5891
        %v6043 = vunpack.c.l.b16 %v5892
        %v6044 = vunpack.c.l.b16 %v5893
        %v6045 = vunpack.c.l.b16 %v5894
        %v6046 = vunpack.c.l.b16 %v5895
        %v6047 = vunpack.c.l.b16 %v5896
        %v6048 = vunpack.c.l.b16 %v5897
        %v6049 = vunpack.c.l.b16 %v5898
        %v6050 = vunpack.c.l.b16 %v5899
        %v6051 = vunpack.c.l.b16 %v5900
        %v6052 = vunpack.c.l.b16 %v5901
        %v6053 = vunpack.c.l.b16 %v5902
        %v6054 = vunpack.c.l.b16 %v5903
        %v6055 = vunpack.c.l.b16 %v5904
        %v6056 = vunpack.c.l.b16 %v5905
        %v6057 = vunpack.c.l.b16 %v5906
        %v6058 = vunpack.c.l.b16 %v5907
        %v6059 = vunpack.c.l.b16 %v5908
        %v6060 = vunpack.c.l.b16 %v5909
        %v6061 = vunpack.c.l.b16 %v5910
        %v6062 = vunpack.c.l.b16 %v5911
        %v6063 = vunpack.c.l.b16 %v5912
        %v6064 = vunpack.c.l.b16 %v5913
        %v6065 = vunpack.c.l.b16 %v5914
        %v6066 = vunpack.c.l.b16 %v5915
        %v6067 = vunpack.c.l.b16 %v5916
        %v6068 = vunpack.c.l.b16 %v5917
        %v6069 = vunpack.c.l.b16 %v5918
        %v6070 = vunpack.c.l.b16 %v5919
        %v6071 = vunpack.c.l.b16 %v5920
        %v6072 = vunpack.c.l.b16 %v5921
        %v6073 = vunpack.c.l.b16 %v5922
        %v6074 = vunpack.c.l.b16 %v5923
        %v6075 = vunpack.c.l.b16 %v5924
        %v6076 = vunpack.c.l.b16 %v5925
        %v6077 = vunpack.c.l.b16 %v5926
        %v6078 = vunpack.c.l.b16 %v5927
        %v6079 = vunpack.c.l.b16 %v5928
        %v6080 = vunpack.c.l.b16 %v5929
        %v6081 = vunpack.c.l.b16 %v5930
        %v6082 = vunpack.c.l.b16 %v5931
        %v6083 = vunpack.c.l.b16 %v5932
        %v6084 = vunpack.c.l.b16 %v5933
        %v6085 = vunpack.c.l.b16 %v5934
        %v6086 = vunpack.c.l.b16 %v5935
        %v6087 = vunpack.c.l.b16 %v5936
        %v6088 = vunpack.c.l.b16 %v5937
        %v6089 = vunpack.c.l.b16 %v5938
        %v6090 = vunpack.c.l.b16 %v5939
        %v6091 = vunpack.c.l.b16 %v5940
        %v6092 = vunpack.c.l.b16 %v5941
        %v6093 = vunpack.c.l.b16 %v5942
        %v6094 = vunpack.c.l.b16 %v5943
        %v6095 = vunpack.c.l.b16 %v5944
        %v6096 = vunpack.c.l.b16 %v5945
        %v6097 = vunpack.c.l.b16 %v5946
        %v6098 = vunpack.c.l.b16 %v5947
        %v6099 = vunpack.c.l.b16 %v5948
        %v6100 = vunpack.c.l.b16 %v5949
        %v6101 = vunpack.c.l.b16 %v5950
        %v6102 = vunpack.c.l.b16 %v5951
        %v6103 = vunpack.c.l.b16 %v5952
        %v6104 = vunpack.c.l.b16 %v5953
        %v6105 = vunpack.c.l.b16 %v5954
        %v6106 = vunpack.c.l.b16 %v5955
        %v6107 = vpack.c.b16 %v6036, %v6035
        %v6108 = vpack.c.b16 %v6038, %v6037
        %v6109 = vpack.c.b16 %v6040, %v6039
        %v6110 = vpack.c.b16 %v6042, %v6041
        %v6111 = vpack.c.b16 %v6044, %v6043
        %v6112 = vpack.c.b16 %v6046, %v6045
        %v6113 = vpack.c.b16 %v6048, %v6047
        %v6114 = vpack.c.b16 %v6050, %v6049
        %v6115 = vpack.c.b16 %v6052, %v6051
        %v6116 = vpack.c.b16 %v6054, %v6053
        %v6117 = vpack.c.b16 %v6056, %v6055
        %v6118 = vpack.c.b16 %v6058, %v6057
        %v6119 = vpack.c.b16 %v6060, %v6059
        %v6120 = vpack.c.b16 %v6062, %v6061
        %v6121 = vpack.c.b16 %v6064, %v6063
        %v6122 = vpack.c.b16 %v6066, %v6065
        %v6123 = vpack.c.b16 %v6068, %v6067
        %v6124 = vpack.c.b16 %v6070, %v6069
        %v6125 = vpack.c.b16 %v6072, %v6071
        %v6126 = vpack.c.b16 %v6074, %v6073
        %v6127 = vpack.c.b16 %v6076, %v6075
        %v6128 = vpack.c.b16 %v6078, %v6077
        %v6129 = vpack.c.b16 %v6080, %v6079
        %v6130 = vpack.c.b16 %v6082, %v6081
        %v6131 = vpack.c.b16 %v6084, %v6083
        %v6132 = vpack.c.b16 %v6086, %v6085
        %v6133 = vpack.c.b16 %v6088, %v6087
        %v6134 = vpack.c.b16 %v6090, %v6089
        %v6135 = vpack.c.b16 %v6092, %v6091
        %v6136 = vpack.c.b16 %v6094, %v6093
        %v6137 = vpack.c.b16 %v6096, %v6095
        %v6138 = vpack.c.b16 %v6098, %v6097
        %v6139 = vpack.c.b16 %v6100, %v6099
        %v6140 = vpack.c.b16 %v6102, %v6101
        %v6141 = vpack.c.b16 %v6104, %v6103
        %v6142 = vpack.c.b16 %v6106, %v6105
        %v6180 = vsel %vm2482, %v5614, 0
        %v6183 = vsel %vm2482, %v5617, 0
        %v6186 = vsel %vm2482, %v5620, 0
        %v6189 = vsel %vm2482, %v5623, 0
        %v6192 = vsel %vm2482, %v5626, 0
        %v6195 = vsel %vm2482, %v5629, 0
        %v6198 = vsel %vm2482, %v5632, 0
        %v6201 = vsel %vm2482, %v5635, 0
        %v6204 = vsel %vm2482, %v5638, 0
        %v6207 = vsel %vm2482, %v5641, 0
        %v6210 = vsel %vm2482, %v5644, 0
        %v6213 = vsel %vm2482, %v5647, 0
        %v6216 = vsel %vm2482, %v5650, 0
        %v6219 = vsel %vm2482, %v5653, 0
        %v6222 = vsel %vm2482, %v5656, 0
        %v6225 = vsel %vm2482, %v5659, 0
        %6227 = vmatprep.subr.bf16.mxu0 0
        %6228 = vmatpush1.bf16.msra.mxu0 %v6107
        %6229 = vmatprep.subr.bf16.mxu0 0
        %6230 = vmatpush1.bf16.msra.mxu0 %v6108
        %6231 = vmatprep.subr.bf16.mxu0 0
        %6232 = vmatpush1.bf16.msra.mxu0 %v6109
        %6233 = vmatprep.subr.bf16.mxu0 0
        %6234 = vmatpush1.bf16.msra.mxu0 %v6110
        %6235 = vmatprep.subr.bf16.mxu0 0
        %6236 = vmatpush1.bf16.msra.mxu0 %v6111
        %6237 = vmatprep.subr.bf16.mxu0 0
        %6238 = vmatpush1.bf16.msra.mxu0 %v6112
        %6239 = vmatprep.subr.bf16.mxu0 0
        %6240 = vmatpush1.bf16.msra.mxu0 %v6113
        %6241 = vmatprep.subr.bf16.mxu0 0
        %6242 = vmatpush1.bf16.msra.mxu0 %v6114
        %6243 = vmatprep.subr.bf16.mxu0 0
        %6244 = vmatpush1.bf16.msra.mxu0 %v6115
        %6245 = vmatprep.subr.bf16.mxu0 0
        %6246 = vmatpush1.bf16.msra.mxu0 %v6116
        %6247 = vmatprep.subr.bf16.mxu0 0
        %6248 = vmatpush1.bf16.msra.mxu0 %v6117
        %6249 = vmatprep.subr.bf16.mxu0 0
        %6250 = vmatpush1.bf16.msra.mxu0 %v6118
        %6251 = vmatprep.subr.bf16.mxu0 0
        %6252 = vmatpush1.bf16.msra.mxu0 %v6119
        %6253 = vmatprep.subr.bf16.mxu0 0
        %6254 = vmatpush1.bf16.msra.mxu0 %v6120
        %6255 = vmatprep.subr.bf16.mxu0 0
        %6256 = vmatpush1.bf16.msra.mxu0 %v6121
        %6257 = vmatprep.subr.bf16.mxu0 0
        %6258 = vmatpush1.bf16.msra.mxu0 %v6122
        %6259 = vmatprep.mubr.bf16.mxu0 %v5710
        %6260 = vmatmul.mubr.bf16.gmra.mrb[0].mxu0 %v5661
        %v6261 = vpop.f32.mrb[0].mxu0
        %v6262 = vadd.f32 %v5961, %v6261
        %v6263 = vpop.f32.mrb[0].mxu0
        %v6264 = vpop.f32.mrb[0].mxu0
        %v6265 = vadd.f32 %v5961, %v6264
        %v6266 = vpop.f32.mrb[0].mxu0
        %6267 = vmatprep.mubr.bf16.mxu0 %v5714
        %6268 = vmatmul.mubr.bf16.gmra.mrb[0].mxu0 %v5664
        %v6269 = vpop.f32.mrb[0].mxu0
        %v6270 = vadd.f32 %v5961, %v6269
        %v6271 = vpop.f32.mrb[0].mxu0
        %v6272 = vpop.f32.mrb[0].mxu0
        %v6273 = vadd.f32 %v5961, %v6272
        %v6274 = vpop.f32.mrb[0].mxu0
        %6275 = vmatprep.mubr.bf16.mxu0 %v5718
        %6276 = vmatmul.mubr.bf16.gmra.mrb[0].mxu0 %v5667
        %v6277 = vpop.f32.mrb[0].mxu0
        %v6278 = vadd.f32 %v5961, %v6277
        %v6279 = vpop.f32.mrb[0].mxu0
        %v6280 = vpop.f32.mrb[0].mxu0
        %v6281 = vadd.f32 %v5961, %v6280
        %v6282 = vpop.f32.mrb[0].mxu0
        %6283 = vmatprep.mubr.bf16.mxu0 %v5722
        %6284 = vmatmul.mubr.bf16.gmra.mrb[0].mxu0 %v5670
        %v6285 = vpop.f32.mrb[0].mxu0
        %v6286 = vadd.f32 %v5961, %v6285
        %v6287 = vpop.f32.mrb[0].mxu0
        %v6288 = vpop.f32.mrb[0].mxu0
        %v6289 = vadd.f32 %v5961, %v6288
        %v6290 = vpop.f32.mrb[0].mxu0
        %6291 = vmatprep.mubr.bf16.mxu0 %v5726
        %6292 = vmatmul.mubr.bf16.gmra.mrb[0].mxu0 %v5673
        %v6293 = vpop.f32.mrb[0].mxu0
        %v6294 = vadd.f32 %v5961, %v6293
        %v6295 = vpop.f32.mrb[0].mxu0
        %v6296 = vpop.f32.mrb[0].mxu0
        %v6297 = vadd.f32 %v5961, %v6296
        %v6298 = vpop.f32.mrb[0].mxu0
        %6299 = vmatprep.mubr.bf16.mxu0 %v5730
        %6300 = vmatmul.mubr.bf16.gmra.mrb[0].mxu0 %v5676
        %v6301 = vpop.f32.mrb[0].mxu0
        %v6302 = vadd.f32 %v5961, %v6301
        %v6303 = vpop.f32.mrb[0].mxu0
        %v6304 = vpop.f32.mrb[0].mxu0
        %v6305 = vadd.f32 %v5961, %v6304
        %v6306 = vpop.f32.mrb[0].mxu0
        %6307 = vmatprep.mubr.bf16.mxu0 %v5734
        %6308 = vmatmul.mubr.bf16.gmra.mrb[0].mxu0 %v5679
        %v6309 = vpop.f32.mrb[0].mxu0
        %v6310 = vadd.f32 %v5961, %v6309
        %v6311 = vpop.f32.mrb[0].mxu0
        %v6312 = vpop.f32.mrb[0].mxu0
        %v6313 = vadd.f32 %v5961, %v6312
        %v6314 = vpop.f32.mrb[0].mxu0
        %6315 = vmatprep.mubr.bf16.mxu0 %v5738
        %6316 = vmatmul.mubr.bf16.gmra.mrb[0].mxu0 %v5682
        %v6317 = vpop.f32.mrb[0].mxu0
        %v6318 = vadd.f32 %v5961, %v6317
        %v6319 = vpop.f32.mrb[0].mxu0
        %v6320 = vpop.f32.mrb[0].mxu0
        %v6321 = vadd.f32 %v5961, %v6320
        %v6322 = vpop.f32.mrb[0].mxu0
        %6323 = vmatprep.mubr.bf16.mxu0 %v5742
        %6324 = vmatmul.mubr.bf16.gmra.mrb[0].mxu0 %v5685
        %v6325 = vpop.f32.mrb[0].mxu0
        %v6326 = vadd.f32 %v5961, %v6325
        %v6327 = vpop.f32.mrb[0].mxu0
        %v6328 = vpop.f32.mrb[0].mxu0
        %v6329 = vadd.f32 %v5961, %v6328
        %v6330 = vpop.f32.mrb[0].mxu0
        %6331 = vmatprep.mubr.bf16.mxu0 %v5746
        %6332 = vmatmul.mubr.bf16.gmra.mrb[0].mxu0 %v5688
        %v6333 = vpop.f32.mrb[0].mxu0
        %v6334 = vadd.f32 %v5961, %v6333
        %v6335 = vpop.f32.mrb[0].mxu0
        %v6336 = vpop.f32.mrb[0].mxu0
        %v6337 = vadd.f32 %v5961, %v6336
        %v6338 = vpop.f32.mrb[0].mxu0
        %6339 = vmatprep.mubr.bf16.mxu0 %v5750
        %6340 = vmatmul.mubr.bf16.gmra.mrb[0].mxu0 %v5691
        %v6341 = vpop.f32.mrb[0].mxu0
        %v6342 = vadd.f32 %v5961, %v6341
        %v6343 = vpop.f32.mrb[0].mxu0
        %v6344 = vpop.f32.mrb[0].mxu0
        %v6345 = vadd.f32 %v5961, %v6344
        %v6346 = vpop.f32.mrb[0].mxu0
        %6347 = vmatprep.mubr.bf16.mxu0 %v5754
        %6348 = vmatmul.mubr.bf16.gmra.mrb[0].mxu0 %v5694
        %v6349 = vpop.f32.mrb[0].mxu0
        %v6350 = vadd.f32 %v5961, %v6349
        %v6351 = vpop.f32.mrb[0].mxu0
        %v6352 = vpop.f32.mrb[0].mxu0
        %v6353 = vadd.f32 %v5961, %v6352
        %v6354 = vpop.f32.mrb[0].mxu0
        %6355 = vmatprep.mubr.bf16.mxu0 %v5758
        %6356 = vmatmul.mubr.bf16.gmra.mrb[0].mxu0 %v5697
        %v6357 = vpop.f32.mrb[0].mxu0
        %v6358 = vadd.f32 %v5961, %v6357
        %v6359 = vpop.f32.mrb[0].mxu0
        %v6360 = vpop.f32.mrb[0].mxu0
        %v6361 = vadd.f32 %v5961, %v6360
        %v6362 = vpop.f32.mrb[0].mxu0
        %6363 = vmatprep.mubr.bf16.mxu0 %v5762
        %6364 = vmatmul.mubr.bf16.gmra.mrb[0].mxu0 %v5700
        %v6365 = vpop.f32.mrb[0].mxu0
        %v6366 = vadd.f32 %v5961, %v6365
        %v6367 = vpop.f32.mrb[0].mxu0
        %v6368 = vpop.f32.mrb[0].mxu0
        %v6369 = vadd.f32 %v5961, %v6368
        %v6370 = vpop.f32.mrb[0].mxu0
        %6371 = vmatprep.mubr.bf16.mxu0 %v5766
        %6372 = vmatmul.mubr.bf16.gmra.mrb[0].mxu0 %v5703
        %v6373 = vpop.f32.mrb[0].mxu0
        %v6374 = vadd.f32 %v5961, %v6373
        %v6375 = vpop.f32.mrb[0].mxu0
        %v6376 = vpop.f32.mrb[0].mxu0
        %v6377 = vadd.f32 %v5961, %v6376
        %v6378 = vpop.f32.mrb[0].mxu0
        %6379 = vmatprep.mubr.bf16.mxu0 %v5770
        %6380 = vmatmul.mubr.bf16.gmra.mrb[0].mxu0 %v5706
        %v6381 = vpop.f32.mrb[0].mxu0
        %v6382 = vadd.f32 %v5961, %v6381
        %v6383 = vpop.f32.mrb[0].mxu0
        %v6384 = vpop.f32.mrb[0].mxu0
        %v6385 = vadd.f32 %v5961, %v6384
        %v6386 = vpop.f32.mrb[0].mxu0
        %6387 = vdwg.mxu0
        %6388 = vmatprep.subr.bf16.mxu0 0
        %6389 = vmatpush1.bf16.msra.mxu0 %v6123
        %6390 = vmatprep.subr.bf16.mxu0 0
        %6391 = vmatpush1.bf16.msra.mxu0 %v6124
        %6392 = vmatprep.subr.bf16.mxu0 0
        %6393 = vmatpush1.bf16.msra.mxu0 %v6125
        %6394 = vmatprep.subr.bf16.mxu0 0
        %6395 = vmatpush1.bf16.msra.mxu0 %v6126
        %6396 = vmatprep.subr.bf16.mxu0 0
        %6397 = vmatpush1.bf16.msra.mxu0 %v6127
        %6398 = vmatprep.subr.bf16.mxu0 0
        %6399 = vmatpush1.bf16.msra.mxu0 %v6128
        %6400 = vmatprep.subr.bf16.mxu0 0
        %6401 = vmatpush1.bf16.msra.mxu0 %v6129
        %6402 = vmatprep.subr.bf16.mxu0 0
        %6403 = vmatpush1.bf16.msra.mxu0 %v6130
        %6404 = vmatprep.subr.bf16.mxu0 0
        %6405 = vmatpush1.bf16.msra.mxu0 %v6131
        %6406 = vmatprep.subr.bf16.mxu0 0
        %6407 = vmatpush1.bf16.msra.mxu0 %v6132
        %6408 = vmatprep.subr.bf16.mxu0 0
        %6409 = vmatpush1.bf16.msra.mxu0 %v6133
        %6410 = vmatprep.subr.bf16.mxu0 0
        %6411 = vmatpush1.bf16.msra.mxu0 %v6134
        %6412 = vmatprep.subr.bf16.mxu0 0
        %6413 = vmatpush1.bf16.msra.mxu0 %v6135
        %6414 = vmatprep.subr.bf16.mxu0 0
        %6415 = vmatpush1.bf16.msra.mxu0 %v6136
        %6416 = vmatprep.subr.bf16.mxu0 0
        %6417 = vmatpush1.bf16.msra.mxu0 %v6137
        %6418 = vmatprep.subr.bf16.mxu0 0
        %6419 = vmatpush1.bf16.msra.mxu0 %v6138
        %6420 = vmatprep.mubr.bf16.mxu0 %v5837
        %6421 = vmatmul.mubr.bf16.gmra.mrb[0].mxu0 %v5774
        %v6422 = vpop.f32.mrb[0].mxu0
        %v6423 = vadd.f32 %v6262, %v6422
        %v6424 = vpop.f32.mrb[0].mxu0
        %v6425 = vpop.f32.mrb[0].mxu0
        %v6426 = vadd.f32 %v6265, %v6425
        %v6427 = vpop.f32.mrb[0].mxu0
        %6428 = vmatprep.mubr.bf16.mxu0 %v5840
        %6429 = vmatmul.mubr.bf16.gmra.mrb[0].mxu0 %v5778
        %v6430 = vpop.f32.mrb[0].mxu0
        %v6431 = vadd.f32 %v6270, %v6430
        %v6432 = vpop.f32.mrb[0].mxu0
        %v6433 = vpop.f32.mrb[0].mxu0
        %v6434 = vadd.f32 %v6273, %v6433
        %v6435 = vpop.f32.mrb[0].mxu0
        %6436 = vmatprep.mubr.bf16.mxu0 %v5843
        %6437 = vmatmul.mubr.bf16.gmra.mrb[0].mxu0 %v5782
        %v6438 = vpop.f32.mrb[0].mxu0
        %v6439 = vadd.f32 %v6278, %v6438
        %v6440 = vpop.f32.mrb[0].mxu0
        %v6441 = vpop.f32.mrb[0].mxu0
        %v6442 = vadd.f32 %v6281, %v6441
        %v6443 = vpop.f32.mrb[0].mxu0
        %6444 = vmatprep.mubr.bf16.mxu0 %v5846
        %6445 = vmatmul.mubr.bf16.gmra.mrb[0].mxu0 %v5786
        %v6446 = vpop.f32.mrb[0].mxu0
        %v6447 = vadd.f32 %v6286, %v6446
        %v6448 = vpop.f32.mrb[0].mxu0
        %v6449 = vpop.f32.mrb[0].mxu0
        %v6450 = vadd.f32 %v6289, %v6449
        %v6451 = vpop.f32.mrb[0].mxu0
        %6452 = vmatprep.mubr.bf16.mxu0 %v5849
        %6453 = vmatmul.mubr.bf16.gmra.mrb[0].mxu0 %v5790
        %v6454 = vpop.f32.mrb[0].mxu0
        %v6455 = vadd.f32 %v6294, %v6454
        %v6456 = vpop.f32.mrb[0].mxu0
        %v6457 = vpop.f32.mrb[0].mxu0
        %v6458 = vadd.f32 %v6297, %v6457
        %v6459 = vpop.f32.mrb[0].mxu0
        %6460 = vmatprep.mubr.bf16.mxu0 %v5852
        %6461 = vmatmul.mubr.bf16.gmra.mrb[0].mxu0 %v5794
        %v6462 = vpop.f32.mrb[0].mxu0
        %v6463 = vadd.f32 %v6302, %v6462
        %v6464 = vpop.f32.mrb[0].mxu0
        %v6465 = vpop.f32.mrb[0].mxu0
        %v6466 = vadd.f32 %v6305, %v6465
        %v6467 = vpop.f32.mrb[0].mxu0
        %6468 = vmatprep.mubr.bf16.mxu0 %v5855
        %6469 = vmatmul.mubr.bf16.gmra.mrb[0].mxu0 %v5798
        %v6470 = vpop.f32.mrb[0].mxu0
        %v6471 = vadd.f32 %v6310, %v6470
        %v6472 = vpop.f32.mrb[0].mxu0
        %v6473 = vpop.f32.mrb[0].mxu0
        %v6474 = vadd.f32 %v6313, %v6473
        %v6475 = vpop.f32.mrb[0].mxu0
        %6476 = vmatprep.mubr.bf16.mxu0 %v5858
        %6477 = vmatmul.mubr.bf16.gmra.mrb[0].mxu0 %v5802
        %v6478 = vpop.f32.mrb[0].mxu0
        %v6479 = vadd.f32 %v6318, %v6478
        %v6480 = vpop.f32.mrb[0].mxu0
        %v6481 = vpop.f32.mrb[0].mxu0
        %v6482 = vadd.f32 %v6321, %v6481
        %v6483 = vpop.f32.mrb[0].mxu0
        %6484 = vmatprep.mubr.bf16.mxu0 %v5861
        %6485 = vmatmul.mubr.bf16.gmra.mrb[0].mxu0 %v5806
        %v6486 = vpop.f32.mrb[0].mxu0
        %v6487 = vadd.f32 %v6326, %v6486
        %v6488 = vpop.f32.mrb[0].mxu0
        %v6489 = vpop.f32.mrb[0].mxu0
        %v6490 = vadd.f32 %v6329, %v6489
        %v6491 = vpop.f32.mrb[0].mxu0
        %6492 = vmatprep.mubr.bf16.mxu0 %v5864
        %6493 = vmatmul.mubr.bf16.gmra.mrb[0].mxu0 %v5810
        %v6494 = vpop.f32.mrb[0].mxu0
        %v6495 = vadd.f32 %v6334, %v6494
        %v6496 = vpop.f32.mrb[0].mxu0
        %v6497 = vpop.f32.mrb[0].mxu0
        %v6498 = vadd.f32 %v6337, %v6497
        %v6499 = vpop.f32.mrb[0].mxu0
        %6500 = vmatprep.mubr.bf16.mxu0 %v5867
        %6501 = vmatmul.mubr.bf16.gmra.mrb[0].mxu0 %v5814
        %v6502 = vpop.f32.mrb[0].mxu0
        %v6503 = vadd.f32 %v6342, %v6502
        %v6504 = vpop.f32.mrb[0].mxu0
        %v6505 = vpop.f32.mrb[0].mxu0
        %v6506 = vadd.f32 %v6345, %v6505
        %v6507 = vpop.f32.mrb[0].mxu0
        %6508 = vmatprep.mubr.bf16.mxu0 %v5870
        %6509 = vmatmul.mubr.bf16.gmra.mrb[0].mxu0 %v5818
        %v6510 = vpop.f32.mrb[0].mxu0
        %v6511 = vadd.f32 %v6350, %v6510
        %v6512 = vpop.f32.mrb[0].mxu0
        %v6513 = vpop.f32.mrb[0].mxu0
        %v6514 = vadd.f32 %v6353, %v6513
        %v6515 = vpop.f32.mrb[0].mxu0
        %6516 = vmatprep.mubr.bf16.mxu0 %v5873
        %6517 = vmatmul.mubr.bf16.gmra.mrb[0].mxu0 %v5822
        %v6518 = vpop.f32.mrb[0].mxu0
        %v6519 = vadd.f32 %v6358, %v6518
        %v6520 = vpop.f32.mrb[0].mxu0
        %v6521 = vpop.f32.mrb[0].mxu0
        %v6522 = vadd.f32 %v6361, %v6521
        %v6523 = vpop.f32.mrb[0].mxu0
        %6524 = vmatprep.mubr.bf16.mxu0 %v5876
        %6525 = vmatmul.mubr.bf16.gmra.mrb[0].mxu0 %v5826
        %v6526 = vpop.f32.mrb[0].mxu0
        %v6527 = vadd.f32 %v6366, %v6526
        %v6528 = vpop.f32.mrb[0].mxu0
        %v6529 = vpop.f32.mrb[0].mxu0
        %v6530 = vadd.f32 %v6369, %v6529
        %v6531 = vpop.f32.mrb[0].mxu0
        %6532 = vmatprep.mubr.bf16.mxu0 %v5879
        %6533 = vmatmul.mubr.bf16.gmra.mrb[0].mxu0 %v5830
        %v6534 = vpop.f32.mrb[0].mxu0
        %v6535 = vadd.f32 %v6374, %v6534
        %v6536 = vpop.f32.mrb[0].mxu0
        %v6537 = vpop.f32.mrb[0].mxu0
        %v6538 = vadd.f32 %v6377, %v6537
        %v6539 = vpop.f32.mrb[0].mxu0
        %6540 = vmatprep.mubr.bf16.mxu0 %v5882
        %6541 = vmatmul.mubr.bf16.gmra.mrb[0].mxu0 %v5834
        %v6542 = vpop.f32.mrb[0].mxu0
        %v6543 = vadd.f32 %v6382, %v6542
        %v6544 = vpop.f32.mrb[0].mxu0
        %v6545 = vpop.f32.mrb[0].mxu0
        %v6546 = vadd.f32 %v6385, %v6545
        %v6547 = vpop.f32.mrb[0].mxu0
        %6548 = vdwg.mxu0
        %6549 = vmatprep.subr.bf16.mxu0 0
        %6550 = vmatpush1.bf16.msra.mxu0 %v6139
        %6551 = vmatprep.subr.bf16.mxu0 0
        %6552 = vmatpush1.bf16.msra.mxu0 %v6140
        %6553 = vmatprep.subr.bf16.mxu0 0
        %6554 = vmatpush1.bf16.msra.mxu0 %v6141
        %6555 = vmatprep.subr.bf16.mxu0 0
        %6556 = vmatpush1.bf16.msra.mxu0 %v6142
        %6557 = vmatprep.subr.bf16.mxu0 0
        %6558 = vmatpush1.bf16.msra.mxu0 0
        %6559 = vmatprep.subr.bf16.mxu0 0
        %6560 = vmatpush1.bf16.msra.mxu0 0
        %6561 = vmatprep.subr.bf16.mxu0 0
        %6562 = vmatpush1.bf16.msra.mxu0 0
        %6563 = vmatprep.subr.bf16.mxu0 0
        %6564 = vmatpush1.bf16.msra.mxu0 0
        %6565 = vmatprep.subr.bf16.mxu0 0
        %6566 = vmatpush1.bf16.msra.mxu0 0
        %6567 = vmatprep.subr.bf16.mxu0 0
        %6568 = vmatpush1.bf16.msra.mxu0 0
        %6569 = vmatprep.subr.bf16.mxu0 0
        %6570 = vmatpush1.bf16.msra.mxu0 0
        %6571 = vmatprep.subr.bf16.mxu0 0
        %6572 = vmatpush1.bf16.msra.mxu0 0
        %6573 = vmatprep.subr.bf16.mxu0 0
        %6574 = vmatpush1.bf16.msra.mxu0 0
        %6575 = vmatprep.subr.bf16.mxu0 0
        %6576 = vmatpush1.bf16.msra.mxu0 0
        %6577 = vmatprep.subr.bf16.mxu0 0
        %6578 = vmatpush1.bf16.msra.mxu0 0
        %6579 = vmatprep.subr.bf16.mxu0 0
        %6580 = vmatpush1.bf16.msra.mxu0 0
        %6581 = vmatprep.mubr.bf16.mxu0 0
        %6582 = vmatmul.mubr.bf16.gmra.mrb[0].mxu0 %v6180
        %v6583 = vpop.f32.mrb[0].mxu0
        %v6584 = vadd.f32 %v6423, %v6583
        %v6585 = vpop.f32.mrb[0].mxu0
        %v6586 = vpop.f32.mrb[0].mxu0
        %v6587 = vadd.f32 %v6426, %v6586
        %v6588 = vpop.f32.mrb[0].mxu0
        %6589 = vmatprep.mubr.bf16.mxu0 0
        %6590 = vmatmul.mubr.bf16.gmra.mrb[0].mxu0 %v6183
        %v6591 = vpop.f32.mrb[0].mxu0
        %v6592 = vadd.f32 %v6431, %v6591
        %v6593 = vpop.f32.mrb[0].mxu0
        %v6594 = vpop.f32.mrb[0].mxu0
        %v6595 = vadd.f32 %v6434, %v6594
        %v6596 = vpop.f32.mrb[0].mxu0
        %6597 = vmatprep.mubr.bf16.mxu0 0
        %6598 = vmatmul.mubr.bf16.gmra.mrb[0].mxu0 %v6186
        %v6599 = vpop.f32.mrb[0].mxu0
        %v6600 = vadd.f32 %v6439, %v6599
        %v6601 = vpop.f32.mrb[0].mxu0
        %v6602 = vpop.f32.mrb[0].mxu0
        %v6603 = vadd.f32 %v6442, %v6602
        %v6604 = vpop.f32.mrb[0].mxu0
        %6605 = vmatprep.mubr.bf16.mxu0 0
        %6606 = vmatmul.mubr.bf16.gmra.mrb[0].mxu0 %v6189
        %v6607 = vpop.f32.mrb[0].mxu0
        %v6608 = vadd.f32 %v6447, %v6607
        %v6609 = vpop.f32.mrb[0].mxu0
        %v6610 = vpop.f32.mrb[0].mxu0
        %v6611 = vadd.f32 %v6450, %v6610
        %v6612 = vpop.f32.mrb[0].mxu0
        %6613 = vmatprep.mubr.bf16.mxu0 0
        %6614 = vmatmul.mubr.bf16.gmra.mrb[0].mxu0 %v6192
        %v6615 = vpop.f32.mrb[0].mxu0
        %v6616 = vadd.f32 %v6455, %v6615
        %v6617 = vpop.f32.mrb[0].mxu0
        %v6618 = vpop.f32.mrb[0].mxu0
        %v6619 = vadd.f32 %v6458, %v6618
        %v6620 = vpop.f32.mrb[0].mxu0
        %6621 = vmatprep.mubr.bf16.mxu0 0
        %6622 = vmatmul.mubr.bf16.gmra.mrb[0].mxu0 %v6195
        %v6623 = vpop.f32.mrb[0].mxu0
        %v6624 = vadd.f32 %v6463, %v6623
        %v6625 = vpop.f32.mrb[0].mxu0
        %v6626 = vpop.f32.mrb[0].mxu0
        %v6627 = vadd.f32 %v6466, %v6626
        %v6628 = vpop.f32.mrb[0].mxu0
        %6629 = vmatprep.mubr.bf16.mxu0 0
        %6630 = vmatmul.mubr.bf16.gmra.mrb[0].mxu0 %v6198
        %v6631 = vpop.f32.mrb[0].mxu0
        %v6632 = vadd.f32 %v6471, %v6631
        %v6633 = vpop.f32.mrb[0].mxu0
        %v6634 = vpop.f32.mrb[0].mxu0
        %v6635 = vadd.f32 %v6474, %v6634
        %v6636 = vpop.f32.mrb[0].mxu0
        %6637 = vmatprep.mubr.bf16.mxu0 0
        %6638 = vmatmul.mubr.bf16.gmra.mrb[0].mxu0 %v6201
        %v6639 = vpop.f32.mrb[0].mxu0
        %v6640 = vadd.f32 %v6479, %v6639
        %v6641 = vpop.f32.mrb[0].mxu0
        %v6642 = vpop.f32.mrb[0].mxu0
        %v6643 = vadd.f32 %v6482, %v6642
        %v6644 = vpop.f32.mrb[0].mxu0
        %6645 = vmatprep.mubr.bf16.mxu0 0
        %6646 = vmatmul.mubr.bf16.gmra.mrb[0].mxu0 %v6204
        %v6647 = vpop.f32.mrb[0].mxu0
        %v6648 = vadd.f32 %v6487, %v6647
        %v6649 = vpop.f32.mrb[0].mxu0
        %v6650 = vpop.f32.mrb[0].mxu0
        %v6651 = vadd.f32 %v6490, %v6650
        %v6652 = vpop.f32.mrb[0].mxu0
        %6653 = vmatprep.mubr.bf16.mxu0 0
        %6654 = vmatmul.mubr.bf16.gmra.mrb[0].mxu0 %v6207
        %v6655 = vpop.f32.mrb[0].mxu0
        %v6656 = vadd.f32 %v6495, %v6655
        %v6657 = vpop.f32.mrb[0].mxu0
        %v6658 = vpop.f32.mrb[0].mxu0
        %v6659 = vadd.f32 %v6498, %v6658
        %v6660 = vpop.f32.mrb[0].mxu0
        %6661 = vmatprep.mubr.bf16.mxu0 0
        %6662 = vmatmul.mubr.bf16.gmra.mrb[0].mxu0 %v6210
        %v6663 = vpop.f32.mrb[0].mxu0
        %v6664 = vadd.f32 %v6503, %v6663
        %v6665 = vpop.f32.mrb[0].mxu0
        %v6666 = vpop.f32.mrb[0].mxu0
        %v6667 = vadd.f32 %v6506, %v6666
        %v6668 = vpop.f32.mrb[0].mxu0
        %6669 = vmatprep.mubr.bf16.mxu0 0
        %6670 = vmatmul.mubr.bf16.gmra.mrb[0].mxu0 %v6213
        %v6671 = vpop.f32.mrb[0].mxu0
        %v6672 = vadd.f32 %v6511, %v6671
        %v6673 = vpop.f32.mrb[0].mxu0
        %v6674 = vpop.f32.mrb[0].mxu0
        %v6675 = vadd.f32 %v6514, %v6674
        %v6676 = vpop.f32.mrb[0].mxu0
        %6677 = vmatprep.mubr.bf16.mxu0 0
        %6678 = vmatmul.mubr.bf16.gmra.mrb[0].mxu0 %v6216
        %v6679 = vpop.f32.mrb[0].mxu0
        %v6680 = vadd.f32 %v6519, %v6679
        %v6681 = vpop.f32.mrb[0].mxu0
        %v6682 = vpop.f32.mrb[0].mxu0
        %v6683 = vadd.f32 %v6522, %v6682
        %v6684 = vpop.f32.mrb[0].mxu0
        %6685 = vmatprep.mubr.bf16.mxu0 0
        %6686 = vmatmul.mubr.bf16.gmra.mrb[0].mxu0 %v6219
        %v6687 = vpop.f32.mrb[0].mxu0
        %v6688 = vadd.f32 %v6527, %v6687
        %v6689 = vpop.f32.mrb[0].mxu0
        %v6690 = vpop.f32.mrb[0].mxu0
        %v6691 = vadd.f32 %v6530, %v6690
        %v6692 = vpop.f32.mrb[0].mxu0
        %6693 = vmatprep.mubr.bf16.mxu0 0
        %6694 = vmatmul.mubr.bf16.gmra.mrb[0].mxu0 %v6222
        %v6695 = vpop.f32.mrb[0].mxu0
        %v6696 = vadd.f32 %v6535, %v6695
        %v6697 = vpop.f32.mrb[0].mxu0
        %v6698 = vpop.f32.mrb[0].mxu0
        %v6699 = vadd.f32 %v6538, %v6698
        %v6700 = vpop.f32.mrb[0].mxu0
        %6701 = vmatprep.mubr.bf16.mxu0 0
        %6702 = vmatmul.mubr.bf16.gmra.mrb[0].mxu0 %v6225
        %v6703 = vpop.f32.mrb[0].mxu0
        %v6704 = vadd.f32 %v6543, %v6703
        %v6705 = vpop.f32.mrb[0].mxu0
        %v6706 = vpop.f32.mrb[0].mxu0
        %v6707 = vadd.f32 %v6546, %v6706
        %v6708 = vpop.f32.mrb[0].mxu0
        %6709 = vdwg.mxu0
        %v6710 = vld [vmem:[%s222] sm:$0xff]
        %v6711 = vld [vmem:[%s222 + $0x8] sm:$0xff]
        %v6712 = vld [vmem:[%s222 + $0x10] sm:$0xff]
        %v6713 = vld [vmem:[%s222 + $0x18] sm:$0xff]
        %v6714 = vld [vmem:[%s222 + $0x20] sm:$0xff]
        %v6715 = vld [vmem:[%s222 + $0x28] sm:$0xff]
        %v6716 = vld [vmem:[%s222 + $0x30] sm:$0xff]
        %v6717 = vld [vmem:[%s222 + $0x38] sm:$0xff]
        %v6718 = vld [vmem:[%s222 + $0x40] sm:$0xff]
        %v6719 = vld [vmem:[%s222 + $0x48] sm:$0xff]
        %v6720 = vld [vmem:[%s222 + $0x50] sm:$0xff]
        %v6721 = vld [vmem:[%s222 + $0x58] sm:$0xff]
        %v6722 = vld [vmem:[%s222 + $0x60] sm:$0xff]
        %v6723 = vld [vmem:[%s222 + $0x68] sm:$0xff]
        %v6724 = vld [vmem:[%s222 + $0x70] sm:$0xff]
        %v6725 = vld [vmem:[%s222 + $0x78] sm:$0xff]
        %v6726 = vld [vmem:[%s222 + $0x80] sm:$0xff]
        %v6727 = vld [vmem:[%s222 + $0x88] sm:$0xff]
        %v6728 = vld [vmem:[%s222 + $0x90] sm:$0xff]
        %v6729 = vld [vmem:[%s222 + $0x98] sm:$0xff]
        %v6730 = vld [vmem:[%s222 + $0xa0] sm:$0xff]
        %v6731 = vld [vmem:[%s222 + $0xa8] sm:$0xff]
        %v6732 = vld [vmem:[%s222 + $0xb0] sm:$0xff]
        %v6733 = vld [vmem:[%s222 + $0xb8] sm:$0xff]
        %v6734 = vld [vmem:[%s222 + $0xc0] sm:$0xff]
        %v6735 = vld [vmem:[%s222 + $0xc8] sm:$0xff]
        %v6736 = vld [vmem:[%s222 + $0xd0] sm:$0xff]
        %v6737 = vld [vmem:[%s222 + $0xd8] sm:$0xff]
        %v6738 = vld [vmem:[%s222 + $0xe0] sm:$0xff]
        %v6739 = vld [vmem:[%s222 + $0xe8] sm:$0xff]
        %v6740 = vld [vmem:[%s222 + $0xf0] sm:$0xff]
        %v6741 = vld [vmem:[%s222 + $0xf8] sm:$0xff]
        %v6742 = vadd.f32 %v6710, %v6584
        %v6743 = vadd.f32 %v6711, %v6587
        %v6744 = vadd.f32 %v6712, %v6592
        %v6745 = vadd.f32 %v6713, %v6595
        %v6746 = vadd.f32 %v6714, %v6600
        %v6747 = vadd.f32 %v6715, %v6603
        %v6748 = vadd.f32 %v6716, %v6608
        %v6749 = vadd.f32 %v6717, %v6611
        %v6750 = vadd.f32 %v6718, %v6616
        %v6751 = vadd.f32 %v6719, %v6619
        %v6752 = vadd.f32 %v6720, %v6624
        %v6753 = vadd.f32 %v6721, %v6627
        %v6754 = vadd.f32 %v6722, %v6632
        %v6755 = vadd.f32 %v6723, %v6635
        %v6756 = vadd.f32 %v6724, %v6640
        %v6757 = vadd.f32 %v6725, %v6643
        %v6758 = vadd.f32 %v6726, %v6648
        %v6759 = vadd.f32 %v6727, %v6651
        %v6760 = vadd.f32 %v6728, %v6656
        %v6761 = vadd.f32 %v6729, %v6659
        %v6762 = vadd.f32 %v6730, %v6664
        %v6763 = vadd.f32 %v6731, %v6667
        %v6764 = vadd.f32 %v6732, %v6672
        %v6765 = vadd.f32 %v6733, %v6675
        %v6766 = vadd.f32 %v6734, %v6680
        %v6767 = vadd.f32 %v6735, %v6683
        %v6768 = vadd.f32 %v6736, %v6688
        %v6769 = vadd.f32 %v6737, %v6691
        %v6770 = vadd.f32 %v6738, %v6696
        %v6771 = vadd.f32 %v6739, %v6699
        %v6772 = vadd.f32 %v6740, %v6704
        %v6773 = vadd.f32 %v6741, %v6707
        %6774 = vst.msk [vmem:[%s217] sm:$0xff] %vm2482, %v6742
        %6775 = vst.msk [vmem:[%s217 + $0x8] sm:$0xff] %vm2482, %v6743
        %6776 = vst.msk [vmem:[%s217 + $0x10] sm:$0xff] %vm2482, %v6744
        %6777 = vst.msk [vmem:[%s217 + $0x18] sm:$0xff] %vm2482, %v6745
        %6778 = vst.msk [vmem:[%s217 + $0x20] sm:$0xff] %vm2482, %v6746
        %6779 = vst.msk [vmem:[%s217 + $0x28] sm:$0xff] %vm2482, %v6747
        %6780 = vst.msk [vmem:[%s217 + $0x30] sm:$0xff] %vm2482, %v6748
        %6781 = vst.msk [vmem:[%s217 + $0x38] sm:$0xff] %vm2482, %v6749
        %6782 = vst.msk [vmem:[%s217 + $0x40] sm:$0xff] %vm2482, %v6750
        %6783 = vst.msk [vmem:[%s217 + $0x48] sm:$0xff] %vm2482, %v6751
        %6784 = vst.msk [vmem:[%s217 + $0x50] sm:$0xff] %vm2482, %v6752
        %6785 = vst.msk [vmem:[%s217 + $0x58] sm:$0xff] %vm2482, %v6753
        %6786 = vst.msk [vmem:[%s217 + $0x60] sm:$0xff] %vm2482, %v6754
        %6787 = vst.msk [vmem:[%s217 + $0x68] sm:$0xff] %vm2482, %v6755
        %6788 = vst.msk [vmem:[%s217 + $0x70] sm:$0xff] %vm2482, %v6756
        %6789 = vst.msk [vmem:[%s217 + $0x78] sm:$0xff] %vm2482, %v6757
        %6790 = vst.msk [vmem:[%s217 + $0x80] sm:$0xff] %vm2482, %v6758
        %6791 = vst.msk [vmem:[%s217 + $0x88] sm:$0xff] %vm2482, %v6759
        %6792 = vst.msk [vmem:[%s217 + $0x90] sm:$0xff] %vm2482, %v6760
        %6793 = vst.msk [vmem:[%s217 + $0x98] sm:$0xff] %vm2482, %v6761
        %6794 = vst.msk [vmem:[%s217 + $0xa0] sm:$0xff] %vm2482, %v6762
        %6795 = vst.msk [vmem:[%s217 + $0xa8] sm:$0xff] %vm2482, %v6763
        %6796 = vst.msk [vmem:[%s217 + $0xb0] sm:$0xff] %vm2482, %v6764
        %6797 = vst.msk [vmem:[%s217 + $0xb8] sm:$0xff] %vm2482, %v6765
        %6798 = vst.msk [vmem:[%s217 + $0xc0] sm:$0xff] %vm2482, %v6766
        %6799 = vst.msk [vmem:[%s217 + $0xc8] sm:$0xff] %vm2482, %v6767
        %6800 = vst.msk [vmem:[%s217 + $0xd0] sm:$0xff] %vm2482, %v6768
        %6801 = vst.msk [vmem:[%s217 + $0xd8] sm:$0xff] %vm2482, %v6769
        %6802 = vst.msk [vmem:[%s217 + $0xe0] sm:$0xff] %vm2482, %v6770
        %6803 = vst.msk [vmem:[%s217 + $0xe8] sm:$0xff] %vm2482, %v6771
        %6804 = vst.msk [vmem:[%s217 + $0xf0] sm:$0xff] %vm2482, %v6772
        %6805 = vst.msk [vmem:[%s217 + $0xf8] sm:$0xff] %vm2482, %v6773
        %s6806 = sand.u32 %s137, 1
        %s6807 = scalar_lea.sflag [#allocation4], %s6806
        %s6808 = sand.u32 %s137, 1
        %s6809 = smul.addr %s6808, 256
        %s6810 = scalar_lea.vmem [#allocation3], %s6809
        // Predicated region
        $region41: #{tpu_custom_call.1} parent=39 // pred_check
          %p6811 = pneg %p147
        $region42: #{tpu_custom_call.1} parent=39 // pred_check_branch
          %6813 = sbr.rel (%p6811) target = $region44
        $region43: #{tpu_custom_call.1} parent=39 // pred_region
          %s6815 = ssub.s32 4096, 4096
          %6816 = vsyncadd %s6807, %s6815
          %s6817 = smul.addr %s19, 32
          %s6818 = smul.addr %s6817, 128
          %s6819 = scalar_lea.hbm %s5, %s6818
          %s6820 = sshll.u32 %s6810, 4
          %s6821 = int_to_ptr.vmem [resolvable:$true] %s6820
          %6826 = dma.vmem_to_hbm [thread:$0]  %s6821, 4096, %s6819, %s6807, 128, 128, 8
        $region44: #{tpu_custom_call.1} parent=39 // pred_fallthru
          _
      $region40: #{tpu_custom_call.1} parent=5 // pred_fallthru
        _
      %p6827 = scmp.le.s32.totalorder 2, %s14
      // Predicated region
      $region45: #{tpu_custom_call.1} parent=5 // pred_check
        %p6828 = pneg %p6827
      $region46: #{tpu_custom_call.1} parent=5 // pred_check_branch
        %6830 = sbr.rel (%p6828) target = $region48
      $region47: #{tpu_custom_call.1} parent=5 // pred_region
        %s6831 = ssub.s32 %s14, 2
        // Predicated region
        $region49: #{tpu_custom_call.1} parent=47 // pred_check
          %p6832 = pneg %p153
        $region50: #{tpu_custom_call.1} parent=47 // pred_check_branch
          %6834 = sbr.rel (%p6832) target = $region52
        $region51: #{tpu_custom_call.1} parent=47 // pred_region
          %s6835 = sand.u32 %s138, 1
          %s6836 = scalar_lea.sflag [#allocation4], %s6835
          %s6837 = sand.u32 %s138, 1
          %s6838 = smul.addr %s6837, 256
          %s6839 = scalar_lea.vmem [#allocation3], %s6838
          %6840 = dma.done %s6836, 4096
        $region52: #{tpu_custom_call.1} parent=47 // pred_fallthru
          _
      $region48: #{tpu_custom_call.1} parent=5 // pred_fallthru
        _
    $region6: #{tpu_custom_call.1} parent=1 // loop_footer
      %s18 = sadd.s32 1, %s14
    $region7: #{tpu_custom_call.1} parent=1 // loop_footer_branch
      %13 = sbr.rel target = $region3
    $region8: #{tpu_custom_call.1} parent=1 // loop_exit
      _
    %6841 = vsyncpa [#allocation4], 1
    %s6842 = scalar_lea.sflag [#allocation4], 1
    %6843 = vsyncpa %s6842, 1

</llo_original>
